<compile_context>
chip_gen: v6e
topology: v6e:2x2x1
jax: 0.10.0
libtpu: 0.0.40
codegen_flags: <defaults>
</compile_context>

<pallas_src>
import functools

import jax
import jax.numpy as jnp
from jax import lax
from jax.experimental import pallas as pl
from jax.experimental.pallas import tpu as pltpu


def _dense_paired_kernel(x_ref, w12x_ref, w2y_ref, b1_ref, b2_ref,
                         y1_ref, y2_ref,
                         xp_scr, y1p_scr, lhs1_scr, lhs2_scr, *,
                         N, D, H, W, C0, C1, C2):
    # x_ref    : [N, D, H, W*C0]          (W,C)-merged NDHWC input, f32
    # w12x_ref : [9*(W+2)*C0, W*(C1+C2)]  merged banded conv1 + conv2-x weight
    # w2y_ref  : [9*(W+2)*C1, W*C2]       banded conv2 weight, y1 channels
    # b1_ref   : [1, W*C1] f32,  b2_ref : [1, W*C2] f32  (lane-tiled biases)
    # y1_ref   : [N, D, H, W*C1] out,  y2_ref : [N, D, H, W*C2] out (lane dense)
    # xp_scr   : [N, D+2, H+2, (W+2)*C0] f32     zero-padded x
    # y1p_scr  : [N, D+2, H+2, (W+2)*C1] f32     zero-padded y1
    # lhs1_scr : [N*D*H, 9*(W+2)*C0] compute dtype   im2col LHS (x path)
    # lhs2_scr : [N*D*H, 9*(W+2)*C1] compute dtype   im2col LHS (y1 path)
    M = N * D * H
    K0 = (W + 2) * C0
    K1 = (W + 2) * C1
    f32 = jnp.float32
    cdt = lhs1_scr.dtype          # bf16 on the fast path, f32 on strict path

    # ---- zero-padded, (W,C)-merged x built in VMEM (once per call) ----------
    xp_scr[...] = jnp.zeros_like(xp_scr)
    zx = jnp.zeros((N, D, H, C0), f32)
    xp_scr[:, pl.ds(1, D), pl.ds(1, H), :] = jnp.concatenate(
        [zx, x_ref[...], zx], axis=-1)                 # W halo via lane pad

    # ---- im2col of the x path: [M, 9*K0], tap order = kd-major, kh-minor ----
    for kd in range(3):
        for kh in range(3):
            t = kd * 3 + kh
            tap = xp_scr[:, pl.ds(kd, D), pl.ds(kh, H), :].reshape(M, K0)
            lhs1_scr[:, pl.ds(t * K0, K0)] = tap.astype(cdt)

    # ---- layer 1 and layer-2 x-contribution: ONE [M,9*K0]x[9*K0,256] matmul -
    acc12 = jnp.dot(lhs1_scr[...], w12x_ref[...], preferred_element_type=f32)
    y1 = jnp.maximum(acc12[:, :W * C1] + b1_ref[...], 0.0)       # [M, W*C1]
    y1_ref[...] = y1.reshape(N, D, H, W * C1).astype(y1_ref.dtype)

    # ---- zero-padded y1 + im2col of the y path ------------------------------
    y1p_scr[...] = jnp.zeros_like(y1p_scr)
    zy = jnp.zeros((N, D, H, C1), f32)
    y1p_scr[:, pl.ds(1, D), pl.ds(1, H), :] = jnp.concatenate(
        [zy, y1.reshape(N, D, H, W * C1), zy], axis=-1)
    for kd in range(3):
        for kh in range(3):
            t = kd * 3 + kh
            tap = y1p_scr[:, pl.ds(kd, D), pl.ds(kh, H), :].reshape(M, K1)
            lhs2_scr[:, pl.ds(t * K1, K1)] = tap.astype(cdt)

    # ---- layer 2: x contribution (from acc12) + ONE y-path matmul -----------
    acc2 = acc12[:, W * C1:] + jnp.dot(lhs2_scr[...], w2y_ref[...],
                                       preferred_element_type=f32)
    y2 = jnp.maximum(acc2 + b2_ref[...], 0.0)
    y2_ref[...] = y2.reshape(N, D, H, W * C2).astype(y2_ref.dtype)


def _band_weight(w_oidhw, W):
    """Fold the kw taps + channel contraction of a 3x3x3 / stride 1 / pad 1
    conv into a dense [(W+2)*Cin, W*Cout] matrix per (kd, kh) tap."""
    Cout, Cin, KD, KH, KW = w_oidhw.shape
    Wp = W + KW - 1
    kw = jnp.arange(KW)[:, None, None]
    wp = jnp.arange(Wp)[None, :, None]
    wo = jnp.arange(W)[None, None, :]
    ind = (wp == wo + kw).astype(w_oidhw.dtype)            # [KW, Wp, W]
    wk = jnp.transpose(w_oidhw, (2, 3, 4, 1, 0))           # [KD,KH,KW,Cin,Cout]
    band = jnp.einsum("xpw,dhxic->dhpiwc", ind, wk)        # [KD,KH,Wp,Cin,W,Co]
    return band.reshape(KD, KH, Wp * Cin, W * Cout)


def dense_convolve_paired_pallas(x_ncdhw, w1, b1, w2, b2,
                                 compute_dtype=jnp.float32):
    N, C0, D, H, W = x_ncdhw.shape
    C1 = w1.shape[0]
    C2 = w2.shape[0]
    assert w1.shape[1] == C0 and w2.shape[1] == C0 + C1
    Wp = W + 2
    M = N * D * H
    out_dtype = x_ncdhw.dtype

    x_ndhwc = jnp.transpose(x_ncdhw, (0, 2, 3, 4, 1))       # NCDHW -> NDHWC
    x_m = x_ndhwc.reshape(N, D, H, W * C0)                  # merge (W, C) lanes

    # Merged RHS for conv1 + conv2(x-part): [9*Wp*C0, W*(C1+C2)] (360 x 256).
    w1b = _band_weight(w1, W)                                # [3,3,Wp*C0,W*C1]
    w2xb = _band_weight(w2[:, :C0], W)                       # [3,3,Wp*C0,W*C2]
    w12x = jnp.concatenate([w1b, w2xb], axis=-1)
    w12x = w12x.reshape(9 * Wp * C0, W * (C1 + C2)).astype(compute_dtype)
    # RHS for conv2(y1-part): [9*Wp*C1, W*C2] (1440 x 128).
    w2yb = _band_weight(w2[:, C0:], W)
    w2yb = w2yb.reshape(9 * Wp * C1, W * C2).astype(compute_dtype)
    b1l = jnp.tile(b1, W).reshape(1, W * C1).astype(jnp.float32)
    b2l = jnp.tile(b2, W).reshape(1, W * C2).astype(jnp.float32)

    kernel = functools.partial(_dense_paired_kernel,
                               N=N, D=D, H=H, W=W, C0=C0, C1=C1, C2=C2)

    y1, y2 = pl.pallas_call(
        kernel,
        grid=(1,),
        out_shape=(jax.ShapeDtypeStruct((N, D, H, W * C1), out_dtype),
                   jax.ShapeDtypeStruct((N, D, H, W * C2), out_dtype)),
        in_specs=[
            pl.BlockSpec((N, D, H, W * C0), lambda i: (0, 0, 0, 0)),
            pl.BlockSpec((9 * Wp * C0, W * (C1 + C2)), lambda i: (0, 0)),
            pl.BlockSpec((9 * Wp * C1, W * C2), lambda i: (0, 0)),
            pl.BlockSpec((1, W * C1), lambda i: (0, 0)),
            pl.BlockSpec((1, W * C2), lambda i: (0, 0)),
        ],
        out_specs=(
            pl.BlockSpec((N, D, H, W * C1), lambda i: (0, 0, 0, 0)),
            pl.BlockSpec((N, D, H, W * C2), lambda i: (0, 0, 0, 0)),
        ),
        scratch_shapes=[
            pltpu.VMEM((N, D + 2, H + 2, Wp * C0), jnp.float32),
            pltpu.VMEM((N, D + 2, H + 2, Wp * C1), jnp.float32),
            pltpu.VMEM((M, 9 * Wp * C0), compute_dtype),
            pltpu.VMEM((M, 9 * Wp * C1), compute_dtype),
        ],
        compiler_params=pltpu.CompilerParams(
            dimension_semantics=("arbitrary",)),
    )(x_m, w12x, w2yb, b1l, b2l)

    y1 = y1.reshape(N, D, H, W, C1)
    y2 = y2.reshape(N, D, H, W, C2)
    out = jnp.concatenate([x_ndhwc, y1, y2], axis=-1)        # [x | y1 | y2]
    return jnp.transpose(out, (0, 4, 1, 2, 3))               # NDHWC -> NCDHW


_paired_f32 = jax.jit(functools.partial(dense_convolve_paired_pallas,
                                        compute_dtype=jnp.float32))
_paired_bf16 = jax.jit(functools.partial(dense_convolve_paired_pallas,
                                         compute_dtype=jnp.bfloat16))


# ---------------- deterministic parameter init (mirrors nn.Conv3d shapes) ----
def kaiming_uniform(key, shape_oidhw):
    fan_in = shape_oidhw[1] * shape_oidhw[2] * shape_oidhw[3] * shape_oidhw[4]
    bound = jnp.sqrt(2.0) * jnp.sqrt(3.0 / fan_in)
    return jax.random.uniform(key, shape_oidhw, jnp.float32, -bound, bound)


def bias_uniform(key, cout, fan_in):
    bound = 1.0 / jnp.sqrt(fan_in)
    return jax.random.uniform(key, (cout,), jnp.float32, -bound, bound)


# ---------------- pure-JAX reference (lax conv) for verification -------------
def ref_dense_convolve(x_ncdhw, w_oidhw, b):
    y = lax.conv_general_dilated(
        x_ncdhw, w_oidhw, window_strides=(1, 1, 1),
        padding=[(1, 1), (1, 1), (1, 1)],
        dimension_numbers=("NCDHW", "OIDHW", "NCDHW"))
    y = jax.nn.relu(y + b.reshape(1, -1, 1, 1, 1))
    return jnp.concatenate([x_ncdhw, y], axis=1)


def ref_paired(x, w1, b1, w2, b2):
    x = ref_dense_convolve(x, w1, b1)
    x = ref_dense_convolve(x, w2, b2)
    return x


if __name__ == "__main__":
    key = jax.random.PRNGKey(0)
    k_x, k_w1, k_b1, k_w2, k_b2 = jax.random.split(key, 5)

    in_channels = 4
    channel_increment = 16
    N, D, H, W = 2, 8, 8, 8

    x = jax.random.normal(k_x, (N, in_channels, D, H, W), jnp.float32)

    # DenseConvolve1: Conv3d(4 -> (4+16)-4 = 16)
    c1_out = (in_channels + channel_increment) - in_channels
    w1 = kaiming_uniform(k_w1, (c1_out, in_channels, 3, 3, 3))
    b1 = bias_uniform(k_b1, c1_out, in_channels * 27)

    # DenseConvolve2: Conv3d(20 -> (4+32)-20 = 16)
    c2_in = in_channels + channel_increment
    c2_out = (in_channels + 2 * channel_increment) - c2_in
    w2 = kaiming_uniform(k_w2, (c2_out, c2_in, 3, 3, 3))
    b2 = bias_uniform(k_b2, c2_out, c2_in * 27)

    ref = ref_paired(x, w1, b1, w2, b2)

    # f32 path: strict check against the lax.conv reference.
    out = jax.block_until_ready(_paired_f32(x, w1, b1, w2, b2))
    assert out.shape == (N, in_channels + 2 * channel_increment, D, H, W), out.shape
    if not jnp.allclose(out, ref, rtol=2e-3, atol=2e-3):
        err = jnp.max(jnp.abs(out - ref))
        raise AssertionError(f"f32 Pallas result mismatch (max abs err {err})")

    # bf16 MXU path (v6e/v7x fast path): bf16 operands, f32 accumulation.
    out_bf16 = jax.block_until_ready(_paired_bf16(x, w1, b1, w2, b2))
    if not jnp.allclose(out_bf16, ref, rtol=5e-2, atol=5e-2):
        err = jnp.max(jnp.abs(out_bf16 - ref))
        raise AssertionError(f"bf16 Pallas result mismatch (max abs err {err})")

    print("KERNEL_OK")
</pallas_src>

<mosaic_0001>
module attributes {stable_mosaic.version = 11 : i64} {
  func.func @_dense_paired_kernel(%arg0: i32, %arg1: memref<2x8x8x32xf32, #tpu.memory_space<vmem>>, %arg2: memref<360x256xf32, #tpu.memory_space<vmem>>, %arg3: memref<1440x128xf32, #tpu.memory_space<vmem>>, %arg4: memref<1x128xf32, #tpu.memory_space<vmem>>, %arg5: memref<1x128xf32, #tpu.memory_space<vmem>>, %arg6: memref<2x8x8x128xf32, #tpu.memory_space<vmem>>, %arg7: memref<2x8x8x128xf32, #tpu.memory_space<vmem>>, %arg8: memref<2x10x10x40xf32, #tpu.memory_space<vmem>>, %arg9: memref<2x10x10x160xf32, #tpu.memory_space<vmem>>, %arg10: memref<128x360xf32, #tpu.memory_space<vmem>>, %arg11: memref<128x1440xf32, #tpu.memory_space<vmem>>) attributes {dimension_semantics = [#tpu.dimension_semantics<arbitrary>], iteration_bounds = array<i64: 1>, scalar_prefetch = 0 : i64, scratch_operands = 4 : i64, tpu.core_type = #tpu.core_type<tc>, window_params = [{pipeline_mode = #tpu.pipeline_mode<synchronous>, transform_indices = @transform_0, window_bounds = array<i64: 2, 8, 8, 32>}, {pipeline_mode = #tpu.pipeline_mode<synchronous>, transform_indices = @transform_1, window_bounds = array<i64: 360, 256>}, {pipeline_mode = #tpu.pipeline_mode<synchronous>, transform_indices = @transform_2, window_bounds = array<i64: 1440, 128>}, {pipeline_mode = #tpu.pipeline_mode<synchronous>, transform_indices = @transform_3, window_bounds = array<i64: 1, 128>}, {pipeline_mode = #tpu.pipeline_mode<synchronous>, transform_indices = @transform_4, window_bounds = array<i64: 1, 128>}, {pipeline_mode = #tpu.pipeline_mode<synchronous>, transform_indices = @transform_5, window_bounds = array<i64: 2, 8, 8, 128>}, {pipeline_mode = #tpu.pipeline_mode<synchronous>, transform_indices = @transform_6, window_bounds = array<i64: 2, 8, 8, 128>}]} {
    %cst = arith.constant 0.000000e+00 : f32
    %0 = vector.broadcast %cst : f32 to vector<2x10x10x40xf32>
    %c0 = arith.constant 0 : index
    %c0_0 = arith.constant 0 : index
    %c0_1 = arith.constant 0 : index
    %c0_2 = arith.constant 0 : index
    %1 = vector.load %arg8[%c0, %c0_0, %c0_1, %c0_2] : memref<2x10x10x40xf32, #tpu.memory_space<vmem>>, vector<2x10x10x40xf32>
    tpu.vector_store %arg8[%c0, %c0_0, %c0_1, %c0_2], %0 {strides = array<i32>} : memref<2x10x10x40xf32, #tpu.memory_space<vmem>>, vector<2x10x10x40xf32>,
    %cst_3 = arith.constant 0.000000e+00 : f32
    %2 = vector.broadcast %cst_3 : f32 to vector<2x8x8x4xf32>
    %c0_4 = arith.constant 0 : index
    %c0_5 = arith.constant 0 : index
    %c0_6 = arith.constant 0 : index
    %c0_7 = arith.constant 0 : index
    %3 = vector.load %arg1[%c0_4, %c0_5, %c0_6, %c0_7] : memref<2x8x8x32xf32, #tpu.memory_space<vmem>>, vector<2x8x8x32xf32>
    %4 = tpu.concatenate %2, %3, %2 in 3 : vector<2x8x8x4xf32>, vector<2x8x8x32xf32>, vector<2x8x8x4xf32> -> vector<2x8x8x40xf32>
    %c0_8 = arith.constant 0 : index
    %c1 = arith.constant 1 : index
    %c1_9 = arith.constant 1 : index
    %c0_10 = arith.constant 0 : index
    %5 = vector.load %arg8[%c0_8, %c1, %c1_9, %c0_10] : memref<2x10x10x40xf32, #tpu.memory_space<vmem>>, vector<2x8x8x40xf32>
    tpu.vector_store %arg8[%c0_8, %c1, %c1_9, %c0_10], %4 {strides = array<i32>} : memref<2x10x10x40xf32, #tpu.memory_space<vmem>>, vector<2x8x8x40xf32>,
    %c0_11 = arith.constant 0 : index
    %c0_12 = arith.constant 0 : index
    %c0_13 = arith.constant 0 : index
    %c0_14 = arith.constant 0 : index
    %6 = vector.load %arg8[%c0_11, %c0_12, %c0_13, %c0_14] : memref<2x10x10x40xf32, #tpu.memory_space<vmem>>, vector<2x8x8x40xf32>
    %7 = vector.shape_cast %6 : vector<2x8x8x40xf32> to vector<128x40xf32>
    %c0_15 = arith.constant 0 : index
    %c0_16 = arith.constant 0 : index
    %8 = vector.load %arg10[%c0_15, %c0_16] : memref<128x360xf32, #tpu.memory_space<vmem>>, vector<128x40xf32>
    tpu.vector_store %arg10[%c0_15, %c0_16], %7 {strides = array<i32>} : memref<128x360xf32, #tpu.memory_space<vmem>>, vector<128x40xf32>,
    %c0_17 = arith.constant 0 : index
    %c0_18 = arith.constant 0 : index
    %c1_19 = arith.constant 1 : index
    %c0_20 = arith.constant 0 : index
    %9 = vector.load %arg8[%c0_17, %c0_18, %c1_19, %c0_20] : memref<2x10x10x40xf32, #tpu.memory_space<vmem>>, vector<2x8x8x40xf32>
    %10 = vector.shape_cast %9 : vector<2x8x8x40xf32> to vector<128x40xf32>
    %c0_21 = arith.constant 0 : index
    %c40 = arith.constant 40 : index
    %11 = vector.load %arg10[%c0_21, %c40] : memref<128x360xf32, #tpu.memory_space<vmem>>, vector<128x40xf32>
    tpu.vector_store %arg10[%c0_21, %c40], %10 {strides = array<i32>} : memref<128x360xf32, #tpu.memory_space<vmem>>, vector<128x40xf32>,
    %c0_22 = arith.constant 0 : index
    %c0_23 = arith.constant 0 : index
    %c2 = arith.constant 2 : index
    %c0_24 = arith.constant 0 : index
    %12 = vector.load %arg8[%c0_22, %c0_23, %c2, %c0_24] : memref<2x10x10x40xf32, #tpu.memory_space<vmem>>, vector<2x8x8x40xf32>
    %13 = vector.shape_cast %12 : vector<2x8x8x40xf32> to vector<128x40xf32>
    %c0_25 = arith.constant 0 : index
    %c80 = arith.constant 80 : index
    %14 = vector.load %arg10[%c0_25, %c80] : memref<128x360xf32, #tpu.memory_space<vmem>>, vector<128x40xf32>
    tpu.vector_store %arg10[%c0_25, %c80], %13 {strides = array<i32>} : memref<128x360xf32, #tpu.memory_space<vmem>>, vector<128x40xf32>,
    %c0_26 = arith.constant 0 : index
    %c1_27 = arith.constant 1 : index
    %c0_28 = arith.constant 0 : index
    %c0_29 = arith.constant 0 : index
    %15 = vector.load %arg8[%c0_26, %c1_27, %c0_28, %c0_29] : memref<2x10x10x40xf32, #tpu.memory_space<vmem>>, vector<2x8x8x40xf32>
    %16 = vector.shape_cast %15 : vector<2x8x8x40xf32> to vector<128x40xf32>
    %c0_30 = arith.constant 0 : index
    %c120 = arith.constant 120 : index
    %17 = vector.load %arg10[%c0_30, %c120] : memref<128x360xf32, #tpu.memory_space<vmem>>, vector<128x40xf32>
    tpu.vector_store %arg10[%c0_30, %c120], %16 {strides = array<i32>} : memref<128x360xf32, #tpu.memory_space<vmem>>, vector<128x40xf32>,
    %c0_31 = arith.constant 0 : index
    %c1_32 = arith.constant 1 : index
    %c1_33 = arith.constant 1 : index
    %c0_34 = arith.constant 0 : index
    %18 = vector.load %arg8[%c0_31, %c1_32, %c1_33, %c0_34] : memref<2x10x10x40xf32, #tpu.memory_space<vmem>>, vector<2x8x8x40xf32>
    %19 = vector.shape_cast %18 : vector<2x8x8x40xf32> to vector<128x40xf32>
    %c0_35 = arith.constant 0 : index
    %c160 = arith.constant 160 : index
    %20 = vector.load %arg10[%c0_35, %c160] : memref<128x360xf32, #tpu.memory_space<vmem>>, vector<128x40xf32>
    tpu.vector_store %arg10[%c0_35, %c160], %19 {strides = array<i32>} : memref<128x360xf32, #tpu.memory_space<vmem>>, vector<128x40xf32>,
    %c0_36 = arith.constant 0 : index
    %c1_37 = arith.constant 1 : index
    %c2_38 = arith.constant 2 : index
    %c0_39 = arith.constant 0 : index
    %21 = vector.load %arg8[%c0_36, %c1_37, %c2_38, %c0_39] : memref<2x10x10x40xf32, #tpu.memory_space<vmem>>, vector<2x8x8x40xf32>
    %22 = vector.shape_cast %21 : vector<2x8x8x40xf32> to vector<128x40xf32>
    %c0_40 = arith.constant 0 : index
    %c200 = arith.constant 200 : index
    %23 = vector.load %arg10[%c0_40, %c200] : memref<128x360xf32, #tpu.memory_space<vmem>>, vector<128x40xf32>
    tpu.vector_store %arg10[%c0_40, %c200], %22 {strides = array<i32>} : memref<128x360xf32, #tpu.memory_space<vmem>>, vector<128x40xf32>,
    %c0_41 = arith.constant 0 : index
    %c2_42 = arith.constant 2 : index
    %c0_43 = arith.constant 0 : index
    %c0_44 = arith.constant 0 : index
    %24 = vector.load %arg8[%c0_41, %c2_42, %c0_43, %c0_44] : memref<2x10x10x40xf32, #tpu.memory_space<vmem>>, vector<2x8x8x40xf32>
    %25 = vector.shape_cast %24 : vector<2x8x8x40xf32> to vector<128x40xf32>
    %c0_45 = arith.constant 0 : index
    %c240 = arith.constant 240 : index
    %26 = vector.load %arg10[%c0_45, %c240] : memref<128x360xf32, #tpu.memory_space<vmem>>, vector<128x40xf32>
    tpu.vector_store %arg10[%c0_45, %c240], %25 {strides = array<i32>} : memref<128x360xf32, #tpu.memory_space<vmem>>, vector<128x40xf32>,
    %c0_46 = arith.constant 0 : index
    %c2_47 = arith.constant 2 : index
    %c1_48 = arith.constant 1 : index
    %c0_49 = arith.constant 0 : index
    %27 = vector.load %arg8[%c0_46, %c2_47, %c1_48, %c0_49] : memref<2x10x10x40xf32, #tpu.memory_space<vmem>>, vector<2x8x8x40xf32>
    %28 = vector.shape_cast %27 : vector<2x8x8x40xf32> to vector<128x40xf32>
    %c0_50 = arith.constant 0 : index
    %c280 = arith.constant 280 : index
    %29 = vector.load %arg10[%c0_50, %c280] : memref<128x360xf32, #tpu.memory_space<vmem>>, vector<128x40xf32>
    tpu.vector_store %arg10[%c0_50, %c280], %28 {strides = array<i32>} : memref<128x360xf32, #tpu.memory_space<vmem>>, vector<128x40xf32>,
    %c0_51 = arith.constant 0 : index
    %c2_52 = arith.constant 2 : index
    %c2_53 = arith.constant 2 : index
    %c0_54 = arith.constant 0 : index
    %30 = vector.load %arg8[%c0_51, %c2_52, %c2_53, %c0_54] : memref<2x10x10x40xf32, #tpu.memory_space<vmem>>, vector<2x8x8x40xf32>
    %31 = vector.shape_cast %30 : vector<2x8x8x40xf32> to vector<128x40xf32>
    %c0_55 = arith.constant 0 : index
    %c320 = arith.constant 320 : index
    %32 = vector.load %arg10[%c0_55, %c320] : memref<128x360xf32, #tpu.memory_space<vmem>>, vector<128x40xf32>
    tpu.vector_store %arg10[%c0_55, %c320], %31 {strides = array<i32>} : memref<128x360xf32, #tpu.memory_space<vmem>>, vector<128x40xf32>,
    %c0_56 = arith.constant 0 : index
    %c0_57 = arith.constant 0 : index
    %33 = vector.load %arg10[%c0_56, %c0_57] : memref<128x360xf32, #tpu.memory_space<vmem>>, vector<128x360xf32>
    %c0_58 = arith.constant 0 : index
    %c0_59 = arith.constant 0 : index
    %34 = vector.load %arg2[%c0_58, %c0_59] : memref<360x256xf32, #tpu.memory_space<vmem>>, vector<360x256xf32>
    %cst_60 = arith.constant dense<0.000000e+00> : vector<128x256xf32>
    %35 = tpu.matmul %33, %34, %cst_60 {dimension_numbers = #tpu.dot_dimension_numbers<[1], [0], [0], [1], [0, 0, 1, 1], [], []>} : vector<128x360xf32>, vector<360x256xf32>, vector<128x256xf32> -> vector<128x256xf32>
    %36 = vector.extract_strided_slice %35 {offsets = [0, 0], sizes = [128, 128], strides = [1, 1]} : vector<128x256xf32> to vector<128x128xf32>
    %c0_61 = arith.constant 0 : index
    %c0_62 = arith.constant 0 : index
    %37 = vector.load %arg4[%c0_61, %c0_62] : memref<1x128xf32, #tpu.memory_space<vmem>>, vector<1x128xf32>
    %38 = vector.broadcast %37 : vector<1x128xf32> to vector<128x128xf32>
    %39 = arith.addf %36, %38 : vector<128x128xf32>
    %cst_63 = arith.constant 0.000000e+00 : f32
    %40 = vector.broadcast %cst_63 : f32 to vector<128x128xf32>
    %41 = arith.maximumf %39, %40 : vector<128x128xf32>
    %42 = vector.shape_cast %41 : vector<128x128xf32> to vector<2x8x8x128xf32>
    %c0_64 = arith.constant 0 : index
    %c0_65 = arith.constant 0 : index
    %c0_66 = arith.constant 0 : index
    %c0_67 = arith.constant 0 : index
    %43 = vector.load %arg6[%c0_64, %c0_65, %c0_66, %c0_67] : memref<2x8x8x128xf32, #tpu.memory_space<vmem>>, vector<2x8x8x128xf32>
    tpu.vector_store %arg6[%c0_64, %c0_65, %c0_66, %c0_67], %42 {strides = array<i32>} : memref<2x8x8x128xf32, #tpu.memory_space<vmem>>, vector<2x8x8x128xf32>,
    %cst_68 = arith.constant 0.000000e+00 : f32
    %44 = vector.broadcast %cst_68 : f32 to vector<2x10x10x160xf32>
    %c0_69 = arith.constant 0 : index
    %c0_70 = arith.constant 0 : index
    %c0_71 = arith.constant 0 : index
    %c0_72 = arith.constant 0 : index
    %45 = vector.load %arg9[%c0_69, %c0_70, %c0_71, %c0_72] : memref<2x10x10x160xf32, #tpu.memory_space<vmem>>, vector<2x10x10x160xf32>
    tpu.vector_store %arg9[%c0_69, %c0_70, %c0_71, %c0_72], %44 {strides = array<i32>} : memref<2x10x10x160xf32, #tpu.memory_space<vmem>>, vector<2x10x10x160xf32>,
    %cst_73 = arith.constant 0.000000e+00 : f32
    %46 = vector.broadcast %cst_73 : f32 to vector<2x8x8x16xf32>
    %47 = vector.shape_cast %41 : vector<128x128xf32> to vector<2x8x8x128xf32>
    %48 = tpu.concatenate %46, %47, %46 in 3 : vector<2x8x8x16xf32>, vector<2x8x8x128xf32>, vector<2x8x8x16xf32> -> vector<2x8x8x160xf32>
    %c0_74 = arith.constant 0 : index
    %c1_75 = arith.constant 1 : index
    %c1_76 = arith.constant 1 : index
    %c0_77 = arith.constant 0 : index
    %49 = vector.load %arg9[%c0_74, %c1_75, %c1_76, %c0_77] : memref<2x10x10x160xf32, #tpu.memory_space<vmem>>, vector<2x8x8x160xf32>
    tpu.vector_store %arg9[%c0_74, %c1_75, %c1_76, %c0_77], %48 {strides = array<i32>} : memref<2x10x10x160xf32, #tpu.memory_space<vmem>>, vector<2x8x8x160xf32>,
    %c0_78 = arith.constant 0 : index
    %c0_79 = arith.constant 0 : index
    %c0_80 = arith.constant 0 : index
    %c0_81 = arith.constant 0 : index
    %50 = vector.load %arg9[%c0_78, %c0_79, %c0_80, %c0_81] : memref<2x10x10x160xf32, #tpu.memory_space<vmem>>, vector<2x8x8x160xf32>
    %51 = vector.shape_cast %50 : vector<2x8x8x160xf32> to vector<128x160xf32>
    %c0_82 = arith.constant 0 : index
    %c0_83 = arith.constant 0 : index
    %52 = vector.load %arg11[%c0_82, %c0_83] : memref<128x1440xf32, #tpu.memory_space<vmem>>, vector<128x160xf32>
    tpu.vector_store %arg11[%c0_82, %c0_83], %51 {strides = array<i32>} : memref<128x1440xf32, #tpu.memory_space<vmem>>, vector<128x160xf32>,
    %c0_84 = arith.constant 0 : index
    %c0_85 = arith.constant 0 : index
    %c1_86 = arith.constant 1 : index
    %c0_87 = arith.constant 0 : index
    %53 = vector.load %arg9[%c0_84, %c0_85, %c1_86, %c0_87] : memref<2x10x10x160xf32, #tpu.memory_space<vmem>>, vector<2x8x8x160xf32>
    %54 = vector.shape_cast %53 : vector<2x8x8x160xf32> to vector<128x160xf32>
    %c0_88 = arith.constant 0 : index
    %c160_89 = arith.constant 160 : index
    %55 = vector.load %arg11[%c0_88, %c160_89] : memref<128x1440xf32, #tpu.memory_space<vmem>>, vector<128x160xf32>
    tpu.vector_store %arg11[%c0_88, %c160_89], %54 {strides = array<i32>} : memref<128x1440xf32, #tpu.memory_space<vmem>>, vector<128x160xf32>,
    %c0_90 = arith.constant 0 : index
    %c0_91 = arith.constant 0 : index
    %c2_92 = arith.constant 2 : index
    %c0_93 = arith.constant 0 : index
    %56 = vector.load %arg9[%c0_90, %c0_91, %c2_92, %c0_93] : memref<2x10x10x160xf32, #tpu.memory_space<vmem>>, vector<2x8x8x160xf32>
    %57 = vector.shape_cast %56 : vector<2x8x8x160xf32> to vector<128x160xf32>
    %c0_94 = arith.constant 0 : index
    %c320_95 = arith.constant 320 : index
    %58 = vector.load %arg11[%c0_94, %c320_95] : memref<128x1440xf32, #tpu.memory_space<vmem>>, vector<128x160xf32>
    tpu.vector_store %arg11[%c0_94, %c320_95], %57 {strides = array<i32>} : memref<128x1440xf32, #tpu.memory_space<vmem>>, vector<128x160xf32>,
    %c0_96 = arith.constant 0 : index
    %c1_97 = arith.constant 1 : index
    %c0_98 = arith.constant 0 : index
    %c0_99 = arith.constant 0 : index
    %59 = vector.load %arg9[%c0_96, %c1_97, %c0_98, %c0_99] : memref<2x10x10x160xf32, #tpu.memory_space<vmem>>, vector<2x8x8x160xf32>
    %60 = vector.shape_cast %59 : vector<2x8x8x160xf32> to vector<128x160xf32>
    %c0_100 = arith.constant 0 : index
    %c480 = arith.constant 480 : index
    %61 = vector.load %arg11[%c0_100, %c480] : memref<128x1440xf32, #tpu.memory_space<vmem>>, vector<128x160xf32>
    tpu.vector_store %arg11[%c0_100, %c480], %60 {strides = array<i32>} : memref<128x1440xf32, #tpu.memory_space<vmem>>, vector<128x160xf32>,
    %c0_101 = arith.constant 0 : index
    %c1_102 = arith.constant 1 : index
    %c1_103 = arith.constant 1 : index
    %c0_104 = arith.constant 0 : index
    %62 = vector.load %arg9[%c0_101, %c1_102, %c1_103, %c0_104] : memref<2x10x10x160xf32, #tpu.memory_space<vmem>>, vector<2x8x8x160xf32>
    %63 = vector.shape_cast %62 : vector<2x8x8x160xf32> to vector<128x160xf32>
    %c0_105 = arith.constant 0 : index
    %c640 = arith.constant 640 : index
    %64 = vector.load %arg11[%c0_105, %c640] : memref<128x1440xf32, #tpu.memory_space<vmem>>, vector<128x160xf32>
    tpu.vector_store %arg11[%c0_105, %c640], %63 {strides = array<i32>} : memref<128x1440xf32, #tpu.memory_space<vmem>>, vector<128x160xf32>,
    %c0_106 = arith.constant 0 : index
    %c1_107 = arith.constant 1 : index
    %c2_108 = arith.constant 2 : index
    %c0_109 = arith.constant 0 : index
    %65 = vector.load %arg9[%c0_106, %c1_107, %c2_108, %c0_109] : memref<2x10x10x160xf32, #tpu.memory_space<vmem>>, vector<2x8x8x160xf32>
    %66 = vector.shape_cast %65 : vector<2x8x8x160xf32> to vector<128x160xf32>
    %c0_110 = arith.constant 0 : index
    %c800 = arith.constant 800 : index
    %67 = vector.load %arg11[%c0_110, %c800] : memref<128x1440xf32, #tpu.memory_space<vmem>>, vector<128x160xf32>
    tpu.vector_store %arg11[%c0_110, %c800], %66 {strides = array<i32>} : memref<128x1440xf32, #tpu.memory_space<vmem>>, vector<128x160xf32>,
    %c0_111 = arith.constant 0 : index
    %c2_112 = arith.constant 2 : index
    %c0_113 = arith.constant 0 : index
    %c0_114 = arith.constant 0 : index
    %68 = vector.load %arg9[%c0_111, %c2_112, %c0_113, %c0_114] : memref<2x10x10x160xf32, #tpu.memory_space<vmem>>, vector<2x8x8x160xf32>
    %69 = vector.shape_cast %68 : vector<2x8x8x160xf32> to vector<128x160xf32>
    %c0_115 = arith.constant 0 : index
    %c960 = arith.constant 960 : index
    %70 = vector.load %arg11[%c0_115, %c960] : memref<128x1440xf32, #tpu.memory_space<vmem>>, vector<128x160xf32>
    tpu.vector_store %arg11[%c0_115, %c960], %69 {strides = array<i32>} : memref<128x1440xf32, #tpu.memory_space<vmem>>, vector<128x160xf32>,
    %c0_116 = arith.constant 0 : index
    %c2_117 = arith.constant 2 : index
    %c1_118 = arith.constant 1 : index
    %c0_119 = arith.constant 0 : index
    %71 = vector.load %arg9[%c0_116, %c2_117, %c1_118, %c0_119] : memref<2x10x10x160xf32, #tpu.memory_space<vmem>>, vector<2x8x8x160xf32>
    %72 = vector.shape_cast %71 : vector<2x8x8x160xf32> to vector<128x160xf32>
    %c0_120 = arith.constant 0 : index
    %c1120 = arith.constant 1120 : index
    %73 = vector.load %arg11[%c0_120, %c1120] : memref<128x1440xf32, #tpu.memory_space<vmem>>, vector<128x160xf32>
    tpu.vector_store %arg11[%c0_120, %c1120], %72 {strides = array<i32>} : memref<128x1440xf32, #tpu.memory_space<vmem>>, vector<128x160xf32>,
    %c0_121 = arith.constant 0 : index
    %c2_122 = arith.constant 2 : index
    %c2_123 = arith.constant 2 : index
    %c0_124 = arith.constant 0 : index
    %74 = vector.load %arg9[%c0_121, %c2_122, %c2_123, %c0_124] : memref<2x10x10x160xf32, #tpu.memory_space<vmem>>, vector<2x8x8x160xf32>
    %75 = vector.shape_cast %74 : vector<2x8x8x160xf32> to vector<128x160xf32>
    %c0_125 = arith.constant 0 : index
    %c1280 = arith.constant 1280 : index
    %76 = vector.load %arg11[%c0_125, %c1280] : memref<128x1440xf32, #tpu.memory_space<vmem>>, vector<128x160xf32>
    tpu.vector_store %arg11[%c0_125, %c1280], %75 {strides = array<i32>} : memref<128x1440xf32, #tpu.memory_space<vmem>>, vector<128x160xf32>,
    %77 = vector.extract_strided_slice %35 {offsets = [0, 128], sizes = [128, 128], strides = [1, 1]} : vector<128x256xf32> to vector<128x128xf32>
    %c0_126 = arith.constant 0 : index
    %c0_127 = arith.constant 0 : index
    %78 = vector.load %arg11[%c0_126, %c0_127] : memref<128x1440xf32, #tpu.memory_space<vmem>>, vector<128x1440xf32>
    %c0_128 = arith.constant 0 : index
    %c0_129 = arith.constant 0 : index
    %79 = vector.load %arg3[%c0_128, %c0_129] : memref<1440x128xf32, #tpu.memory_space<vmem>>, vector<1440x128xf32>
    %cst_130 = arith.constant dense<0.000000e+00> : vector<128x128xf32>
    %80 = tpu.matmul %78, %79, %cst_130 {dimension_numbers = #tpu.dot_dimension_numbers<[1], [0], [0], [1], [0, 0, 1, 1], [], []>} : vector<128x1440xf32>, vector<1440x128xf32>, vector<128x128xf32> -> vector<128x128xf32>
    %81 = arith.addf %77, %80 : vector<128x128xf32>
    %c0_131 = arith.constant 0 : index
    %c0_132 = arith.constant 0 : index
    %82 = vector.load %arg5[%c0_131, %c0_132] : memref<1x128xf32, #tpu.memory_space<vmem>>, vector<1x128xf32>
    %83 = vector.broadcast %82 : vector<1x128xf32> to vector<128x128xf32>
    %84 = arith.addf %81, %83 : vector<128x128xf32>
    %cst_133 = arith.constant 0.000000e+00 : f32
    %85 = vector.broadcast %cst_133 : f32 to vector<128x128xf32>
    %86 = arith.maximumf %84, %85 : vector<128x128xf32>
    %87 = vector.shape_cast %86 : vector<128x128xf32> to vector<2x8x8x128xf32>
    %c0_134 = arith.constant 0 : index
    %c0_135 = arith.constant 0 : index
    %c0_136 = arith.constant 0 : index
    %c0_137 = arith.constant 0 : index
    %88 = vector.load %arg7[%c0_134, %c0_135, %c0_136, %c0_137] : memref<2x8x8x128xf32, #tpu.memory_space<vmem>>, vector<2x8x8x128xf32>
    tpu.vector_store %arg7[%c0_134, %c0_135, %c0_136, %c0_137], %87 {strides = array<i32>} : memref<2x8x8x128xf32, #tpu.memory_space<vmem>>, vector<2x8x8x128xf32>,
    return
  }
  func.func @transform_0(%arg0: i32) -> (i32, i32, i32, i32) {
    %c0_i32 = arith.constant 0 : i32
    %c0_i32_0 = arith.constant 0 : i32
    %c0_i32_1 = arith.constant 0 : i32
    %c0_i32_2 = arith.constant 0 : i32
    %c0_i32_3 = arith.constant 0 : i32
    return %c0_i32, %c0_i32_0, %c0_i32_1, %c0_i32_2 : i32, i32, i32, i32
  }
  func.func @transform_1(%arg0: i32) -> (i32, i32) {
    %c0_i32 = arith.constant 0 : i32
    %c0_i32_0 = arith.constant 0 : i32
    %c0_i32_1 = arith.constant 0 : i32
    return %c0_i32, %c0_i32_0 : i32, i32
  }
  func.func @transform_2(%arg0: i32) -> (i32, i32) {
    %c0_i32 = arith.constant 0 : i32
    %c0_i32_0 = arith.constant 0 : i32
    %c0_i32_1 = arith.constant 0 : i32
    return %c0_i32, %c0_i32_0 : i32, i32
  }
  func.func @transform_3(%arg0: i32) -> (i32, i32) {
    %c0_i32 = arith.constant 0 : i32
    %c0_i32_0 = arith.constant 0 : i32
    %c0_i32_1 = arith.constant 0 : i32
    return %c0_i32, %c0_i32_0 : i32, i32
  }
  func.func @transform_4(%arg0: i32) -> (i32, i32) {
    %c0_i32 = arith.constant 0 : i32
    %c0_i32_0 = arith.constant 0 : i32
    %c0_i32_1 = arith.constant 0 : i32
    return %c0_i32, %c0_i32_0 : i32, i32
  }
  func.func @transform_5(%arg0: i32) -> (i32, i32, i32, i32) {
    %c0_i32 = arith.constant 0 : i32
    %c0_i32_0 = arith.constant 0 : i32
    %c0_i32_1 = arith.constant 0 : i32
    %c0_i32_2 = arith.constant 0 : i32
    %c0_i32_3 = arith.constant 0 : i32
    return %c0_i32, %c0_i32_0, %c0_i32_1, %c0_i32_2 : i32, i32, i32, i32
  }
  func.func @transform_6(%arg0: i32) -> (i32, i32, i32, i32) {
    %c0_i32 = arith.constant 0 : i32
    %c0_i32_0 = arith.constant 0 : i32
    %c0_i32_1 = arith.constant 0 : i32
    %c0_i32_2 = arith.constant 0 : i32
    %c0_i32_3 = arith.constant 0 : i32
    return %c0_i32, %c0_i32_0, %c0_i32_1, %c0_i32_2 : i32, i32, i32, i32
  }
}

</mosaic_0001>

<llo_original>
// kernel: tile.13
$region0: #{tile.13}
  #allocation0 [shape = 's32[1]{0}', space=sflag, size = 0x4, scoped, tag = 'scoped memory for tile.13']
  %s0 = inlined_call_operand.vmem [shape: f32[16], index: 0, kind: input, shape index: {}]
  %s1 = inlined_call_operand.vmem [shape: f32[8,16], index: 1, kind: output, shape index: {}]
  // Predicated region
  $region2: #{tile.13} parent=0 // pred_check
    _
  $region3: #{tile.13} parent=0 // pred_check_branch
    %3 = sbr.rel (0) target = $region5
  $region4: #{tile.13} parent=0 // pred_region
    _
  $region5: #{tile.13} parent=0 // pred_fallthru
    _
  %v4 = vld [vmem:[%s0] ss:$0 sm:$0xff]
  %5 = vst [vmem:[%s1] sm:$0xff] %v4

// kernel: tile.14
$region0: #{tile.14}
  %s0 = inlined_call_operand.vmem [shape: f32[8,16], index: 0, kind: input, shape index: {}]
  %s1 = inlined_call_operand.vmem [shape: f32[1,128], index: 1, kind: output, shape index: {}]
  $region1: #{tile.14} parent=0
    #allocation0 [shape = 'u8[4096]{0}', space=vmem, size = 0x1000, scoped, tag = 'scoped mem for output reshape']
    %v2 = vld [vmem:[%s0] sm:$0x1]
    %vm3 = vcmask 130048
    %4 = vst.msk [vmem:[#allocation0] sm:$0x1] %vm3, %v2
    %s5 = scalar_lea.vmem %s0, 7
    %v6 = vld [vmem:[%s5] sm:$0x1]
    %7 = vrot.lane.b32.xlu0 %v6, 112
    %v8 = vpop.permute.xlu0 %7
    %vm9 = vcmask 1048448
    %10 = vst.msk [vmem:[#allocation0] sm:$0x1] %vm9, %v8
    %s11 = scalar_lea.vmem %s0, 6
    %v12 = vld [vmem:[%s11] sm:$0x1]
    %13 = vrot.lane.b32.xlu0 %v12, 96
    %v14 = vpop.permute.xlu0 %13
    %vm15 = vcmask 917248
    %16 = vst.msk [vmem:[#allocation0] sm:$0x1] %vm15, %v14
    %s17 = scalar_lea.vmem %s0, 5
    %v18 = vld [vmem:[%s17] sm:$0x1]
    %19 = vrot.lane.b32.xlu0 %v18, 80
    %v20 = vpop.permute.xlu0 %19
    %vm21 = vcmask 786048
    %22 = vst.msk [vmem:[#allocation0] sm:$0x1] %vm21, %v20
    %s23 = scalar_lea.vmem %s0, 4
    %v24 = vld [vmem:[%s23] sm:$0x1]
    %25 = vrot.lane.b32.xlu0 %v24, 64
    %v26 = vpop.permute.xlu0 %25
    %vm27 = vcmask 654848
    %28 = vst.msk [vmem:[#allocation0] sm:$0x1] %vm27, %v26
    %s29 = scalar_lea.vmem %s0, 3
    %v30 = vld [vmem:[%s29] sm:$0x1]
    %31 = vrot.lane.b32.xlu0 %v30, 48
    %v32 = vpop.permute.xlu0 %31
    %vm33 = vcmask 523648
    %34 = vst.msk [vmem:[#allocation0] sm:$0x1] %vm33, %v32
    %s35 = scalar_lea.vmem %s0, 2
    %v36 = vld [vmem:[%s35] sm:$0x1]
    %37 = vrot.lane.b32.xlu0 %v36, 32
    %v38 = vpop.permute.xlu0 %37
    %vm39 = vcmask 392448
    %40 = vst.msk [vmem:[#allocation0] sm:$0x1] %vm39, %v38
    %s41 = scalar_lea.vmem %s0, 1
    %v42 = vld [vmem:[%s41] sm:$0x1]
    %43 = vrot.lane.b32.xlu0 %v42, 16
    %v44 = vpop.permute.xlu0 %43
    %vm45 = vcmask 261248
    %46 = vst.msk [vmem:[#allocation0] sm:$0x1] %vm45, %v44
    %s48 = sshll.u32 1, 1
    %s49 = ssub.s32 %s48, 1
    %v51 = vld [vmem:[#allocation0] sm:%s49]
    %s52 = sshll.u32 1, 1
    %s53 = ssub.s32 %s52, 1
    %54 = vst [vmem:[%s1] sm:%s53] %v51

// kernel: dense_convolve_paired_pallas.1
$region0: #{dense_convolve_paired_pallas.1}
  #allocation0 [shape = 'u32[]', space=smem, size = 0x4, offset = 0x4, fixed_abs, tag = 'smem constant byte address 0x4 - core index']
  #allocation1 [shape = 'u32[144,128]{1,0:T(1,128)}', space=vmem, size = 0x12000, scoped, tag = 'internal scratch']
  #allocation2 [shape = 'f32[2,10,10,40]{3,2,1,0:T(8,128)}', space=vmem, size = 0x28000, scoped, tag = 'scratch operand']
  #allocation3 [shape = 'f32[2,10,10,160]{3,2,1,0:T(8,128)}', space=vmem, size = 0x50000, scoped, tag = 'scratch operand']
  #allocation4 [shape = 'f32[128,360]{1,0:T(8,128)}', space=vmem, size = 0x30000, scoped, tag = 'scratch operand']
  #allocation5 [shape = 'f32[128,1440]{1,0:T(8,128)}', space=vmem, size = 0xc0000, scoped, tag = 'scratch operand']
  %s0 = inlined_call_operand.vmem [shape: f32[2,8,8,32], index: 0, kind: input, shape index: {}]
  %s1 = inlined_call_operand.vmem [shape: f32[360,256], index: 1, kind: input, shape index: {}]
  %s2 = inlined_call_operand.vmem [shape: f32[1440,128], index: 2, kind: input, shape index: {}]
  %s3 = inlined_call_operand.vmem [shape: f32[1,128], index: 3, kind: input, shape index: {}]
  %s4 = inlined_call_operand.vmem [shape: f32[1,128], index: 4, kind: input, shape index: {}]
  %s5 = inlined_call_operand.vmem [shape: f32[2,8,8,128], index: 5, kind: output, shape index: {0}]
  %s6 = inlined_call_operand.vmem [shape: f32[2,8,8,128], index: 6, kind: output, shape index: {1}]
  %7 = xla_tuple %s5, %s6
  %s8 = sld [smem:[#allocation0]]
  $region38: #{dense_convolve_paired_pallas.1} parent=0
    _
  %s10 = ssub.s32 1, %s8
  %s11 = scalar_select 0, %s10, %s8
  // Predicated region
  $region2: #{dense_convolve_paired_pallas.1} parent=0 // pred_check
    _
  $region3: #{dense_convolve_paired_pallas.1} parent=0 // pred_check_branch
    %13 = sbr.rel (0) target = $region5
  $region4: #{dense_convolve_paired_pallas.1} parent=0 // pred_region
    _
  $region5: #{dense_convolve_paired_pallas.1} parent=0 // pred_fallthru
    _
  // Predicated region
  $region6: #{dense_convolve_paired_pallas.1} parent=0 // pred_check
    _
  $region7: #{dense_convolve_paired_pallas.1} parent=0 // pred_check_branch
    %15 = sbr.rel (0) target = $region9
  $region8: #{dense_convolve_paired_pallas.1} parent=0 // pred_region
    _
  $region9: #{dense_convolve_paired_pallas.1} parent=0 // pred_fallthru
    _
  // Predicated region
  $region10: #{dense_convolve_paired_pallas.1} parent=0 // pred_check
    _
  $region11: #{dense_convolve_paired_pallas.1} parent=0 // pred_check_branch
    %17 = sbr.rel (0) target = $region13
  $region12: #{dense_convolve_paired_pallas.1} parent=0 // pred_region
    _
  $region13: #{dense_convolve_paired_pallas.1} parent=0 // pred_fallthru
    _
  // Predicated region
  $region14: #{dense_convolve_paired_pallas.1} parent=0 // pred_check
    _
  $region15: #{dense_convolve_paired_pallas.1} parent=0 // pred_check_branch
    %19 = sbr.rel (0) target = $region17
  $region16: #{dense_convolve_paired_pallas.1} parent=0 // pred_region
    _
  $region17: #{dense_convolve_paired_pallas.1} parent=0 // pred_fallthru
    _
  // Predicated region
  $region18: #{dense_convolve_paired_pallas.1} parent=0 // pred_check
    _
  $region19: #{dense_convolve_paired_pallas.1} parent=0 // pred_check_branch
    %21 = sbr.rel (0) target = $region21
  $region20: #{dense_convolve_paired_pallas.1} parent=0 // pred_region
    _
  $region21: #{dense_convolve_paired_pallas.1} parent=0 // pred_fallthru
    _
  %vm22 = vcmask 326656
  %23 = vst.msk [vmem:[#allocation2] sm:$0xff] %vm22, 0.0
  %vm24 = vcmask 320512
  %25 = vst.msk [vmem:[#allocation2 + $0x8] sm:$0x3] %vm24, 0.0
  %26 = vst.msk [vmem:[#allocation2 + $0x10] sm:$0xff] %vm22, 0.0
  %27 = vst.msk [vmem:[#allocation2 + $0x18] sm:$0x3] %vm24, 0.0
  %28 = vst.msk [vmem:[#allocation2 + $0x20] sm:$0xff] %vm22, 0.0
  %29 = vst.msk [vmem:[#allocation2 + $0x28] sm:$0x3] %vm24, 0.0
  %30 = vst.msk [vmem:[#allocation2 + $0x30] sm:$0xff] %vm22, 0.0
  %31 = vst.msk [vmem:[#allocation2 + $0x38] sm:$0x3] %vm24, 0.0
  %32 = vst.msk [vmem:[#allocation2 + $0x40] sm:$0xff] %vm22, 0.0
  %33 = vst.msk [vmem:[#allocation2 + $0x48] sm:$0x3] %vm24, 0.0
  %34 = vst.msk [vmem:[#allocation2 + $0x50] sm:$0xff] %vm22, 0.0
  %35 = vst.msk [vmem:[#allocation2 + $0x58] sm:$0x3] %vm24, 0.0
  %36 = vst.msk [vmem:[#allocation2 + $0x60] sm:$0xff] %vm22, 0.0
  %37 = vst.msk [vmem:[#allocation2 + $0x68] sm:$0x3] %vm24, 0.0
  %38 = vst.msk [vmem:[#allocation2 + $0x70] sm:$0xff] %vm22, 0.0
  %39 = vst.msk [vmem:[#allocation2 + $0x78] sm:$0x3] %vm24, 0.0
  %40 = vst.msk [vmem:[#allocation2 + $0x80] sm:$0xff] %vm22, 0.0
  %41 = vst.msk [vmem:[#allocation2 + $0x88] sm:$0x3] %vm24, 0.0
  %42 = vst.msk [vmem:[#allocation2 + $0x90] sm:$0xff] %vm22, 0.0
  %43 = vst.msk [vmem:[#allocation2 + $0x98] sm:$0x3] %vm24, 0.0
  %44 = vst.msk [vmem:[#allocation2 + $0xa0] sm:$0xff] %vm22, 0.0
  %45 = vst.msk [vmem:[#allocation2 + $0xa8] sm:$0x3] %vm24, 0.0
  %46 = vst.msk [vmem:[#allocation2 + $0xb0] sm:$0xff] %vm22, 0.0
  %47 = vst.msk [vmem:[#allocation2 + $0xb8] sm:$0x3] %vm24, 0.0
  %48 = vst.msk [vmem:[#allocation2 + $0xc0] sm:$0xff] %vm22, 0.0
  %49 = vst.msk [vmem:[#allocation2 + $0xc8] sm:$0x3] %vm24, 0.0
  %50 = vst.msk [vmem:[#allocation2 + $0xd0] sm:$0xff] %vm22, 0.0
  %51 = vst.msk [vmem:[#allocation2 + $0xd8] sm:$0x3] %vm24, 0.0
  %52 = vst.msk [vmem:[#allocation2 + $0xe0] sm:$0xff] %vm22, 0.0
  %53 = vst.msk [vmem:[#allocation2 + $0xe8] sm:$0x3] %vm24, 0.0
  %54 = vst.msk [vmem:[#allocation2 + $0xf0] sm:$0xff] %vm22, 0.0
  %55 = vst.msk [vmem:[#allocation2 + $0xf8] sm:$0x3] %vm24, 0.0
  %56 = vst.msk [vmem:[#allocation2 + $0x100] sm:$0xff] %vm22, 0.0
  %57 = vst.msk [vmem:[#allocation2 + $0x108] sm:$0x3] %vm24, 0.0
  %58 = vst.msk [vmem:[#allocation2 + $0x110] sm:$0xff] %vm22, 0.0
  %59 = vst.msk [vmem:[#allocation2 + $0x118] sm:$0x3] %vm24, 0.0
  %60 = vst.msk [vmem:[#allocation2 + $0x120] sm:$0xff] %vm22, 0.0
  %61 = vst.msk [vmem:[#allocation2 + $0x128] sm:$0x3] %vm24, 0.0
  %62 = vst.msk [vmem:[#allocation2 + $0x130] sm:$0xff] %vm22, 0.0
  %63 = vst.msk [vmem:[#allocation2 + $0x138] sm:$0x3] %vm24, 0.0
  %v64 = vld [vmem:[%s0] sm:$0xff]
  %v65 = vld [vmem:[%s0 + $0x8] sm:$0xff]
  %v66 = vld [vmem:[%s0 + $0x10] sm:$0xff]
  %v67 = vld [vmem:[%s0 + $0x18] sm:$0xff]
  %v68 = vld [vmem:[%s0 + $0x20] sm:$0xff]
  %v69 = vld [vmem:[%s0 + $0x28] sm:$0xff]
  %v70 = vld [vmem:[%s0 + $0x30] sm:$0xff]
  %v71 = vld [vmem:[%s0 + $0x38] sm:$0xff]
  %v72 = vld [vmem:[%s0 + $0x40] sm:$0xff]
  %v73 = vld [vmem:[%s0 + $0x48] sm:$0xff]
  %v74 = vld [vmem:[%s0 + $0x50] sm:$0xff]
  %v75 = vld [vmem:[%s0 + $0x58] sm:$0xff]
  %v76 = vld [vmem:[%s0 + $0x60] sm:$0xff]
  %v77 = vld [vmem:[%s0 + $0x68] sm:$0xff]
  %v78 = vld [vmem:[%s0 + $0x70] sm:$0xff]
  %v79 = vld [vmem:[%s0 + $0x78] sm:$0xff]
  %96 = vrot.lane.b32.xlu0 %v64, 4
  %v97 = vpop.permute.xlu0 %96
  %98 = vrot.lane.b32.xlu0 %v65, 4
  %v99 = vpop.permute.xlu0 %98
  %100 = vrot.lane.b32.xlu0 %v66, 4
  %v101 = vpop.permute.xlu0 %100
  %102 = vrot.lane.b32.xlu0 %v67, 4
  %v103 = vpop.permute.xlu0 %102
  %104 = vrot.lane.b32.xlu0 %v68, 4
  %v105 = vpop.permute.xlu0 %104
  %106 = vrot.lane.b32.xlu0 %v69, 4
  %v107 = vpop.permute.xlu0 %106
  %108 = vrot.lane.b32.xlu0 %v70, 4
  %v109 = vpop.permute.xlu0 %108
  %110 = vrot.lane.b32.xlu0 %v71, 4
  %v111 = vpop.permute.xlu0 %110
  %112 = vrot.lane.b32.xlu0 %v72, 4
  %v113 = vpop.permute.xlu0 %112
  %114 = vrot.lane.b32.xlu0 %v73, 4
  %v115 = vpop.permute.xlu0 %114
  %116 = vrot.lane.b32.xlu0 %v74, 4
  %v117 = vpop.permute.xlu0 %116
  %118 = vrot.lane.b32.xlu0 %v75, 4
  %v119 = vpop.permute.xlu0 %118
  %120 = vrot.lane.b32.xlu0 %v76, 4
  %v121 = vpop.permute.xlu0 %120
  %122 = vrot.lane.b32.xlu0 %v77, 4
  %v123 = vpop.permute.xlu0 %122
  %124 = vrot.lane.b32.xlu0 %v78, 4
  %v125 = vpop.permute.xlu0 %124
  %126 = vrot.lane.b32.xlu0 %v79, 4
  %v127 = vpop.permute.xlu0 %126
  %vm144 = vcmask 31744
  %v145 = vsel %vm144, 0.0, %v97
  %v146 = vsel %vm144, 0.0, %v99
  %v147 = vsel %vm144, 0.0, %v101
  %v148 = vsel %vm144, 0.0, %v103
  %v149 = vsel %vm144, 0.0, %v105
  %v150 = vsel %vm144, 0.0, %v107
  %v151 = vsel %vm144, 0.0, %v109
  %v152 = vsel %vm144, 0.0, %v111
  %v153 = vsel %vm144, 0.0, %v113
  %v154 = vsel %vm144, 0.0, %v115
  %v155 = vsel %vm144, 0.0, %v117
  %v156 = vsel %vm144, 0.0, %v119
  %v157 = vsel %vm144, 0.0, %v121
  %v158 = vsel %vm144, 0.0, %v123
  %v159 = vsel %vm144, 0.0, %v125
  %v160 = vsel %vm144, 0.0, %v127
  %vm161 = vcmask 293888
  %v162 = vsel %vm161, %v145, 0.0
  %v163 = vsel %vm161, %v146, 0.0
  %v164 = vsel %vm161, %v147, 0.0
  %v165 = vsel %vm161, %v148, 0.0
  %v166 = vsel %vm161, %v149, 0.0
  %v167 = vsel %vm161, %v150, 0.0
  %v168 = vsel %vm161, %v151, 0.0
  %v169 = vsel %vm161, %v152, 0.0
  %v170 = vsel %vm161, %v153, 0.0
  %v171 = vsel %vm161, %v154, 0.0
  %v172 = vsel %vm161, %v155, 0.0
  %v173 = vsel %vm161, %v156, 0.0
  %v174 = vsel %vm161, %v157, 0.0
  %v175 = vsel %vm161, %v158, 0.0
  %v176 = vsel %vm161, %v159, 0.0
  %v177 = vsel %vm161, %v160, 0.0
  %s178 = scalar_lea.vmem [#allocation2], 16
  %179 = vst.msk [vmem:[%s178 + $0x1] sm:$0xff] %vm22, %v162
  %180 = vst.msk [vmem:[%s178 + $0x11] sm:$0xff] %vm22, %v163
  %181 = vst.msk [vmem:[%s178 + $0x21] sm:$0xff] %vm22, %v164
  %182 = vst.msk [vmem:[%s178 + $0x31] sm:$0xff] %vm22, %v165
  %183 = vst.msk [vmem:[%s178 + $0x41] sm:$0xff] %vm22, %v166
  %184 = vst.msk [vmem:[%s178 + $0x51] sm:$0xff] %vm22, %v167
  %185 = vst.msk [vmem:[%s178 + $0x61] sm:$0xff] %vm22, %v168
  %186 = vst.msk [vmem:[%s178 + $0x71] sm:$0xff] %vm22, %v169
  %187 = vst.msk [vmem:[%s178 + $0xa1] sm:$0xff] %vm22, %v170
  %188 = vst.msk [vmem:[%s178 + $0xb1] sm:$0xff] %vm22, %v171
  %189 = vst.msk [vmem:[%s178 + $0xc1] sm:$0xff] %vm22, %v172
  %190 = vst.msk [vmem:[%s178 + $0xd1] sm:$0xff] %vm22, %v173
  %191 = vst.msk [vmem:[%s178 + $0xe1] sm:$0xff] %vm22, %v174
  %192 = vst.msk [vmem:[%s178 + $0xf1] sm:$0xff] %vm22, %v175
  %193 = vst.msk [vmem:[%s178 + $0x101] sm:$0xff] %vm22, %v176
  %194 = vst.msk [vmem:[%s178 + $0x111] sm:$0xff] %vm22, %v177
  %v195 = vld [vmem:[#allocation2] sm:$0xff]
  %v196 = vld [vmem:[#allocation2 + $0x10] sm:$0xff]
  %v197 = vld [vmem:[#allocation2 + $0x20] sm:$0xff]
  %v198 = vld [vmem:[#allocation2 + $0x30] sm:$0xff]
  %v199 = vld [vmem:[#allocation2 + $0x40] sm:$0xff]
  %v200 = vld [vmem:[#allocation2 + $0x50] sm:$0xff]
  %v201 = vld [vmem:[#allocation2 + $0x60] sm:$0xff]
  %v202 = vld [vmem:[#allocation2 + $0x70] sm:$0xff]
  %v203 = vld [vmem:[#allocation2 + $0xa0] sm:$0xff]
  %v204 = vld [vmem:[#allocation2 + $0xb0] sm:$0xff]
  %v205 = vld [vmem:[#allocation2 + $0xc0] sm:$0xff]
  %v206 = vld [vmem:[#allocation2 + $0xd0] sm:$0xff]
  %v207 = vld [vmem:[#allocation2 + $0xe0] sm:$0xff]
  %v208 = vld [vmem:[#allocation2 + $0xf0] sm:$0xff]
  %v209 = vld [vmem:[#allocation2 + $0x100] sm:$0xff]
  %v210 = vld [vmem:[#allocation2 + $0x110] sm:$0xff]
  %211 = vst.msk [vmem:[#allocation4] sm:$0xff] %vm22, %v195
  %212 = vst.msk [vmem:[#allocation4 + $0x18] sm:$0xff] %vm22, %v196
  %213 = vst.msk [vmem:[#allocation4 + $0x30] sm:$0xff] %vm22, %v197
  %214 = vst.msk [vmem:[#allocation4 + $0x48] sm:$0xff] %vm22, %v198
  %215 = vst.msk [vmem:[#allocation4 + $0x60] sm:$0xff] %vm22, %v199
  %216 = vst.msk [vmem:[#allocation4 + $0x78] sm:$0xff] %vm22, %v200
  %217 = vst.msk [vmem:[#allocation4 + $0x90] sm:$0xff] %vm22, %v201
  %218 = vst.msk [vmem:[#allocation4 + $0xa8] sm:$0xff] %vm22, %v202
  %219 = vst.msk [vmem:[#allocation4 + $0xc0] sm:$0xff] %vm22, %v203
  %220 = vst.msk [vmem:[#allocation4 + $0xd8] sm:$0xff] %vm22, %v204
  %221 = vst.msk [vmem:[#allocation4 + $0xf0] sm:$0xff] %vm22, %v205
  %222 = vst.msk [vmem:[#allocation4 + $0x108] sm:$0xff] %vm22, %v206
  %223 = vst.msk [vmem:[#allocation4 + $0x120] sm:$0xff] %vm22, %v207
  %224 = vst.msk [vmem:[#allocation4 + $0x138] sm:$0xff] %vm22, %v208
  %225 = vst.msk [vmem:[#allocation4 + $0x150] sm:$0xff] %vm22, %v209
  %226 = vst.msk [vmem:[#allocation4 + $0x168] sm:$0xff] %vm22, %v210
  %v227 = vld [vmem:[#allocation2 + $0x1] sm:$0xff]
  %v228 = vld [vmem:[#allocation2 + $0x11] sm:$0xff]
  %v229 = vld [vmem:[#allocation2 + $0x21] sm:$0xff]
  %v230 = vld [vmem:[#allocation2 + $0x31] sm:$0xff]
  %v231 = vld [vmem:[#allocation2 + $0x41] sm:$0xff]
  %v232 = vld [vmem:[#allocation2 + $0x51] sm:$0xff]
  %v233 = vld [vmem:[#allocation2 + $0x61] sm:$0xff]
  %v234 = vld [vmem:[#allocation2 + $0x71] sm:$0xff]
  %v235 = vld [vmem:[#allocation2 + $0xa1] sm:$0xff]
  %v236 = vld [vmem:[#allocation2 + $0xb1] sm:$0xff]
  %v237 = vld [vmem:[#allocation2 + $0xc1] sm:$0xff]
  %v238 = vld [vmem:[#allocation2 + $0xd1] sm:$0xff]
  %v239 = vld [vmem:[#allocation2 + $0xe1] sm:$0xff]
  %v240 = vld [vmem:[#allocation2 + $0xf1] sm:$0xff]
  %v241 = vld [vmem:[#allocation2 + $0x101] sm:$0xff]
  %v242 = vld [vmem:[#allocation2 + $0x111] sm:$0xff]
  %259 = vrot.lane.b32.xlu0 %v227, 40
  %v260 = vpop.permute.xlu0 %259
  %261 = vrot.lane.b32.xlu0 %v228, 40
  %v262 = vpop.permute.xlu0 %261
  %263 = vrot.lane.b32.xlu0 %v229, 40
  %v264 = vpop.permute.xlu0 %263
  %265 = vrot.lane.b32.xlu0 %v230, 40
  %v266 = vpop.permute.xlu0 %265
  %267 = vrot.lane.b32.xlu0 %v231, 40
  %v268 = vpop.permute.xlu0 %267
  %269 = vrot.lane.b32.xlu0 %v232, 40
  %v270 = vpop.permute.xlu0 %269
  %271 = vrot.lane.b32.xlu0 %v233, 40
  %v272 = vpop.permute.xlu0 %271
  %273 = vrot.lane.b32.xlu0 %v234, 40
  %v274 = vpop.permute.xlu0 %273
  %275 = vrot.lane.b32.xlu0 %v235, 40
  %v276 = vpop.permute.xlu0 %275
  %277 = vrot.lane.b32.xlu0 %v236, 40
  %v278 = vpop.permute.xlu0 %277
  %279 = vrot.lane.b32.xlu0 %v237, 40
  %v280 = vpop.permute.xlu0 %279
  %281 = vrot.lane.b32.xlu0 %v238, 40
  %v282 = vpop.permute.xlu0 %281
  %283 = vrot.lane.b32.xlu0 %v239, 40
  %v284 = vpop.permute.xlu0 %283
  %285 = vrot.lane.b32.xlu0 %v240, 40
  %v286 = vpop.permute.xlu0 %285
  %287 = vrot.lane.b32.xlu0 %v241, 40
  %v288 = vpop.permute.xlu0 %287
  %289 = vrot.lane.b32.xlu0 %v242, 40
  %v290 = vpop.permute.xlu0 %289
  %vm307 = vcmask 654656
  %308 = vst.msk [vmem:[#allocation4] sm:$0xff] %vm307, %v260
  %309 = vst.msk [vmem:[#allocation4 + $0x18] sm:$0xff] %vm307, %v262
  %310 = vst.msk [vmem:[#allocation4 + $0x30] sm:$0xff] %vm307, %v264
  %311 = vst.msk [vmem:[#allocation4 + $0x48] sm:$0xff] %vm307, %v266
  %312 = vst.msk [vmem:[#allocation4 + $0x60] sm:$0xff] %vm307, %v268
  %313 = vst.msk [vmem:[#allocation4 + $0x78] sm:$0xff] %vm307, %v270
  %314 = vst.msk [vmem:[#allocation4 + $0x90] sm:$0xff] %vm307, %v272
  %315 = vst.msk [vmem:[#allocation4 + $0xa8] sm:$0xff] %vm307, %v274
  %316 = vst.msk [vmem:[#allocation4 + $0xc0] sm:$0xff] %vm307, %v276
  %317 = vst.msk [vmem:[#allocation4 + $0xd8] sm:$0xff] %vm307, %v278
  %318 = vst.msk [vmem:[#allocation4 + $0xf0] sm:$0xff] %vm307, %v280
  %319 = vst.msk [vmem:[#allocation4 + $0x108] sm:$0xff] %vm307, %v282
  %320 = vst.msk [vmem:[#allocation4 + $0x120] sm:$0xff] %vm307, %v284
  %321 = vst.msk [vmem:[#allocation4 + $0x138] sm:$0xff] %vm307, %v286
  %322 = vst.msk [vmem:[#allocation4 + $0x150] sm:$0xff] %vm307, %v288
  %323 = vst.msk [vmem:[#allocation4 + $0x168] sm:$0xff] %vm307, %v290
  %v324 = vld [vmem:[#allocation2 + $0x2] sm:$0xff]
  %v325 = vld [vmem:[#allocation2 + $0x12] sm:$0xff]
  %v326 = vld [vmem:[#allocation2 + $0x22] sm:$0xff]
  %v327 = vld [vmem:[#allocation2 + $0x32] sm:$0xff]
  %v328 = vld [vmem:[#allocation2 + $0x42] sm:$0xff]
  %v329 = vld [vmem:[#allocation2 + $0x52] sm:$0xff]
  %v330 = vld [vmem:[#allocation2 + $0x62] sm:$0xff]
  %v331 = vld [vmem:[#allocation2 + $0x72] sm:$0xff]
  %v332 = vld [vmem:[#allocation2 + $0xa2] sm:$0xff]
  %v333 = vld [vmem:[#allocation2 + $0xb2] sm:$0xff]
  %v334 = vld [vmem:[#allocation2 + $0xc2] sm:$0xff]
  %v335 = vld [vmem:[#allocation2 + $0xd2] sm:$0xff]
  %v336 = vld [vmem:[#allocation2 + $0xe2] sm:$0xff]
  %v337 = vld [vmem:[#allocation2 + $0xf2] sm:$0xff]
  %v338 = vld [vmem:[#allocation2 + $0x102] sm:$0xff]
  %v339 = vld [vmem:[#allocation2 + $0x112] sm:$0xff]
  %356 = vrot.lane.b32.xlu0 %v324, 80
  %v357 = vpop.permute.xlu0 %356
  %358 = vrot.lane.b32.xlu0 %v325, 80
  %v359 = vpop.permute.xlu0 %358
  %360 = vrot.lane.b32.xlu0 %v326, 80
  %v361 = vpop.permute.xlu0 %360
  %362 = vrot.lane.b32.xlu0 %v327, 80
  %v363 = vpop.permute.xlu0 %362
  %364 = vrot.lane.b32.xlu0 %v328, 80
  %v365 = vpop.permute.xlu0 %364
  %366 = vrot.lane.b32.xlu0 %v329, 80
  %v367 = vpop.permute.xlu0 %366
  %368 = vrot.lane.b32.xlu0 %v330, 80
  %v369 = vpop.permute.xlu0 %368
  %370 = vrot.lane.b32.xlu0 %v331, 80
  %v371 = vpop.permute.xlu0 %370
  %372 = vrot.lane.b32.xlu0 %v332, 80
  %v373 = vpop.permute.xlu0 %372
  %374 = vrot.lane.b32.xlu0 %v333, 80
  %v375 = vpop.permute.xlu0 %374
  %376 = vrot.lane.b32.xlu0 %v334, 80
  %v377 = vpop.permute.xlu0 %376
  %378 = vrot.lane.b32.xlu0 %v335, 80
  %v379 = vpop.permute.xlu0 %378
  %380 = vrot.lane.b32.xlu0 %v336, 80
  %v381 = vpop.permute.xlu0 %380
  %382 = vrot.lane.b32.xlu0 %v337, 80
  %v383 = vpop.permute.xlu0 %382
  %384 = vrot.lane.b32.xlu0 %v338, 80
  %v385 = vpop.permute.xlu0 %384
  %386 = vrot.lane.b32.xlu0 %v339, 80
  %v387 = vpop.permute.xlu0 %386
  %vm404 = vcmask 982656
  %405 = vst.msk [vmem:[#allocation4] sm:$0xff] %vm404, %v357
  %406 = vst.msk [vmem:[#allocation4 + $0x18] sm:$0xff] %vm404, %v359
  %407 = vst.msk [vmem:[#allocation4 + $0x30] sm:$0xff] %vm404, %v361
  %408 = vst.msk [vmem:[#allocation4 + $0x48] sm:$0xff] %vm404, %v363
  %409 = vst.msk [vmem:[#allocation4 + $0x60] sm:$0xff] %vm404, %v365
  %410 = vst.msk [vmem:[#allocation4 + $0x78] sm:$0xff] %vm404, %v367
  %411 = vst.msk [vmem:[#allocation4 + $0x90] sm:$0xff] %vm404, %v369
  %412 = vst.msk [vmem:[#allocation4 + $0xa8] sm:$0xff] %vm404, %v371
  %413 = vst.msk [vmem:[#allocation4 + $0xc0] sm:$0xff] %vm404, %v373
  %414 = vst.msk [vmem:[#allocation4 + $0xd8] sm:$0xff] %vm404, %v375
  %415 = vst.msk [vmem:[#allocation4 + $0xf0] sm:$0xff] %vm404, %v377
  %416 = vst.msk [vmem:[#allocation4 + $0x108] sm:$0xff] %vm404, %v379
  %417 = vst.msk [vmem:[#allocation4 + $0x120] sm:$0xff] %vm404, %v381
  %418 = vst.msk [vmem:[#allocation4 + $0x138] sm:$0xff] %vm404, %v383
  %419 = vst.msk [vmem:[#allocation4 + $0x150] sm:$0xff] %vm404, %v385
  %420 = vst.msk [vmem:[#allocation4 + $0x168] sm:$0xff] %vm404, %v387
  %v421 = vld [vmem:[%s178] sm:$0xff]
  %v422 = vld [vmem:[%s178 + $0x10] sm:$0xff]
  %v423 = vld [vmem:[%s178 + $0x20] sm:$0xff]
  %v424 = vld [vmem:[%s178 + $0x30] sm:$0xff]
  %v425 = vld [vmem:[%s178 + $0x40] sm:$0xff]
  %v426 = vld [vmem:[%s178 + $0x50] sm:$0xff]
  %v427 = vld [vmem:[%s178 + $0x60] sm:$0xff]
  %v428 = vld [vmem:[%s178 + $0x70] sm:$0xff]
  %v429 = vld [vmem:[%s178 + $0xa0] sm:$0xff]
  %v430 = vld [vmem:[%s178 + $0xb0] sm:$0xff]
  %v431 = vld [vmem:[%s178 + $0xc0] sm:$0xff]
  %v432 = vld [vmem:[%s178 + $0xd0] sm:$0xff]
  %v433 = vld [vmem:[%s178 + $0xe0] sm:$0xff]
  %v434 = vld [vmem:[%s178 + $0xf0] sm:$0xff]
  %v435 = vld [vmem:[%s178 + $0x100] sm:$0xff]
  %v436 = vld [vmem:[%s178 + $0x110] sm:$0xff]
  %453 = vrot.lane.b32.xlu0 %v421, 120
  %v454 = vpop.permute.xlu0 %453
  %455 = vrot.lane.b32.xlu0 %v422, 120
  %v456 = vpop.permute.xlu0 %455
  %457 = vrot.lane.b32.xlu0 %v423, 120
  %v458 = vpop.permute.xlu0 %457
  %459 = vrot.lane.b32.xlu0 %v424, 120
  %v460 = vpop.permute.xlu0 %459
  %461 = vrot.lane.b32.xlu0 %v425, 120
  %v462 = vpop.permute.xlu0 %461
  %463 = vrot.lane.b32.xlu0 %v426, 120
  %v464 = vpop.permute.xlu0 %463
  %465 = vrot.lane.b32.xlu0 %v427, 120
  %v466 = vpop.permute.xlu0 %465
  %467 = vrot.lane.b32.xlu0 %v428, 120
  %v468 = vpop.permute.xlu0 %467
  %469 = vrot.lane.b32.xlu0 %v429, 120
  %v470 = vpop.permute.xlu0 %469
  %471 = vrot.lane.b32.xlu0 %v430, 120
  %v472 = vpop.permute.xlu0 %471
  %473 = vrot.lane.b32.xlu0 %v431, 120
  %v474 = vpop.permute.xlu0 %473
  %475 = vrot.lane.b32.xlu0 %v432, 120
  %v476 = vpop.permute.xlu0 %475
  %477 = vrot.lane.b32.xlu0 %v433, 120
  %v478 = vpop.permute.xlu0 %477
  %479 = vrot.lane.b32.xlu0 %v434, 120
  %v480 = vpop.permute.xlu0 %479
  %481 = vrot.lane.b32.xlu0 %v435, 120
  %v482 = vpop.permute.xlu0 %481
  %483 = vrot.lane.b32.xlu0 %v436, 120
  %v484 = vpop.permute.xlu0 %483
  %vm501 = vcmask 1048512
  %502 = vst.msk [vmem:[#allocation4] sm:$0xff] %vm501, %v454
  %vm503 = vcmask 261120
  %504 = vst.msk [vmem:[#allocation4 + $0x8] sm:$0xff] %vm503, %v454
  %505 = vst.msk [vmem:[#allocation4 + $0x18] sm:$0xff] %vm501, %v456
  %506 = vst.msk [vmem:[#allocation4 + $0x20] sm:$0xff] %vm503, %v456
  %507 = vst.msk [vmem:[#allocation4 + $0x30] sm:$0xff] %vm501, %v458
  %508 = vst.msk [vmem:[#allocation4 + $0x38] sm:$0xff] %vm503, %v458
  %509 = vst.msk [vmem:[#allocation4 + $0x48] sm:$0xff] %vm501, %v460
  %510 = vst.msk [vmem:[#allocation4 + $0x50] sm:$0xff] %vm503, %v460
  %511 = vst.msk [vmem:[#allocation4 + $0x60] sm:$0xff] %vm501, %v462
  %512 = vst.msk [vmem:[#allocation4 + $0x68] sm:$0xff] %vm503, %v462
  %513 = vst.msk [vmem:[#allocation4 + $0x78] sm:$0xff] %vm501, %v464
  %514 = vst.msk [vmem:[#allocation4 + $0x80] sm:$0xff] %vm503, %v464
  %515 = vst.msk [vmem:[#allocation4 + $0x90] sm:$0xff] %vm501, %v466
  %516 = vst.msk [vmem:[#allocation4 + $0x98] sm:$0xff] %vm503, %v466
  %517 = vst.msk [vmem:[#allocation4 + $0xa8] sm:$0xff] %vm501, %v468
  %518 = vst.msk [vmem:[#allocation4 + $0xb0] sm:$0xff] %vm503, %v468
  %519 = vst.msk [vmem:[#allocation4 + $0xc0] sm:$0xff] %vm501, %v470
  %520 = vst.msk [vmem:[#allocation4 + $0xc8] sm:$0xff] %vm503, %v470
  %521 = vst.msk [vmem:[#allocation4 + $0xd8] sm:$0xff] %vm501, %v472
  %522 = vst.msk [vmem:[#allocation4 + $0xe0] sm:$0xff] %vm503, %v472
  %523 = vst.msk [vmem:[#allocation4 + $0xf0] sm:$0xff] %vm501, %v474
  %524 = vst.msk [vmem:[#allocation4 + $0xf8] sm:$0xff] %vm503, %v474
  %525 = vst.msk [vmem:[#allocation4 + $0x108] sm:$0xff] %vm501, %v476
  %526 = vst.msk [vmem:[#allocation4 + $0x110] sm:$0xff] %vm503, %v476
  %527 = vst.msk [vmem:[#allocation4 + $0x120] sm:$0xff] %vm501, %v478
  %528 = vst.msk [vmem:[#allocation4 + $0x128] sm:$0xff] %vm503, %v478
  %529 = vst.msk [vmem:[#allocation4 + $0x138] sm:$0xff] %vm501, %v480
  %530 = vst.msk [vmem:[#allocation4 + $0x140] sm:$0xff] %vm503, %v480
  %531 = vst.msk [vmem:[#allocation4 + $0x150] sm:$0xff] %vm501, %v482
  %532 = vst.msk [vmem:[#allocation4 + $0x158] sm:$0xff] %vm503, %v482
  %533 = vst.msk [vmem:[#allocation4 + $0x168] sm:$0xff] %vm501, %v484
  %534 = vst.msk [vmem:[#allocation4 + $0x170] sm:$0xff] %vm503, %v484
  %v535 = vld [vmem:[%s178 + $0x1] sm:$0xff]
  %v536 = vld [vmem:[%s178 + $0x11] sm:$0xff]
  %v537 = vld [vmem:[%s178 + $0x21] sm:$0xff]
  %v538 = vld [vmem:[%s178 + $0x31] sm:$0xff]
  %v539 = vld [vmem:[%s178 + $0x41] sm:$0xff]
  %v540 = vld [vmem:[%s178 + $0x51] sm:$0xff]
  %v541 = vld [vmem:[%s178 + $0x61] sm:$0xff]
  %v542 = vld [vmem:[%s178 + $0x71] sm:$0xff]
  %v543 = vld [vmem:[%s178 + $0xa1] sm:$0xff]
  %v544 = vld [vmem:[%s178 + $0xb1] sm:$0xff]
  %v545 = vld [vmem:[%s178 + $0xc1] sm:$0xff]
  %v546 = vld [vmem:[%s178 + $0xd1] sm:$0xff]
  %v547 = vld [vmem:[%s178 + $0xe1] sm:$0xff]
  %v548 = vld [vmem:[%s178 + $0xf1] sm:$0xff]
  %v549 = vld [vmem:[%s178 + $0x101] sm:$0xff]
  %v550 = vld [vmem:[%s178 + $0x111] sm:$0xff]
  %567 = vrot.lane.b32.xlu0 %v535, 32
  %v568 = vpop.permute.xlu0 %567
  %569 = vrot.lane.b32.xlu0 %v536, 32
  %v570 = vpop.permute.xlu0 %569
  %571 = vrot.lane.b32.xlu0 %v537, 32
  %v572 = vpop.permute.xlu0 %571
  %573 = vrot.lane.b32.xlu0 %v538, 32
  %v574 = vpop.permute.xlu0 %573
  %575 = vrot.lane.b32.xlu0 %v539, 32
  %v576 = vpop.permute.xlu0 %575
  %577 = vrot.lane.b32.xlu0 %v540, 32
  %v578 = vpop.permute.xlu0 %577
  %579 = vrot.lane.b32.xlu0 %v541, 32
  %v580 = vpop.permute.xlu0 %579
  %581 = vrot.lane.b32.xlu0 %v542, 32
  %v582 = vpop.permute.xlu0 %581
  %583 = vrot.lane.b32.xlu0 %v543, 32
  %v584 = vpop.permute.xlu0 %583
  %585 = vrot.lane.b32.xlu0 %v544, 32
  %v586 = vpop.permute.xlu0 %585
  %587 = vrot.lane.b32.xlu0 %v545, 32
  %v588 = vpop.permute.xlu0 %587
  %589 = vrot.lane.b32.xlu0 %v546, 32
  %v590 = vpop.permute.xlu0 %589
  %591 = vrot.lane.b32.xlu0 %v547, 32
  %v592 = vpop.permute.xlu0 %591
  %593 = vrot.lane.b32.xlu0 %v548, 32
  %v594 = vpop.permute.xlu0 %593
  %595 = vrot.lane.b32.xlu0 %v549, 32
  %v596 = vpop.permute.xlu0 %595
  %597 = vrot.lane.b32.xlu0 %v550, 32
  %v598 = vpop.permute.xlu0 %597
  %vm615 = vcmask 589056
  %616 = vst.msk [vmem:[#allocation4 + $0x8] sm:$0xff] %vm615, %v568
  %617 = vst.msk [vmem:[#allocation4 + $0x20] sm:$0xff] %vm615, %v570
  %618 = vst.msk [vmem:[#allocation4 + $0x38] sm:$0xff] %vm615, %v572
  %619 = vst.msk [vmem:[#allocation4 + $0x50] sm:$0xff] %vm615, %v574
  %620 = vst.msk [vmem:[#allocation4 + $0x68] sm:$0xff] %vm615, %v576
  %621 = vst.msk [vmem:[#allocation4 + $0x80] sm:$0xff] %vm615, %v578
  %622 = vst.msk [vmem:[#allocation4 + $0x98] sm:$0xff] %vm615, %v580
  %623 = vst.msk [vmem:[#allocation4 + $0xb0] sm:$0xff] %vm615, %v582
  %624 = vst.msk [vmem:[#allocation4 + $0xc8] sm:$0xff] %vm615, %v584
  %625 = vst.msk [vmem:[#allocation4 + $0xe0] sm:$0xff] %vm615, %v586
  %626 = vst.msk [vmem:[#allocation4 + $0xf8] sm:$0xff] %vm615, %v588
  %627 = vst.msk [vmem:[#allocation4 + $0x110] sm:$0xff] %vm615, %v590
  %628 = vst.msk [vmem:[#allocation4 + $0x128] sm:$0xff] %vm615, %v592
  %629 = vst.msk [vmem:[#allocation4 + $0x140] sm:$0xff] %vm615, %v594
  %630 = vst.msk [vmem:[#allocation4 + $0x158] sm:$0xff] %vm615, %v596
  %631 = vst.msk [vmem:[#allocation4 + $0x170] sm:$0xff] %vm615, %v598
  %v632 = vld [vmem:[%s178 + $0x2] sm:$0xff]
  %v633 = vld [vmem:[%s178 + $0x12] sm:$0xff]
  %v634 = vld [vmem:[%s178 + $0x22] sm:$0xff]
  %v635 = vld [vmem:[%s178 + $0x32] sm:$0xff]
  %v636 = vld [vmem:[%s178 + $0x42] sm:$0xff]
  %v637 = vld [vmem:[%s178 + $0x52] sm:$0xff]
  %v638 = vld [vmem:[%s178 + $0x62] sm:$0xff]
  %v639 = vld [vmem:[%s178 + $0x72] sm:$0xff]
  %v640 = vld [vmem:[%s178 + $0xa2] sm:$0xff]
  %v641 = vld [vmem:[%s178 + $0xb2] sm:$0xff]
  %v642 = vld [vmem:[%s178 + $0xc2] sm:$0xff]
  %v643 = vld [vmem:[%s178 + $0xd2] sm:$0xff]
  %v644 = vld [vmem:[%s178 + $0xe2] sm:$0xff]
  %v645 = vld [vmem:[%s178 + $0xf2] sm:$0xff]
  %v646 = vld [vmem:[%s178 + $0x102] sm:$0xff]
  %v647 = vld [vmem:[%s178 + $0x112] sm:$0xff]
  %664 = vrot.lane.b32.xlu0 %v632, 72
  %v665 = vpop.permute.xlu0 %664
  %666 = vrot.lane.b32.xlu0 %v633, 72
  %v667 = vpop.permute.xlu0 %666
  %668 = vrot.lane.b32.xlu0 %v634, 72
  %v669 = vpop.permute.xlu0 %668
  %670 = vrot.lane.b32.xlu0 %v635, 72
  %v671 = vpop.permute.xlu0 %670
  %672 = vrot.lane.b32.xlu0 %v636, 72
  %v673 = vpop.permute.xlu0 %672
  %674 = vrot.lane.b32.xlu0 %v637, 72
  %v675 = vpop.permute.xlu0 %674
  %676 = vrot.lane.b32.xlu0 %v638, 72
  %v677 = vpop.permute.xlu0 %676
  %678 = vrot.lane.b32.xlu0 %v639, 72
  %v679 = vpop.permute.xlu0 %678
  %680 = vrot.lane.b32.xlu0 %v640, 72
  %v681 = vpop.permute.xlu0 %680
  %682 = vrot.lane.b32.xlu0 %v641, 72
  %v683 = vpop.permute.xlu0 %682
  %684 = vrot.lane.b32.xlu0 %v642, 72
  %v685 = vpop.permute.xlu0 %684
  %686 = vrot.lane.b32.xlu0 %v643, 72
  %v687 = vpop.permute.xlu0 %686
  %688 = vrot.lane.b32.xlu0 %v644, 72
  %v689 = vpop.permute.xlu0 %688
  %690 = vrot.lane.b32.xlu0 %v645, 72
  %v691 = vpop.permute.xlu0 %690
  %692 = vrot.lane.b32.xlu0 %v646, 72
  %v693 = vpop.permute.xlu0 %692
  %694 = vrot.lane.b32.xlu0 %v647, 72
  %v695 = vpop.permute.xlu0 %694
  %vm712 = vcmask 917056
  %713 = vst.msk [vmem:[#allocation4 + $0x8] sm:$0xff] %vm712, %v665
  %714 = vst.msk [vmem:[#allocation4 + $0x20] sm:$0xff] %vm712, %v667
  %715 = vst.msk [vmem:[#allocation4 + $0x38] sm:$0xff] %vm712, %v669
  %716 = vst.msk [vmem:[#allocation4 + $0x50] sm:$0xff] %vm712, %v671
  %717 = vst.msk [vmem:[#allocation4 + $0x68] sm:$0xff] %vm712, %v673
  %718 = vst.msk [vmem:[#allocation4 + $0x80] sm:$0xff] %vm712, %v675
  %719 = vst.msk [vmem:[#allocation4 + $0x98] sm:$0xff] %vm712, %v677
  %720 = vst.msk [vmem:[#allocation4 + $0xb0] sm:$0xff] %vm712, %v679
  %721 = vst.msk [vmem:[#allocation4 + $0xc8] sm:$0xff] %vm712, %v681
  %722 = vst.msk [vmem:[#allocation4 + $0xe0] sm:$0xff] %vm712, %v683
  %723 = vst.msk [vmem:[#allocation4 + $0xf8] sm:$0xff] %vm712, %v685
  %724 = vst.msk [vmem:[#allocation4 + $0x110] sm:$0xff] %vm712, %v687
  %725 = vst.msk [vmem:[#allocation4 + $0x128] sm:$0xff] %vm712, %v689
  %726 = vst.msk [vmem:[#allocation4 + $0x140] sm:$0xff] %vm712, %v691
  %727 = vst.msk [vmem:[#allocation4 + $0x158] sm:$0xff] %vm712, %v693
  %728 = vst.msk [vmem:[#allocation4 + $0x170] sm:$0xff] %vm712, %v695
  %s729 = scalar_lea.vmem [#allocation2], 32
  %v730 = vld [vmem:[%s729] sm:$0xff]
  %v731 = vld [vmem:[%s729 + $0x10] sm:$0xff]
  %v732 = vld [vmem:[%s729 + $0x20] sm:$0xff]
  %v733 = vld [vmem:[%s729 + $0x30] sm:$0xff]
  %v734 = vld [vmem:[%s729 + $0x40] sm:$0xff]
  %v735 = vld [vmem:[%s729 + $0x50] sm:$0xff]
  %v736 = vld [vmem:[%s729 + $0x60] sm:$0xff]
  %v737 = vld [vmem:[%s729 + $0x70] sm:$0xff]
  %v738 = vld [vmem:[%s729 + $0xa0] sm:$0xff]
  %v739 = vld [vmem:[%s729 + $0xb0] sm:$0xff]
  %v740 = vld [vmem:[%s729 + $0xc0] sm:$0xff]
  %v741 = vld [vmem:[%s729 + $0xd0] sm:$0xff]
  %v742 = vld [vmem:[%s729 + $0xe0] sm:$0xff]
  %v743 = vld [vmem:[%s729 + $0xf0] sm:$0xff]
  %v744 = vld [vmem:[%s729 + $0x100] sm:$0xff]
  %v745 = vld [vmem:[%s729 + $0x110] sm:$0xff]
  %762 = vrot.lane.b32.xlu0 %v730, 112
  %v763 = vpop.permute.xlu0 %762
  %764 = vrot.lane.b32.xlu0 %v731, 112
  %v765 = vpop.permute.xlu0 %764
  %766 = vrot.lane.b32.xlu0 %v732, 112
  %v767 = vpop.permute.xlu0 %766
  %768 = vrot.lane.b32.xlu0 %v733, 112
  %v769 = vpop.permute.xlu0 %768
  %770 = vrot.lane.b32.xlu0 %v734, 112
  %v771 = vpop.permute.xlu0 %770
  %772 = vrot.lane.b32.xlu0 %v735, 112
  %v773 = vpop.permute.xlu0 %772
  %774 = vrot.lane.b32.xlu0 %v736, 112
  %v775 = vpop.permute.xlu0 %774
  %776 = vrot.lane.b32.xlu0 %v737, 112
  %v777 = vpop.permute.xlu0 %776
  %778 = vrot.lane.b32.xlu0 %v738, 112
  %v779 = vpop.permute.xlu0 %778
  %780 = vrot.lane.b32.xlu0 %v739, 112
  %v781 = vpop.permute.xlu0 %780
  %782 = vrot.lane.b32.xlu0 %v740, 112
  %v783 = vpop.permute.xlu0 %782
  %784 = vrot.lane.b32.xlu0 %v741, 112
  %v785 = vpop.permute.xlu0 %784
  %786 = vrot.lane.b32.xlu0 %v742, 112
  %v787 = vpop.permute.xlu0 %786
  %788 = vrot.lane.b32.xlu0 %v743, 112
  %v789 = vpop.permute.xlu0 %788
  %790 = vrot.lane.b32.xlu0 %v744, 112
  %v791 = vpop.permute.xlu0 %790
  %792 = vrot.lane.b32.xlu0 %v745, 112
  %v793 = vpop.permute.xlu0 %792
  %vm810 = vcmask 1048448
  %811 = vst.msk [vmem:[#allocation4 + $0x8] sm:$0xff] %vm810, %v763
  %vm812 = vcmask 195584
  %813 = vst.msk [vmem:[#allocation4 + $0x10] sm:$0xff] %vm812, %v763
  %814 = vst.msk [vmem:[#allocation4 + $0x20] sm:$0xff] %vm810, %v765
  %815 = vst.msk [vmem:[#allocation4 + $0x28] sm:$0xff] %vm812, %v765
  %816 = vst.msk [vmem:[#allocation4 + $0x38] sm:$0xff] %vm810, %v767
  %817 = vst.msk [vmem:[#allocation4 + $0x40] sm:$0xff] %vm812, %v767
  %818 = vst.msk [vmem:[#allocation4 + $0x50] sm:$0xff] %vm810, %v769
  %819 = vst.msk [vmem:[#allocation4 + $0x58] sm:$0xff] %vm812, %v769
  %820 = vst.msk [vmem:[#allocation4 + $0x68] sm:$0xff] %vm810, %v771
  %821 = vst.msk [vmem:[#allocation4 + $0x70] sm:$0xff] %vm812, %v771
  %822 = vst.msk [vmem:[#allocation4 + $0x80] sm:$0xff] %vm810, %v773
  %823 = vst.msk [vmem:[#allocation4 + $0x88] sm:$0xff] %vm812, %v773
  %824 = vst.msk [vmem:[#allocation4 + $0x98] sm:$0xff] %vm810, %v775
  %825 = vst.msk [vmem:[#allocation4 + $0xa0] sm:$0xff] %vm812, %v775
  %826 = vst.msk [vmem:[#allocation4 + $0xb0] sm:$0xff] %vm810, %v777
  %827 = vst.msk [vmem:[#allocation4 + $0xb8] sm:$0xff] %vm812, %v777
  %828 = vst.msk [vmem:[#allocation4 + $0xc8] sm:$0xff] %vm810, %v779
  %829 = vst.msk [vmem:[#allocation4 + $0xd0] sm:$0xff] %vm812, %v779
  %830 = vst.msk [vmem:[#allocation4 + $0xe0] sm:$0xff] %vm810, %v781
  %831 = vst.msk [vmem:[#allocation4 + $0xe8] sm:$0xff] %vm812, %v781
  %832 = vst.msk [vmem:[#allocation4 + $0xf8] sm:$0xff] %vm810, %v783
  %833 = vst.msk [vmem:[#allocation4 + $0x100] sm:$0xff] %vm812, %v783
  %834 = vst.msk [vmem:[#allocation4 + $0x110] sm:$0xff] %vm810, %v785
  %835 = vst.msk [vmem:[#allocation4 + $0x118] sm:$0xff] %vm812, %v785
  %836 = vst.msk [vmem:[#allocation4 + $0x128] sm:$0xff] %vm810, %v787
  %837 = vst.msk [vmem:[#allocation4 + $0x130] sm:$0xff] %vm812, %v787
  %838 = vst.msk [vmem:[#allocation4 + $0x140] sm:$0xff] %vm810, %v789
  %839 = vst.msk [vmem:[#allocation4 + $0x148] sm:$0xff] %vm812, %v789
  %840 = vst.msk [vmem:[#allocation4 + $0x158] sm:$0xff] %vm810, %v791
  %841 = vst.msk [vmem:[#allocation4 + $0x160] sm:$0xff] %vm812, %v791
  %842 = vst.msk [vmem:[#allocation4 + $0x170] sm:$0xff] %vm810, %v793
  %843 = vst.msk [vmem:[#allocation4 + $0x178] sm:$0xff] %vm812, %v793
  %v844 = vld [vmem:[%s729 + $0x1] sm:$0xff]
  %v845 = vld [vmem:[%s729 + $0x11] sm:$0xff]
  %v846 = vld [vmem:[%s729 + $0x21] sm:$0xff]
  %v847 = vld [vmem:[%s729 + $0x31] sm:$0xff]
  %v848 = vld [vmem:[%s729 + $0x41] sm:$0xff]
  %v849 = vld [vmem:[%s729 + $0x51] sm:$0xff]
  %v850 = vld [vmem:[%s729 + $0x61] sm:$0xff]
  %v851 = vld [vmem:[%s729 + $0x71] sm:$0xff]
  %v852 = vld [vmem:[%s729 + $0xa1] sm:$0xff]
  %v853 = vld [vmem:[%s729 + $0xb1] sm:$0xff]
  %v854 = vld [vmem:[%s729 + $0xc1] sm:$0xff]
  %v855 = vld [vmem:[%s729 + $0xd1] sm:$0xff]
  %v856 = vld [vmem:[%s729 + $0xe1] sm:$0xff]
  %v857 = vld [vmem:[%s729 + $0xf1] sm:$0xff]
  %v858 = vld [vmem:[%s729 + $0x101] sm:$0xff]
  %v859 = vld [vmem:[%s729 + $0x111] sm:$0xff]
  %876 = vrot.lane.b32.xlu0 %v844, 24
  %v877 = vpop.permute.xlu0 %876
  %878 = vrot.lane.b32.xlu0 %v845, 24
  %v879 = vpop.permute.xlu0 %878
  %880 = vrot.lane.b32.xlu0 %v846, 24
  %v881 = vpop.permute.xlu0 %880
  %882 = vrot.lane.b32.xlu0 %v847, 24
  %v883 = vpop.permute.xlu0 %882
  %884 = vrot.lane.b32.xlu0 %v848, 24
  %v885 = vpop.permute.xlu0 %884
  %886 = vrot.lane.b32.xlu0 %v849, 24
  %v887 = vpop.permute.xlu0 %886
  %888 = vrot.lane.b32.xlu0 %v850, 24
  %v889 = vpop.permute.xlu0 %888
  %890 = vrot.lane.b32.xlu0 %v851, 24
  %v891 = vpop.permute.xlu0 %890
  %892 = vrot.lane.b32.xlu0 %v852, 24
  %v893 = vpop.permute.xlu0 %892
  %894 = vrot.lane.b32.xlu0 %v853, 24
  %v895 = vpop.permute.xlu0 %894
  %896 = vrot.lane.b32.xlu0 %v854, 24
  %v897 = vpop.permute.xlu0 %896
  %898 = vrot.lane.b32.xlu0 %v855, 24
  %v899 = vpop.permute.xlu0 %898
  %900 = vrot.lane.b32.xlu0 %v856, 24
  %v901 = vpop.permute.xlu0 %900
  %902 = vrot.lane.b32.xlu0 %v857, 24
  %v903 = vpop.permute.xlu0 %902
  %904 = vrot.lane.b32.xlu0 %v858, 24
  %v905 = vpop.permute.xlu0 %904
  %906 = vrot.lane.b32.xlu0 %v859, 24
  %v907 = vpop.permute.xlu0 %906
  %vm924 = vcmask 523456
  %925 = vst.msk [vmem:[#allocation4 + $0x10] sm:$0xff] %vm924, %v877
  %926 = vst.msk [vmem:[#allocation4 + $0x28] sm:$0xff] %vm924, %v879
  %927 = vst.msk [vmem:[#allocation4 + $0x40] sm:$0xff] %vm924, %v881
  %928 = vst.msk [vmem:[#allocation4 + $0x58] sm:$0xff] %vm924, %v883
  %929 = vst.msk [vmem:[#allocation4 + $0x70] sm:$0xff] %vm924, %v885
  %930 = vst.msk [vmem:[#allocation4 + $0x88] sm:$0xff] %vm924, %v887
  %931 = vst.msk [vmem:[#allocation4 + $0xa0] sm:$0xff] %vm924, %v889
  %932 = vst.msk [vmem:[#allocation4 + $0xb8] sm:$0xff] %vm924, %v891
  %933 = vst.msk [vmem:[#allocation4 + $0xd0] sm:$0xff] %vm924, %v893
  %934 = vst.msk [vmem:[#allocation4 + $0xe8] sm:$0xff] %vm924, %v895
  %935 = vst.msk [vmem:[#allocation4 + $0x100] sm:$0xff] %vm924, %v897
  %936 = vst.msk [vmem:[#allocation4 + $0x118] sm:$0xff] %vm924, %v899
  %937 = vst.msk [vmem:[#allocation4 + $0x130] sm:$0xff] %vm924, %v901
  %938 = vst.msk [vmem:[#allocation4 + $0x148] sm:$0xff] %vm924, %v903
  %939 = vst.msk [vmem:[#allocation4 + $0x160] sm:$0xff] %vm924, %v905
  %940 = vst.msk [vmem:[#allocation4 + $0x178] sm:$0xff] %vm924, %v907
  %v941 = vld [vmem:[%s729 + $0x2] sm:$0xff]
  %v942 = vld [vmem:[%s729 + $0x12] sm:$0xff]
  %v943 = vld [vmem:[%s729 + $0x22] sm:$0xff]
  %v944 = vld [vmem:[%s729 + $0x32] sm:$0xff]
  %v945 = vld [vmem:[%s729 + $0x42] sm:$0xff]
  %v946 = vld [vmem:[%s729 + $0x52] sm:$0xff]
  %v947 = vld [vmem:[%s729 + $0x62] sm:$0xff]
  %v948 = vld [vmem:[%s729 + $0x72] sm:$0xff]
  %v949 = vld [vmem:[%s729 + $0xa2] sm:$0xff]
  %v950 = vld [vmem:[%s729 + $0xb2] sm:$0xff]
  %v951 = vld [vmem:[%s729 + $0xc2] sm:$0xff]
  %v952 = vld [vmem:[%s729 + $0xd2] sm:$0xff]
  %v953 = vld [vmem:[%s729 + $0xe2] sm:$0xff]
  %v954 = vld [vmem:[%s729 + $0xf2] sm:$0xff]
  %v955 = vld [vmem:[%s729 + $0x102] sm:$0xff]
  %v956 = vld [vmem:[%s729 + $0x112] sm:$0xff]
  %973 = vrot.lane.b32.xlu0 %v941, 64
  %v974 = vpop.permute.xlu0 %973
  %975 = vrot.lane.b32.xlu0 %v942, 64
  %v976 = vpop.permute.xlu0 %975
  %977 = vrot.lane.b32.xlu0 %v943, 64
  %v978 = vpop.permute.xlu0 %977
  %979 = vrot.lane.b32.xlu0 %v944, 64
  %v980 = vpop.permute.xlu0 %979
  %981 = vrot.lane.b32.xlu0 %v945, 64
  %v982 = vpop.permute.xlu0 %981
  %983 = vrot.lane.b32.xlu0 %v946, 64
  %v984 = vpop.permute.xlu0 %983
  %985 = vrot.lane.b32.xlu0 %v947, 64
  %v986 = vpop.permute.xlu0 %985
  %987 = vrot.lane.b32.xlu0 %v948, 64
  %v988 = vpop.permute.xlu0 %987
  %989 = vrot.lane.b32.xlu0 %v949, 64
  %v990 = vpop.permute.xlu0 %989
  %991 = vrot.lane.b32.xlu0 %v950, 64
  %v992 = vpop.permute.xlu0 %991
  %993 = vrot.lane.b32.xlu0 %v951, 64
  %v994 = vpop.permute.xlu0 %993
  %995 = vrot.lane.b32.xlu0 %v952, 64
  %v996 = vpop.permute.xlu0 %995
  %997 = vrot.lane.b32.xlu0 %v953, 64
  %v998 = vpop.permute.xlu0 %997
  %999 = vrot.lane.b32.xlu0 %v954, 64
  %v1000 = vpop.permute.xlu0 %999
  %1001 = vrot.lane.b32.xlu0 %v955, 64
  %v1002 = vpop.permute.xlu0 %1001
  %1003 = vrot.lane.b32.xlu0 %v956, 64
  %v1004 = vpop.permute.xlu0 %1003
  %vm1021 = vcmask 851456
  %1022 = vst.msk [vmem:[#allocation4 + $0x10] sm:$0xff] %vm1021, %v974
  %1023 = vst.msk [vmem:[#allocation4 + $0x28] sm:$0xff] %vm1021, %v976
  %1024 = vst.msk [vmem:[#allocation4 + $0x40] sm:$0xff] %vm1021, %v978
  %1025 = vst.msk [vmem:[#allocation4 + $0x58] sm:$0xff] %vm1021, %v980
  %1026 = vst.msk [vmem:[#allocation4 + $0x70] sm:$0xff] %vm1021, %v982
  %1027 = vst.msk [vmem:[#allocation4 + $0x88] sm:$0xff] %vm1021, %v984
  %1028 = vst.msk [vmem:[#allocation4 + $0xa0] sm:$0xff] %vm1021, %v986
  %1029 = vst.msk [vmem:[#allocation4 + $0xb8] sm:$0xff] %vm1021, %v988
  %1030 = vst.msk [vmem:[#allocation4 + $0xd0] sm:$0xff] %vm1021, %v990
  %1031 = vst.msk [vmem:[#allocation4 + $0xe8] sm:$0xff] %vm1021, %v992
  %1032 = vst.msk [vmem:[#allocation4 + $0x100] sm:$0xff] %vm1021, %v994
  %1033 = vst.msk [vmem:[#allocation4 + $0x118] sm:$0xff] %vm1021, %v996
  %1034 = vst.msk [vmem:[#allocation4 + $0x130] sm:$0xff] %vm1021, %v998
  %1035 = vst.msk [vmem:[#allocation4 + $0x148] sm:$0xff] %vm1021, %v1000
  %1036 = vst.msk [vmem:[#allocation4 + $0x160] sm:$0xff] %vm1021, %v1002
  %1037 = vst.msk [vmem:[#allocation4 + $0x178] sm:$0xff] %vm1021, %v1004
  %v1038 = vld [vmem:[#allocation4] sm:$0xff]
  %v1039 = vld [vmem:[#allocation4 + $0x8] sm:$0xff]
  %v1040 = vld [vmem:[#allocation4 + $0x10] sm:$0xff]
  %v1041 = vld [vmem:[#allocation4 + $0x18] sm:$0xff]
  %v1042 = vld [vmem:[#allocation4 + $0x20] sm:$0xff]
  %v1043 = vld [vmem:[#allocation4 + $0x28] sm:$0xff]
  %v1044 = vld [vmem:[#allocation4 + $0x30] sm:$0xff]
  %v1045 = vld [vmem:[#allocation4 + $0x38] sm:$0xff]
  %v1046 = vld [vmem:[#allocation4 + $0x40] sm:$0xff]
  %v1047 = vld [vmem:[#allocation4 + $0x48] sm:$0xff]
  %v1048 = vld [vmem:[#allocation4 + $0x50] sm:$0xff]
  %v1049 = vld [vmem:[#allocation4 + $0x58] sm:$0xff]
  %v1050 = vld [vmem:[#allocation4 + $0x60] sm:$0xff]
  %v1051 = vld [vmem:[#allocation4 + $0x68] sm:$0xff]
  %v1052 = vld [vmem:[#allocation4 + $0x70] sm:$0xff]
  %v1053 = vld [vmem:[#allocation4 + $0x78] sm:$0xff]
  %v1054 = vld [vmem:[#allocation4 + $0x80] sm:$0xff]
  %v1055 = vld [vmem:[#allocation4 + $0x88] sm:$0xff]
  %v1056 = vld [vmem:[#allocation4 + $0x90] sm:$0xff]
  %v1057 = vld [vmem:[#allocation4 + $0x98] sm:$0xff]
  %v1058 = vld [vmem:[#allocation4 + $0xa0] sm:$0xff]
  %v1059 = vld [vmem:[#allocation4 + $0xa8] sm:$0xff]
  %v1060 = vld [vmem:[#allocation4 + $0xb0] sm:$0xff]
  %v1061 = vld [vmem:[#allocation4 + $0xb8] sm:$0xff]
  %v1062 = vld [vmem:[#allocation4 + $0xc0] sm:$0xff]
  %v1063 = vld [vmem:[#allocation4 + $0xc8] sm:$0xff]
  %v1064 = vld [vmem:[#allocation4 + $0xd0] sm:$0xff]
  %v1065 = vld [vmem:[#allocation4 + $0xd8] sm:$0xff]
  %v1066 = vld [vmem:[#allocation4 + $0xe0] sm:$0xff]
  %v1067 = vld [vmem:[#allocation4 + $0xe8] sm:$0xff]
  %v1068 = vld [vmem:[#allocation4 + $0xf0] sm:$0xff]
  %v1069 = vld [vmem:[#allocation4 + $0xf8] sm:$0xff]
  %v1070 = vld [vmem:[#allocation4 + $0x100] sm:$0xff]
  %v1071 = vld [vmem:[#allocation4 + $0x108] sm:$0xff]
  %v1072 = vld [vmem:[#allocation4 + $0x110] sm:$0xff]
  %v1073 = vld [vmem:[#allocation4 + $0x118] sm:$0xff]
  %v1074 = vld [vmem:[#allocation4 + $0x120] sm:$0xff]
  %v1075 = vld [vmem:[#allocation4 + $0x128] sm:$0xff]
  %v1076 = vld [vmem:[#allocation4 + $0x130] sm:$0xff]
  %v1077 = vld [vmem:[#allocation4 + $0x138] sm:$0xff]
  %v1078 = vld [vmem:[#allocation4 + $0x140] sm:$0xff]
  %v1079 = vld [vmem:[#allocation4 + $0x148] sm:$0xff]
  %v1080 = vld [vmem:[#allocation4 + $0x150] sm:$0xff]
  %v1081 = vld [vmem:[#allocation4 + $0x158] sm:$0xff]
  %v1082 = vld [vmem:[#allocation4 + $0x160] sm:$0xff]
  %v1083 = vld [vmem:[#allocation4 + $0x168] sm:$0xff]
  %v1084 = vld [vmem:[#allocation4 + $0x170] sm:$0xff]
  %v1085 = vld [vmem:[#allocation4 + $0x178] sm:$0xff]
  %v1086 = vld [vmem:[%s1] sm:$0xff]
  %v1087 = vld [vmem:[%s1 + $0x8] sm:$0xff]
  %v1088 = vld [vmem:[%s1 + $0x10] sm:$0xff]
  %v1089 = vld [vmem:[%s1 + $0x18] sm:$0xff]
  %v1090 = vld [vmem:[%s1 + $0x20] sm:$0xff]
  %v1091 = vld [vmem:[%s1 + $0x28] sm:$0xff]
  %v1092 = vld [vmem:[%s1 + $0x30] sm:$0xff]
  %v1093 = vld [vmem:[%s1 + $0x38] sm:$0xff]
  %v1094 = vld [vmem:[%s1 + $0x40] sm:$0xff]
  %v1095 = vld [vmem:[%s1 + $0x48] sm:$0xff]
  %v1096 = vld [vmem:[%s1 + $0x50] sm:$0xff]
  %v1097 = vld [vmem:[%s1 + $0x58] sm:$0xff]
  %v1098 = vld [vmem:[%s1 + $0x60] sm:$0xff]
  %v1099 = vld [vmem:[%s1 + $0x68] sm:$0xff]
  %v1100 = vld [vmem:[%s1 + $0x70] sm:$0xff]
  %v1101 = vld [vmem:[%s1 + $0x78] sm:$0xff]
  %v1102 = vld [vmem:[%s1 + $0x80] sm:$0xff]
  %v1103 = vld [vmem:[%s1 + $0x88] sm:$0xff]
  %v1104 = vld [vmem:[%s1 + $0x90] sm:$0xff]
  %v1105 = vld [vmem:[%s1 + $0x98] sm:$0xff]
  %v1106 = vld [vmem:[%s1 + $0xa0] sm:$0xff]
  %v1107 = vld [vmem:[%s1 + $0xa8] sm:$0xff]
  %v1108 = vld [vmem:[%s1 + $0xb0] sm:$0xff]
  %v1109 = vld [vmem:[%s1 + $0xb8] sm:$0xff]
  %v1110 = vld [vmem:[%s1 + $0xc0] sm:$0xff]
  %v1111 = vld [vmem:[%s1 + $0xc8] sm:$0xff]
  %v1112 = vld [vmem:[%s1 + $0xd0] sm:$0xff]
  %v1113 = vld [vmem:[%s1 + $0xd8] sm:$0xff]
  %v1114 = vld [vmem:[%s1 + $0xe0] sm:$0xff]
  %v1115 = vld [vmem:[%s1 + $0xe8] sm:$0xff]
  %v1116 = vld [vmem:[%s1 + $0xf0] sm:$0xff]
  %v1117 = vld [vmem:[%s1 + $0xf8] sm:$0xff]
  %v1118 = vld [vmem:[%s1 + $0x100] sm:$0xff]
  %v1119 = vld [vmem:[%s1 + $0x108] sm:$0xff]
  %v1120 = vld [vmem:[%s1 + $0x110] sm:$0xff]
  %v1121 = vld [vmem:[%s1 + $0x118] sm:$0xff]
  %v1122 = vld [vmem:[%s1 + $0x120] sm:$0xff]
  %v1123 = vld [vmem:[%s1 + $0x128] sm:$0xff]
  %v1124 = vld [vmem:[%s1 + $0x130] sm:$0xff]
  %v1125 = vld [vmem:[%s1 + $0x138] sm:$0xff]
  %v1126 = vld [vmem:[%s1 + $0x140] sm:$0xff]
  %v1127 = vld [vmem:[%s1 + $0x148] sm:$0xff]
  %v1128 = vld [vmem:[%s1 + $0x150] sm:$0xff]
  %v1129 = vld [vmem:[%s1 + $0x158] sm:$0xff]
  %v1130 = vld [vmem:[%s1 + $0x160] sm:$0xff]
  %v1131 = vld [vmem:[%s1 + $0x168] sm:$0xff]
  %v1132 = vld [vmem:[%s1 + $0x170] sm:$0xff]
  %v1133 = vld [vmem:[%s1 + $0x178] sm:$0xff]
  %v1134 = vld [vmem:[%s1 + $0x180] sm:$0xff]
  %v1135 = vld [vmem:[%s1 + $0x188] sm:$0xff]
  %v1136 = vld [vmem:[%s1 + $0x190] sm:$0xff]
  %v1137 = vld [vmem:[%s1 + $0x198] sm:$0xff]
  %v1138 = vld [vmem:[%s1 + $0x1a0] sm:$0xff]
  %v1139 = vld [vmem:[%s1 + $0x1a8] sm:$0xff]
  %v1140 = vld [vmem:[%s1 + $0x1b0] sm:$0xff]
  %v1141 = vld [vmem:[%s1 + $0x1b8] sm:$0xff]
  %v1142 = vld [vmem:[%s1 + $0x1c0] sm:$0xff]
  %v1143 = vld [vmem:[%s1 + $0x1c8] sm:$0xff]
  %v1144 = vld [vmem:[%s1 + $0x1d0] sm:$0xff]
  %v1145 = vld [vmem:[%s1 + $0x1d8] sm:$0xff]
  %v1146 = vld [vmem:[%s1 + $0x1e0] sm:$0xff]
  %v1147 = vld [vmem:[%s1 + $0x1e8] sm:$0xff]
  %v1148 = vld [vmem:[%s1 + $0x1f0] sm:$0xff]
  %v1149 = vld [vmem:[%s1 + $0x1f8] sm:$0xff]
  %v1150 = vld [vmem:[%s1 + $0x200] sm:$0xff]
  %v1151 = vld [vmem:[%s1 + $0x208] sm:$0xff]
  %v1152 = vld [vmem:[%s1 + $0x210] sm:$0xff]
  %v1153 = vld [vmem:[%s1 + $0x218] sm:$0xff]
  %v1154 = vld [vmem:[%s1 + $0x220] sm:$0xff]
  %v1155 = vld [vmem:[%s1 + $0x228] sm:$0xff]
  %v1156 = vld [vmem:[%s1 + $0x230] sm:$0xff]
  %v1157 = vld [vmem:[%s1 + $0x238] sm:$0xff]
  %v1158 = vld [vmem:[%s1 + $0x240] sm:$0xff]
  %v1159 = vld [vmem:[%s1 + $0x248] sm:$0xff]
  %v1160 = vld [vmem:[%s1 + $0x250] sm:$0xff]
  %v1161 = vld [vmem:[%s1 + $0x258] sm:$0xff]
  %v1162 = vld [vmem:[%s1 + $0x260] sm:$0xff]
  %v1163 = vld [vmem:[%s1 + $0x268] sm:$0xff]
  %v1164 = vld [vmem:[%s1 + $0x270] sm:$0xff]
  %v1165 = vld [vmem:[%s1 + $0x278] sm:$0xff]
  %v1166 = vld [vmem:[%s1 + $0x280] sm:$0xff]
  %v1167 = vld [vmem:[%s1 + $0x288] sm:$0xff]
  %v1168 = vld [vmem:[%s1 + $0x290] sm:$0xff]
  %v1169 = vld [vmem:[%s1 + $0x298] sm:$0xff]
  %v1170 = vld [vmem:[%s1 + $0x2a0] sm:$0xff]
  %v1171 = vld [vmem:[%s1 + $0x2a8] sm:$0xff]
  %v1172 = vld [vmem:[%s1 + $0x2b0] sm:$0xff]
  %v1173 = vld [vmem:[%s1 + $0x2b8] sm:$0xff]
  %v1174 = vld [vmem:[%s1 + $0x2c0] sm:$0xff]
  %v1175 = vld [vmem:[%s1 + $0x2c8] sm:$0xff]
  %vm1176 = vcmask 850944
  %v1178 = vsel %vm1176, %v1040, 0
  %v1181 = vsel %vm1176, %v1043, 0
  %v1184 = vsel %vm1176, %v1046, 0
  %v1187 = vsel %vm1176, %v1049, 0
  %v1190 = vsel %vm1176, %v1052, 0
  %v1193 = vsel %vm1176, %v1055, 0
  %v1196 = vsel %vm1176, %v1058, 0
  %v1199 = vsel %vm1176, %v1061, 0
  %v1202 = vsel %vm1176, %v1064, 0
  %v1205 = vsel %vm1176, %v1067, 0
  %v1208 = vsel %vm1176, %v1070, 0
  %v1211 = vsel %vm1176, %v1073, 0
  %v1214 = vsel %vm1176, %v1076, 0
  %v1217 = vsel %vm1176, %v1079, 0
  %v1220 = vsel %vm1176, %v1082, 0
  %v1223 = vsel %vm1176, %v1085, 0
  %1225 = vmatprep.subr.mxu0 %v1117
  %1226 = vmatpush1.msra.mxu0 %v1116
  %1227 = vmatprep.subr.mxu0 %v1115
  %1228 = vmatpush1.msra.mxu0 %v1114
  %1229 = vmatprep.subr.mxu0 %v1113
  %1230 = vmatpush1.msra.mxu0 %v1112
  %1231 = vmatprep.subr.mxu0 %v1111
  %1232 = vmatpush1.msra.mxu0 %v1110
  %1233 = vmatprep.subr.mxu0 %v1109
  %1234 = vmatpush1.msra.mxu0 %v1108
  %1235 = vmatprep.subr.mxu0 %v1107
  %1236 = vmatpush1.msra.mxu0 %v1106
  %1237 = vmatprep.subr.mxu0 %v1105
  %1238 = vmatpush1.msra.mxu0 %v1104
  %1239 = vmatprep.subr.mxu0 %v1103
  %1240 = vmatpush1.msra.mxu0 %v1102
  %1241 = vmatprep.subr.mxu0 %v1101
  %1242 = vmatpush1.msra.mxu0 %v1100
  %1243 = vmatprep.subr.mxu0 %v1099
  %1244 = vmatpush1.msra.mxu0 %v1098
  %1245 = vmatprep.subr.mxu0 %v1097
  %1246 = vmatpush1.msra.mxu0 %v1096
  %1247 = vmatprep.subr.mxu0 %v1095
  %1248 = vmatpush1.msra.mxu0 %v1094
  %1249 = vmatprep.subr.mxu0 %v1093
  %1250 = vmatpush1.msra.mxu0 %v1092
  %1251 = vmatprep.subr.mxu0 %v1091
  %1252 = vmatpush1.msra.mxu0 %v1090
  %1253 = vmatprep.subr.mxu0 %v1089
  %1254 = vmatpush1.msra.mxu0 %v1088
  %1255 = vmatprep.subr.mxu0 %v1087
  %1256 = vmatpush1.msra.mxu0 %v1086
  %1257 = vmatprep.subr.mxu0 %v1149
  %1258 = vmatpush2.msra.mxu0 %v1148
  %1259 = vmatprep.subr.mxu0 %v1147
  %1260 = vmatpush2.msra.mxu0 %v1146
  %1261 = vmatprep.subr.mxu0 %v1145
  %1262 = vmatpush2.msra.mxu0 %v1144
  %1263 = vmatprep.subr.mxu0 %v1143
  %1264 = vmatpush2.msra.mxu0 %v1142
  %1265 = vmatprep.subr.mxu0 %v1141
  %1266 = vmatpush2.msra.mxu0 %v1140
  %1267 = vmatprep.subr.mxu0 %v1139
  %1268 = vmatpush2.msra.mxu0 %v1138
  %1269 = vmatprep.subr.mxu0 %v1137
  %1270 = vmatpush2.msra.mxu0 %v1136
  %1271 = vmatprep.subr.mxu0 %v1135
  %1272 = vmatpush2.msra.mxu0 %v1134
  %1273 = vmatprep.subr.mxu0 %v1133
  %1274 = vmatpush2.msra.mxu0 %v1132
  %1275 = vmatprep.subr.mxu0 %v1131
  %1276 = vmatpush2.msra.mxu0 %v1130
  %1277 = vmatprep.subr.mxu0 %v1129
  %1278 = vmatpush2.msra.mxu0 %v1128
  %1279 = vmatprep.subr.mxu0 %v1127
  %1280 = vmatpush2.msra.mxu0 %v1126
  %1281 = vmatprep.subr.mxu0 %v1125
  %1282 = vmatpush2.msra.mxu0 %v1124
  %1283 = vmatprep.subr.mxu0 %v1123
  %1284 = vmatpush2.msra.mxu0 %v1122
  %1285 = vmatprep.subr.mxu0 %v1121
  %1286 = vmatpush2.msra.mxu0 %v1120
  %1287 = vmatprep.subr.mxu0 %v1119
  %1288 = vmatpush2.msra.mxu0 %v1118
  %1289 = vmatprep.mubr.f32.mxu0 %v1039
  %1290 = vmatmul.mubr.f32.gmra.mxu0 %v1038
  %v1291 = vpop.f32.mrf.mxu0
  %v1292 = vadd.f32 0.0, %v1291
  %v1293 = vpop.f32.mrf.mxu0
  %v1294 = vadd.f32 0.0, %v1293
  %1295 = vmatprep.mubr.f32.mxu0 %v1042
  %1296 = vmatmul.mubr.f32.gmra.mxu0 %v1041
  %v1297 = vpop.f32.mrf.mxu0
  %v1298 = vadd.f32 0.0, %v1297
  %v1299 = vpop.f32.mrf.mxu0
  %v1300 = vadd.f32 0.0, %v1299
  %1301 = vmatprep.mubr.f32.mxu0 %v1045
  %1302 = vmatmul.mubr.f32.gmra.mxu0 %v1044
  %v1303 = vpop.f32.mrf.mxu0
  %v1304 = vadd.f32 0.0, %v1303
  %v1305 = vpop.f32.mrf.mxu0
  %v1306 = vadd.f32 0.0, %v1305
  %1307 = vmatprep.mubr.f32.mxu0 %v1048
  %1308 = vmatmul.mubr.f32.gmra.mxu0 %v1047
  %v1309 = vpop.f32.mrf.mxu0
  %v1310 = vadd.f32 0.0, %v1309
  %v1311 = vpop.f32.mrf.mxu0
  %v1312 = vadd.f32 0.0, %v1311
  %1313 = vmatprep.mubr.f32.mxu0 %v1051
  %1314 = vmatmul.mubr.f32.gmra.mxu0 %v1050
  %v1315 = vpop.f32.mrf.mxu0
  %v1316 = vadd.f32 0.0, %v1315
  %v1317 = vpop.f32.mrf.mxu0
  %v1318 = vadd.f32 0.0, %v1317
  %1319 = vmatprep.mubr.f32.mxu0 %v1054
  %1320 = vmatmul.mubr.f32.gmra.mxu0 %v1053
  %v1321 = vpop.f32.mrf.mxu0
  %v1322 = vadd.f32 0.0, %v1321
  %v1323 = vpop.f32.mrf.mxu0
  %v1324 = vadd.f32 0.0, %v1323
  %1325 = vmatprep.mubr.f32.mxu0 %v1057
  %1326 = vmatmul.mubr.f32.gmra.mxu0 %v1056
  %v1327 = vpop.f32.mrf.mxu0
  %v1328 = vadd.f32 0.0, %v1327
  %v1329 = vpop.f32.mrf.mxu0
  %v1330 = vadd.f32 0.0, %v1329
  %1331 = vmatprep.mubr.f32.mxu0 %v1060
  %1332 = vmatmul.mubr.f32.gmra.mxu0 %v1059
  %v1333 = vpop.f32.mrf.mxu0
  %v1334 = vadd.f32 0.0, %v1333
  %v1335 = vpop.f32.mrf.mxu0
  %v1336 = vadd.f32 0.0, %v1335
  %1337 = vmatprep.mubr.f32.mxu0 %v1063
  %1338 = vmatmul.mubr.f32.gmra.mxu0 %v1062
  %v1339 = vpop.f32.mrf.mxu0
  %v1340 = vadd.f32 0.0, %v1339
  %v1341 = vpop.f32.mrf.mxu0
  %v1342 = vadd.f32 0.0, %v1341
  %1343 = vmatprep.mubr.f32.mxu0 %v1066
  %1344 = vmatmul.mubr.f32.gmra.mxu0 %v1065
  %v1345 = vpop.f32.mrf.mxu0
  %v1346 = vadd.f32 0.0, %v1345
  %v1347 = vpop.f32.mrf.mxu0
  %v1348 = vadd.f32 0.0, %v1347
  %1349 = vmatprep.mubr.f32.mxu0 %v1069
  %1350 = vmatmul.mubr.f32.gmra.mxu0 %v1068
  %v1351 = vpop.f32.mrf.mxu0
  %v1352 = vadd.f32 0.0, %v1351
  %v1353 = vpop.f32.mrf.mxu0
  %v1354 = vadd.f32 0.0, %v1353
  %1355 = vmatprep.mubr.f32.mxu0 %v1072
  %1356 = vmatmul.mubr.f32.gmra.mxu0 %v1071
  %v1357 = vpop.f32.mrf.mxu0
  %v1358 = vadd.f32 0.0, %v1357
  %v1359 = vpop.f32.mrf.mxu0
  %v1360 = vadd.f32 0.0, %v1359
  %1361 = vmatprep.mubr.f32.mxu0 %v1075
  %1362 = vmatmul.mubr.f32.gmra.mxu0 %v1074
  %v1363 = vpop.f32.mrf.mxu0
  %v1364 = vadd.f32 0.0, %v1363
  %v1365 = vpop.f32.mrf.mxu0
  %v1366 = vadd.f32 0.0, %v1365
  %1367 = vmatprep.mubr.f32.mxu0 %v1078
  %1368 = vmatmul.mubr.f32.gmra.mxu0 %v1077
  %v1369 = vpop.f32.mrf.mxu0
  %v1370 = vadd.f32 0.0, %v1369
  %v1371 = vpop.f32.mrf.mxu0
  %v1372 = vadd.f32 0.0, %v1371
  %1373 = vmatprep.mubr.f32.mxu0 %v1081
  %1374 = vmatmul.mubr.f32.gmra.mxu0 %v1080
  %v1375 = vpop.f32.mrf.mxu0
  %v1376 = vadd.f32 0.0, %v1375
  %v1377 = vpop.f32.mrf.mxu0
  %v1378 = vadd.f32 0.0, %v1377
  %1379 = vmatprep.mubr.f32.mxu0 %v1084
  %1380 = vmatmul.mubr.f32.gmra.mxu0 %v1083
  %v1381 = vpop.f32.mrf.mxu0
  %v1382 = vadd.f32 0.0, %v1381
  %v1383 = vpop.f32.mrf.mxu0
  %v1384 = vadd.f32 0.0, %v1383
  %1385 = vdwg.mxu0
  %1386 = vmatprep.subr.mxu0 0.0
  %1387 = vmatpush1.msra.mxu0 0.0
  %1388 = vmatprep.subr.mxu0 0.0
  %1389 = vmatpush1.msra.mxu0 0.0
  %1390 = vmatprep.subr.mxu0 0.0
  %1391 = vmatpush1.msra.mxu0 0.0
  %1392 = vmatprep.subr.mxu0 %v1175
  %1393 = vmatpush1.msra.mxu0 %v1174
  %1394 = vmatprep.subr.mxu0 %v1173
  %1395 = vmatpush1.msra.mxu0 %v1172
  %1396 = vmatprep.subr.mxu0 %v1171
  %1397 = vmatpush1.msra.mxu0 %v1170
  %1398 = vmatprep.subr.mxu0 %v1169
  %1399 = vmatpush1.msra.mxu0 %v1168
  %1400 = vmatprep.subr.mxu0 %v1167
  %1401 = vmatpush1.msra.mxu0 %v1166
  %1402 = vmatprep.subr.mxu0 %v1165
  %1403 = vmatpush1.msra.mxu0 %v1164
  %1404 = vmatprep.subr.mxu0 %v1163
  %1405 = vmatpush1.msra.mxu0 %v1162
  %1406 = vmatprep.subr.mxu0 %v1161
  %1407 = vmatpush1.msra.mxu0 %v1160
  %1408 = vmatprep.subr.mxu0 %v1159
  %1409 = vmatpush1.msra.mxu0 %v1158
  %1410 = vmatprep.subr.mxu0 %v1157
  %1411 = vmatpush1.msra.mxu0 %v1156
  %1412 = vmatprep.subr.mxu0 %v1155
  %1413 = vmatpush1.msra.mxu0 %v1154
  %1414 = vmatprep.subr.mxu0 %v1153
  %1415 = vmatpush1.msra.mxu0 %v1152
  %1416 = vmatprep.subr.mxu0 %v1151
  %1417 = vmatpush1.msra.mxu0 %v1150
  %1418 = vmatprep.subr.mxu0 0.0
  %1419 = vmatpush2.msra.mxu0 0.0
  %1420 = vmatprep.subr.mxu0 0.0
  %1421 = vmatpush2.msra.mxu0 0.0
  %1422 = vmatprep.subr.mxu0 0.0
  %1423 = vmatpush2.msra.mxu0 0.0
  %1424 = vmatprep.subr.mxu0 0.0
  %1425 = vmatpush2.msra.mxu0 0.0
  %1426 = vmatprep.subr.mxu0 0.0
  %1427 = vmatpush2.msra.mxu0 0.0
  %1428 = vmatprep.subr.mxu0 0.0
  %1429 = vmatpush2.msra.mxu0 0.0
  %1430 = vmatprep.subr.mxu0 0.0
  %1431 = vmatpush2.msra.mxu0 0.0
  %1432 = vmatprep.subr.mxu0 0.0
  %1433 = vmatpush2.msra.mxu0 0.0
  %1434 = vmatprep.subr.mxu0 0.0
  %1435 = vmatpush2.msra.mxu0 0.0
  %1436 = vmatprep.subr.mxu0 0.0
  %1437 = vmatpush2.msra.mxu0 0.0
  %1438 = vmatprep.subr.mxu0 0.0
  %1439 = vmatpush2.msra.mxu0 0.0
  %1440 = vmatprep.subr.mxu0 0.0
  %1441 = vmatpush2.msra.mxu0 0.0
  %1442 = vmatprep.subr.mxu0 0.0
  %1443 = vmatpush2.msra.mxu0 0.0
  %1444 = vmatprep.subr.mxu0 0.0
  %1445 = vmatpush2.msra.mxu0 0.0
  %1446 = vmatprep.subr.mxu0 0.0
  %1447 = vmatpush2.msra.mxu0 0.0
  %1448 = vmatprep.subr.mxu0 0.0
  %1449 = vmatpush2.msra.mxu0 0.0
  %1450 = vmatprep.mubr.f32.mxu0 0.0
  %1451 = vmatmul.mubr.f32.gmra.mxu0 %v1178
  %v1452 = vpop.f32.mrf.mxu0
  %v1453 = vadd.f32 %v1292, %v1452
  %v1454 = vpop.f32.mrf.mxu0
  %v1455 = vadd.f32 %v1294, %v1454
  %1456 = vmatprep.mubr.f32.mxu0 0.0
  %1457 = vmatmul.mubr.f32.gmra.mxu0 %v1181
  %v1458 = vpop.f32.mrf.mxu0
  %v1459 = vadd.f32 %v1298, %v1458
  %v1460 = vpop.f32.mrf.mxu0
  %v1461 = vadd.f32 %v1300, %v1460
  %1462 = vmatprep.mubr.f32.mxu0 0.0
  %1463 = vmatmul.mubr.f32.gmra.mxu0 %v1184
  %v1464 = vpop.f32.mrf.mxu0
  %v1465 = vadd.f32 %v1304, %v1464
  %v1466 = vpop.f32.mrf.mxu0
  %v1467 = vadd.f32 %v1306, %v1466
  %1468 = vmatprep.mubr.f32.mxu0 0.0
  %1469 = vmatmul.mubr.f32.gmra.mxu0 %v1187
  %v1470 = vpop.f32.mrf.mxu0
  %v1471 = vadd.f32 %v1310, %v1470
  %v1472 = vpop.f32.mrf.mxu0
  %v1473 = vadd.f32 %v1312, %v1472
  %1474 = vmatprep.mubr.f32.mxu0 0.0
  %1475 = vmatmul.mubr.f32.gmra.mxu0 %v1190
  %v1476 = vpop.f32.mrf.mxu0
  %v1477 = vadd.f32 %v1316, %v1476
  %v1478 = vpop.f32.mrf.mxu0
  %v1479 = vadd.f32 %v1318, %v1478
  %1480 = vmatprep.mubr.f32.mxu0 0.0
  %1481 = vmatmul.mubr.f32.gmra.mxu0 %v1193
  %v1482 = vpop.f32.mrf.mxu0
  %v1483 = vadd.f32 %v1322, %v1482
  %v1484 = vpop.f32.mrf.mxu0
  %v1485 = vadd.f32 %v1324, %v1484
  %1486 = vmatprep.mubr.f32.mxu0 0.0
  %1487 = vmatmul.mubr.f32.gmra.mxu0 %v1196
  %v1488 = vpop.f32.mrf.mxu0
  %v1489 = vadd.f32 %v1328, %v1488
  %v1490 = vpop.f32.mrf.mxu0
  %v1491 = vadd.f32 %v1330, %v1490
  %1492 = vmatprep.mubr.f32.mxu0 0.0
  %1493 = vmatmul.mubr.f32.gmra.mxu0 %v1199
  %v1494 = vpop.f32.mrf.mxu0
  %v1495 = vadd.f32 %v1334, %v1494
  %v1496 = vpop.f32.mrf.mxu0
  %v1497 = vadd.f32 %v1336, %v1496
  %1498 = vmatprep.mubr.f32.mxu0 0.0
  %1499 = vmatmul.mubr.f32.gmra.mxu0 %v1202
  %v1500 = vpop.f32.mrf.mxu0
  %v1501 = vadd.f32 %v1340, %v1500
  %v1502 = vpop.f32.mrf.mxu0
  %v1503 = vadd.f32 %v1342, %v1502
  %1504 = vmatprep.mubr.f32.mxu0 0.0
  %1505 = vmatmul.mubr.f32.gmra.mxu0 %v1205
  %v1506 = vpop.f32.mrf.mxu0
  %v1507 = vadd.f32 %v1346, %v1506
  %v1508 = vpop.f32.mrf.mxu0
  %v1509 = vadd.f32 %v1348, %v1508
  %1510 = vmatprep.mubr.f32.mxu0 0.0
  %1511 = vmatmul.mubr.f32.gmra.mxu0 %v1208
  %v1512 = vpop.f32.mrf.mxu0
  %v1513 = vadd.f32 %v1352, %v1512
  %v1514 = vpop.f32.mrf.mxu0
  %v1515 = vadd.f32 %v1354, %v1514
  %1516 = vmatprep.mubr.f32.mxu0 0.0
  %1517 = vmatmul.mubr.f32.gmra.mxu0 %v1211
  %v1518 = vpop.f32.mrf.mxu0
  %v1519 = vadd.f32 %v1358, %v1518
  %v1520 = vpop.f32.mrf.mxu0
  %v1521 = vadd.f32 %v1360, %v1520
  %1522 = vmatprep.mubr.f32.mxu0 0.0
  %1523 = vmatmul.mubr.f32.gmra.mxu0 %v1214
  %v1524 = vpop.f32.mrf.mxu0
  %v1525 = vadd.f32 %v1364, %v1524
  %v1526 = vpop.f32.mrf.mxu0
  %v1527 = vadd.f32 %v1366, %v1526
  %1528 = vmatprep.mubr.f32.mxu0 0.0
  %1529 = vmatmul.mubr.f32.gmra.mxu0 %v1217
  %v1530 = vpop.f32.mrf.mxu0
  %v1531 = vadd.f32 %v1370, %v1530
  %v1532 = vpop.f32.mrf.mxu0
  %v1533 = vadd.f32 %v1372, %v1532
  %1534 = vmatprep.mubr.f32.mxu0 0.0
  %1535 = vmatmul.mubr.f32.gmra.mxu0 %v1220
  %v1536 = vpop.f32.mrf.mxu0
  %v1537 = vadd.f32 %v1376, %v1536
  %v1538 = vpop.f32.mrf.mxu0
  %v1539 = vadd.f32 %v1378, %v1538
  %1540 = vmatprep.mubr.f32.mxu0 0.0
  %1541 = vmatmul.mubr.f32.gmra.mxu0 %v1223
  %v1542 = vpop.f32.mrf.mxu0
  %v1543 = vadd.f32 %v1382, %v1542
  %v1544 = vpop.f32.mrf.mxu0
  %v1545 = vadd.f32 %v1384, %v1544
  %1546 = vdwg.mxu0
  %v1547 = vld [vmem:[%s3] sm:$0x1]
  %v1549 = vlaneseq
  %v1550 = vshrl.u32 %v1549, 7
  %v1551 = vsub.s32 0, %v1550
  %v1552 = vrot.slane %v1547, %v1551
  %v1554 = vadd.f32 %v1453, %v1552
  %v1555 = vadd.f32 %v1459, %v1552
  %v1556 = vadd.f32 %v1465, %v1552
  %v1557 = vadd.f32 %v1471, %v1552
  %v1558 = vadd.f32 %v1477, %v1552
  %v1559 = vadd.f32 %v1483, %v1552
  %v1560 = vadd.f32 %v1489, %v1552
  %v1561 = vadd.f32 %v1495, %v1552
  %v1562 = vadd.f32 %v1501, %v1552
  %v1563 = vadd.f32 %v1507, %v1552
  %v1564 = vadd.f32 %v1513, %v1552
  %v1565 = vadd.f32 %v1519, %v1552
  %v1566 = vadd.f32 %v1525, %v1552
  %v1567 = vadd.f32 %v1531, %v1552
  %v1568 = vadd.f32 %v1537, %v1552
  %v1569 = vadd.f32 %v1543, %v1552
  %v1570 = vmax.f32 %v1554, 0.0
  %v1571 = vmax.f32 %v1555, 0.0
  %v1572 = vmax.f32 %v1556, 0.0
  %v1573 = vmax.f32 %v1557, 0.0
  %v1574 = vmax.f32 %v1558, 0.0
  %v1575 = vmax.f32 %v1559, 0.0
  %v1576 = vmax.f32 %v1560, 0.0
  %v1577 = vmax.f32 %v1561, 0.0
  %v1578 = vmax.f32 %v1562, 0.0
  %v1579 = vmax.f32 %v1563, 0.0
  %v1580 = vmax.f32 %v1564, 0.0
  %v1581 = vmax.f32 %v1565, 0.0
  %v1582 = vmax.f32 %v1566, 0.0
  %v1583 = vmax.f32 %v1567, 0.0
  %v1584 = vmax.f32 %v1568, 0.0
  %v1585 = vmax.f32 %v1569, 0.0
  %1586 = vst [vmem:[%s5] sm:$0xff] %v1570
  %1587 = vst [vmem:[%s5 + $0x8] sm:$0xff] %v1571
  %1588 = vst [vmem:[%s5 + $0x10] sm:$0xff] %v1572
  %1589 = vst [vmem:[%s5 + $0x18] sm:$0xff] %v1573
  %1590 = vst [vmem:[%s5 + $0x20] sm:$0xff] %v1574
  %1591 = vst [vmem:[%s5 + $0x28] sm:$0xff] %v1575
  %1592 = vst [vmem:[%s5 + $0x30] sm:$0xff] %v1576
  %1593 = vst [vmem:[%s5 + $0x38] sm:$0xff] %v1577
  %1594 = vst [vmem:[%s5 + $0x40] sm:$0xff] %v1578
  %1595 = vst [vmem:[%s5 + $0x48] sm:$0xff] %v1579
  %1596 = vst [vmem:[%s5 + $0x50] sm:$0xff] %v1580
  %1597 = vst [vmem:[%s5 + $0x58] sm:$0xff] %v1581
  %1598 = vst [vmem:[%s5 + $0x60] sm:$0xff] %v1582
  %1599 = vst [vmem:[%s5 + $0x68] sm:$0xff] %v1583
  %1600 = vst [vmem:[%s5 + $0x70] sm:$0xff] %v1584
  %1601 = vst [vmem:[%s5 + $0x78] sm:$0xff] %v1585
  %1602 = vst [vmem:[#allocation3] sm:$0xff] 0.0
  %1603 = vst.msk [vmem:[#allocation3 + $0x8] sm:$0xff] %vm503, 0.0
  %1604 = vst [vmem:[#allocation3 + $0x10] sm:$0x3] 0.0
  %vm1605 = vcmask 254976
  %1606 = vst.msk [vmem:[#allocation3 + $0x18] sm:$0x3] %vm1605, 0.0
  %1607 = vst [vmem:[#allocation3 + $0x20] sm:$0xff] 0.0
  %1608 = vst.msk [vmem:[#allocation3 + $0x28] sm:$0xff] %vm503, 0.0
  %1609 = vst [vmem:[#allocation3 + $0x30] sm:$0x3] 0.0
  %1610 = vst.msk [vmem:[#allocation3 + $0x38] sm:$0x3] %vm1605, 0.0
  %1611 = vst [vmem:[#allocation3 + $0x40] sm:$0xff] 0.0
  %1612 = vst.msk [vmem:[#allocation3 + $0x48] sm:$0xff] %vm503, 0.0
  %1613 = vst [vmem:[#allocation3 + $0x50] sm:$0x3] 0.0
  %1614 = vst.msk [vmem:[#allocation3 + $0x58] sm:$0x3] %vm1605, 0.0
  %1615 = vst [vmem:[#allocation3 + $0x60] sm:$0xff] 0.0
  %1616 = vst.msk [vmem:[#allocation3 + $0x68] sm:$0xff] %vm503, 0.0
  %1617 = vst [vmem:[#allocation3 + $0x70] sm:$0x3] 0.0
  %1618 = vst.msk [vmem:[#allocation3 + $0x78] sm:$0x3] %vm1605, 0.0
  %1619 = vst [vmem:[#allocation3 + $0x80] sm:$0xff] 0.0
  %1620 = vst.msk [vmem:[#allocation3 + $0x88] sm:$0xff] %vm503, 0.0
  %1621 = vst [vmem:[#allocation3 + $0x90] sm:$0x3] 0.0
  %1622 = vst.msk [vmem:[#allocation3 + $0x98] sm:$0x3] %vm1605, 0.0
  %1623 = vst [vmem:[#allocation3 + $0xa0] sm:$0xff] 0.0
  %1624 = vst.msk [vmem:[#allocation3 + $0xa8] sm:$0xff] %vm503, 0.0
  %1625 = vst [vmem:[#allocation3 + $0xb0] sm:$0x3] 0.0
  %1626 = vst.msk [vmem:[#allocation3 + $0xb8] sm:$0x3] %vm1605, 0.0
  %1627 = vst [vmem:[#allocation3 + $0xc0] sm:$0xff] 0.0
  %1628 = vst.msk [vmem:[#allocation3 + $0xc8] sm:$0xff] %vm503, 0.0
  %1629 = vst [vmem:[#allocation3 + $0xd0] sm:$0x3] 0.0
  %1630 = vst.msk [vmem:[#allocation3 + $0xd8] sm:$0x3] %vm1605, 0.0
  %1631 = vst [vmem:[#allocation3 + $0xe0] sm:$0xff] 0.0
  %1632 = vst.msk [vmem:[#allocation3 + $0xe8] sm:$0xff] %vm503, 0.0
  %1633 = vst [vmem:[#allocation3 + $0xf0] sm:$0x3] 0.0
  %1634 = vst.msk [vmem:[#allocation3 + $0xf8] sm:$0x3] %vm1605, 0.0
  %1635 = vst [vmem:[#allocation3 + $0x100] sm:$0xff] 0.0
  %1636 = vst.msk [vmem:[#allocation3 + $0x108] sm:$0xff] %vm503, 0.0
  %1637 = vst [vmem:[#allocation3 + $0x110] sm:$0x3] 0.0
  %1638 = vst.msk [vmem:[#allocation3 + $0x118] sm:$0x3] %vm1605, 0.0
  %1639 = vst [vmem:[#allocation3 + $0x120] sm:$0xff] 0.0
  %1640 = vst.msk [vmem:[#allocation3 + $0x128] sm:$0xff] %vm503, 0.0
  %1641 = vst [vmem:[#allocation3 + $0x130] sm:$0x3] 0.0
  %1642 = vst.msk [vmem:[#allocation3 + $0x138] sm:$0x3] %vm1605, 0.0
  %1643 = vst [vmem:[#allocation3 + $0x140] sm:$0xff] 0.0
  %1644 = vst.msk [vmem:[#allocation3 + $0x148] sm:$0xff] %vm503, 0.0
  %1645 = vst [vmem:[#allocation3 + $0x150] sm:$0x3] 0.0
  %1646 = vst.msk [vmem:[#allocation3 + $0x158] sm:$0x3] %vm1605, 0.0
  %1647 = vst [vmem:[#allocation3 + $0x160] sm:$0xff] 0.0
  %1648 = vst.msk [vmem:[#allocation3 + $0x168] sm:$0xff] %vm503, 0.0
  %1649 = vst [vmem:[#allocation3 + $0x170] sm:$0x3] 0.0
  %1650 = vst.msk [vmem:[#allocation3 + $0x178] sm:$0x3] %vm1605, 0.0
  %1651 = vst [vmem:[#allocation3 + $0x180] sm:$0xff] 0.0
  %1652 = vst.msk [vmem:[#allocation3 + $0x188] sm:$0xff] %vm503, 0.0
  %1653 = vst [vmem:[#allocation3 + $0x190] sm:$0x3] 0.0
  %1654 = vst.msk [vmem:[#allocation3 + $0x198] sm:$0x3] %vm1605, 0.0
  %1655 = vst [vmem:[#allocation3 + $0x1a0] sm:$0xff] 0.0
  %1656 = vst.msk [vmem:[#allocation3 + $0x1a8] sm:$0xff] %vm503, 0.0
  %1657 = vst [vmem:[#allocation3 + $0x1b0] sm:$0x3] 0.0
  %1658 = vst.msk [vmem:[#allocation3 + $0x1b8] sm:$0x3] %vm1605, 0.0
  %1659 = vst [vmem:[#allocation3 + $0x1c0] sm:$0xff] 0.0
  %1660 = vst.msk [vmem:[#allocation3 + $0x1c8] sm:$0xff] %vm503, 0.0
  %1661 = vst [vmem:[#allocation3 + $0x1d0] sm:$0x3] 0.0
  %1662 = vst.msk [vmem:[#allocation3 + $0x1d8] sm:$0x3] %vm1605, 0.0
  %1663 = vst [vmem:[#allocation3 + $0x1e0] sm:$0xff] 0.0
  %1664 = vst.msk [vmem:[#allocation3 + $0x1e8] sm:$0xff] %vm503, 0.0
  %1665 = vst [vmem:[#allocation3 + $0x1f0] sm:$0x3] 0.0
  %1666 = vst.msk [vmem:[#allocation3 + $0x1f8] sm:$0x3] %vm1605, 0.0
  %1667 = vst [vmem:[#allocation3 + $0x200] sm:$0xff] 0.0
  %1668 = vst.msk [vmem:[#allocation3 + $0x208] sm:$0xff] %vm503, 0.0
  %1669 = vst [vmem:[#allocation3 + $0x210] sm:$0x3] 0.0
  %1670 = vst.msk [vmem:[#allocation3 + $0x218] sm:$0x3] %vm1605, 0.0
  %1671 = vst [vmem:[#allocation3 + $0x220] sm:$0xff] 0.0
  %1672 = vst.msk [vmem:[#allocation3 + $0x228] sm:$0xff] %vm503, 0.0
  %1673 = vst [vmem:[#allocation3 + $0x230] sm:$0x3] 0.0
  %1674 = vst.msk [vmem:[#allocation3 + $0x238] sm:$0x3] %vm1605, 0.0
  %1675 = vst [vmem:[#allocation3 + $0x240] sm:$0xff] 0.0
  %1676 = vst.msk [vmem:[#allocation3 + $0x248] sm:$0xff] %vm503, 0.0
  %1677 = vst [vmem:[#allocation3 + $0x250] sm:$0x3] 0.0
  %1678 = vst.msk [vmem:[#allocation3 + $0x258] sm:$0x3] %vm1605, 0.0
  %1679 = vst [vmem:[#allocation3 + $0x260] sm:$0xff] 0.0
  %1680 = vst.msk [vmem:[#allocation3 + $0x268] sm:$0xff] %vm503, 0.0
  %1681 = vst [vmem:[#allocation3 + $0x270] sm:$0x3] 0.0
  %1682 = vst.msk [vmem:[#allocation3 + $0x278] sm:$0x3] %vm1605, 0.0
  %1699 = vrot.lane.b32.xlu0 %v1570, 16
  %v1700 = vpop.permute.xlu0 %1699
  %1701 = vrot.lane.b32.xlu0 %v1571, 16
  %v1702 = vpop.permute.xlu0 %1701
  %1703 = vrot.lane.b32.xlu0 %v1572, 16
  %v1704 = vpop.permute.xlu0 %1703
  %1705 = vrot.lane.b32.xlu0 %v1573, 16
  %v1706 = vpop.permute.xlu0 %1705
  %1707 = vrot.lane.b32.xlu0 %v1574, 16
  %v1708 = vpop.permute.xlu0 %1707
  %1709 = vrot.lane.b32.xlu0 %v1575, 16
  %v1710 = vpop.permute.xlu0 %1709
  %1711 = vrot.lane.b32.xlu0 %v1576, 16
  %v1712 = vpop.permute.xlu0 %1711
  %1713 = vrot.lane.b32.xlu0 %v1577, 16
  %v1714 = vpop.permute.xlu0 %1713
  %1715 = vrot.lane.b32.xlu0 %v1578, 16
  %v1716 = vpop.permute.xlu0 %1715
  %1717 = vrot.lane.b32.xlu0 %v1579, 16
  %v1718 = vpop.permute.xlu0 %1717
  %1719 = vrot.lane.b32.xlu0 %v1580, 16
  %v1720 = vpop.permute.xlu0 %1719
  %1721 = vrot.lane.b32.xlu0 %v1581, 16
  %v1722 = vpop.permute.xlu0 %1721
  %1723 = vrot.lane.b32.xlu0 %v1582, 16
  %v1724 = vpop.permute.xlu0 %1723
  %1725 = vrot.lane.b32.xlu0 %v1583, 16
  %v1726 = vpop.permute.xlu0 %1725
  %1727 = vrot.lane.b32.xlu0 %v1584, 16
  %v1728 = vpop.permute.xlu0 %1727
  %1729 = vrot.lane.b32.xlu0 %v1585, 16
  %v1730 = vpop.permute.xlu0 %1729
  %vm1747 = vcmask 130048
  %v1748 = vsel %vm1747, 0.0, %v1700
  %v1749 = vsel %vm1747, 0.0, %v1702
  %v1750 = vsel %vm1747, 0.0, %v1704
  %v1751 = vsel %vm1747, 0.0, %v1706
  %v1752 = vsel %vm1747, 0.0, %v1708
  %v1753 = vsel %vm1747, 0.0, %v1710
  %v1754 = vsel %vm1747, 0.0, %v1712
  %v1755 = vsel %vm1747, 0.0, %v1714
  %v1756 = vsel %vm1747, 0.0, %v1716
  %v1757 = vsel %vm1747, 0.0, %v1718
  %v1758 = vsel %vm1747, 0.0, %v1720
  %v1759 = vsel %vm1747, 0.0, %v1722
  %v1760 = vsel %vm1747, 0.0, %v1724
  %v1761 = vsel %vm1747, 0.0, %v1726
  %v1762 = vsel %vm1747, 0.0, %v1728
  %v1763 = vsel %vm1747, 0.0, %v1730
  %v1764 = vsel %vm1747, %v1700, 0.0
  %v1765 = vsel %vm1747, %v1702, 0.0
  %v1766 = vsel %vm1747, %v1704, 0.0
  %v1767 = vsel %vm1747, %v1706, 0.0
  %v1768 = vsel %vm1747, %v1708, 0.0
  %v1769 = vsel %vm1747, %v1710, 0.0
  %v1770 = vsel %vm1747, %v1712, 0.0
  %v1771 = vsel %vm1747, %v1714, 0.0
  %v1772 = vsel %vm1747, %v1716, 0.0
  %v1773 = vsel %vm1747, %v1718, 0.0
  %v1774 = vsel %vm1747, %v1720, 0.0
  %v1775 = vsel %vm1747, %v1722, 0.0
  %v1776 = vsel %vm1747, %v1724, 0.0
  %v1777 = vsel %vm1747, %v1726, 0.0
  %v1778 = vsel %vm1747, %v1728, 0.0
  %v1779 = vsel %vm1747, %v1730, 0.0
  %v1812 = vrot.slane %v1748, 7
  %v1813 = vrot.slane %v1764, 7
  %v1814 = vrot.slane %v1749, 7
  %v1815 = vrot.slane %v1765, 7
  %v1816 = vrot.slane %v1750, 7
  %v1817 = vrot.slane %v1766, 7
  %v1818 = vrot.slane %v1751, 7
  %v1819 = vrot.slane %v1767, 7
  %v1820 = vrot.slane %v1752, 7
  %v1821 = vrot.slane %v1768, 7
  %v1822 = vrot.slane %v1753, 7
  %v1823 = vrot.slane %v1769, 7
  %v1824 = vrot.slane %v1754, 7
  %v1825 = vrot.slane %v1770, 7
  %v1826 = vrot.slane %v1755, 7
  %v1827 = vrot.slane %v1771, 7
  %v1828 = vrot.slane %v1756, 7
  %v1829 = vrot.slane %v1772, 7
  %v1830 = vrot.slane %v1757, 7
  %v1831 = vrot.slane %v1773, 7
  %v1832 = vrot.slane %v1758, 7
  %v1833 = vrot.slane %v1774, 7
  %v1834 = vrot.slane %v1759, 7
  %v1835 = vrot.slane %v1775, 7
  %v1836 = vrot.slane %v1760, 7
  %v1837 = vrot.slane %v1776, 7
  %v1838 = vrot.slane %v1761, 7
  %v1839 = vrot.slane %v1777, 7
  %v1840 = vrot.slane %v1762, 7
  %v1841 = vrot.slane %v1778, 7
  %v1842 = vrot.slane %v1763, 7
  %v1843 = vrot.slane %v1779, 7
  %s1876 = scalar_lea.vmem [#allocation3], 32
  %1877 = vst [vmem:[%s1876] sm:$0xfe] %v1812
  %vm1878 = vcmask 261121
  %1879 = vst.msk [vmem:[%s1876 + $0x8] sm:$0xfe] %vm1878, %v1813
  %1880 = vst [vmem:[%s1876 + $0x10] sm:$0x1] %v1812
  %vm1881 = vcmask 253952
  %1882 = vst.msk [vmem:[%s1876 + $0x18] sm:$0x1] %vm1881, %v1813
  %1883 = vst [vmem:[%s1876 + $0x20] sm:$0xfe] %v1814
  %1884 = vst.msk [vmem:[%s1876 + $0x28] sm:$0xfe] %vm1878, %v1815
  %1885 = vst [vmem:[%s1876 + $0x30] sm:$0x1] %v1814
  %1886 = vst.msk [vmem:[%s1876 + $0x38] sm:$0x1] %vm1881, %v1815
  %1887 = vst [vmem:[%s1876 + $0x40] sm:$0xfe] %v1816
  %1888 = vst.msk [vmem:[%s1876 + $0x48] sm:$0xfe] %vm1878, %v1817
  %1889 = vst [vmem:[%s1876 + $0x50] sm:$0x1] %v1816
  %1890 = vst.msk [vmem:[%s1876 + $0x58] sm:$0x1] %vm1881, %v1817
  %1891 = vst [vmem:[%s1876 + $0x60] sm:$0xfe] %v1818
  %1892 = vst.msk [vmem:[%s1876 + $0x68] sm:$0xfe] %vm1878, %v1819
  %1893 = vst [vmem:[%s1876 + $0x70] sm:$0x1] %v1818
  %1894 = vst.msk [vmem:[%s1876 + $0x78] sm:$0x1] %vm1881, %v1819
  %1895 = vst [vmem:[%s1876 + $0x80] sm:$0xfe] %v1820
  %1896 = vst.msk [vmem:[%s1876 + $0x88] sm:$0xfe] %vm1878, %v1821
  %1897 = vst [vmem:[%s1876 + $0x90] sm:$0x1] %v1820
  %1898 = vst.msk [vmem:[%s1876 + $0x98] sm:$0x1] %vm1881, %v1821
  %1899 = vst [vmem:[%s1876 + $0xa0] sm:$0xfe] %v1822
  %1900 = vst.msk [vmem:[%s1876 + $0xa8] sm:$0xfe] %vm1878, %v1823
  %1901 = vst [vmem:[%s1876 + $0xb0] sm:$0x1] %v1822
  %1902 = vst.msk [vmem:[%s1876 + $0xb8] sm:$0x1] %vm1881, %v1823
  %1903 = vst [vmem:[%s1876 + $0xc0] sm:$0xfe] %v1824
  %1904 = vst.msk [vmem:[%s1876 + $0xc8] sm:$0xfe] %vm1878, %v1825
  %1905 = vst [vmem:[%s1876 + $0xd0] sm:$0x1] %v1824
  %1906 = vst.msk [vmem:[%s1876 + $0xd8] sm:$0x1] %vm1881, %v1825
  %1907 = vst [vmem:[%s1876 + $0xe0] sm:$0xfe] %v1826
  %1908 = vst.msk [vmem:[%s1876 + $0xe8] sm:$0xfe] %vm1878, %v1827
  %1909 = vst [vmem:[%s1876 + $0xf0] sm:$0x1] %v1826
  %1910 = vst.msk [vmem:[%s1876 + $0xf8] sm:$0x1] %vm1881, %v1827
  %1911 = vst [vmem:[%s1876 + $0x140] sm:$0xfe] %v1828
  %1912 = vst.msk [vmem:[%s1876 + $0x148] sm:$0xfe] %vm1878, %v1829
  %1913 = vst [vmem:[%s1876 + $0x150] sm:$0x1] %v1828
  %1914 = vst.msk [vmem:[%s1876 + $0x158] sm:$0x1] %vm1881, %v1829
  %1915 = vst [vmem:[%s1876 + $0x160] sm:$0xfe] %v1830
  %1916 = vst.msk [vmem:[%s1876 + $0x168] sm:$0xfe] %vm1878, %v1831
  %1917 = vst [vmem:[%s1876 + $0x170] sm:$0x1] %v1830
  %1918 = vst.msk [vmem:[%s1876 + $0x178] sm:$0x1] %vm1881, %v1831
  %1919 = vst [vmem:[%s1876 + $0x180] sm:$0xfe] %v1832
  %1920 = vst.msk [vmem:[%s1876 + $0x188] sm:$0xfe] %vm1878, %v1833
  %1921 = vst [vmem:[%s1876 + $0x190] sm:$0x1] %v1832
  %1922 = vst.msk [vmem:[%s1876 + $0x198] sm:$0x1] %vm1881, %v1833
  %1923 = vst [vmem:[%s1876 + $0x1a0] sm:$0xfe] %v1834
  %1924 = vst.msk [vmem:[%s1876 + $0x1a8] sm:$0xfe] %vm1878, %v1835
  %1925 = vst [vmem:[%s1876 + $0x1b0] sm:$0x1] %v1834
  %1926 = vst.msk [vmem:[%s1876 + $0x1b8] sm:$0x1] %vm1881, %v1835
  %1927 = vst [vmem:[%s1876 + $0x1c0] sm:$0xfe] %v1836
  %1928 = vst.msk [vmem:[%s1876 + $0x1c8] sm:$0xfe] %vm1878, %v1837
  %1929 = vst [vmem:[%s1876 + $0x1d0] sm:$0x1] %v1836
  %1930 = vst.msk [vmem:[%s1876 + $0x1d8] sm:$0x1] %vm1881, %v1837
  %1931 = vst [vmem:[%s1876 + $0x1e0] sm:$0xfe] %v1838
  %1932 = vst.msk [vmem:[%s1876 + $0x1e8] sm:$0xfe] %vm1878, %v1839
  %1933 = vst [vmem:[%s1876 + $0x1f0] sm:$0x1] %v1838
  %1934 = vst.msk [vmem:[%s1876 + $0x1f8] sm:$0x1] %vm1881, %v1839
  %1935 = vst [vmem:[%s1876 + $0x200] sm:$0xfe] %v1840
  %1936 = vst.msk [vmem:[%s1876 + $0x208] sm:$0xfe] %vm1878, %v1841
  %1937 = vst [vmem:[%s1876 + $0x210] sm:$0x1] %v1840
  %1938 = vst.msk [vmem:[%s1876 + $0x218] sm:$0x1] %vm1881, %v1841
  %1939 = vst [vmem:[%s1876 + $0x220] sm:$0xfe] %v1842
  %1940 = vst.msk [vmem:[%s1876 + $0x228] sm:$0xfe] %vm1878, %v1843
  %1941 = vst [vmem:[%s1876 + $0x230] sm:$0x1] %v1842
  %1942 = vst.msk [vmem:[%s1876 + $0x238] sm:$0x1] %vm1881, %v1843
  %v1943 = vld [vmem:[#allocation3] sm:$0xff]
  %v1944 = vld [vmem:[#allocation3 + $0x8] sm:$0xff]
  %v1945 = vld [vmem:[#allocation3 + $0x20] sm:$0xff]
  %v1946 = vld [vmem:[#allocation3 + $0x28] sm:$0xff]
  %v1947 = vld [vmem:[#allocation3 + $0x40] sm:$0xff]
  %v1948 = vld [vmem:[#allocation3 + $0x48] sm:$0xff]
  %v1949 = vld [vmem:[#allocation3 + $0x60] sm:$0xff]
  %v1950 = vld [vmem:[#allocation3 + $0x68] sm:$0xff]
  %v1951 = vld [vmem:[#allocation3 + $0x80] sm:$0xff]
  %v1952 = vld [vmem:[#allocation3 + $0x88] sm:$0xff]
  %v1953 = vld [vmem:[#allocation3 + $0xa0] sm:$0xff]
  %v1954 = vld [vmem:[#allocation3 + $0xa8] sm:$0xff]
  %v1955 = vld [vmem:[#allocation3 + $0xc0] sm:$0xff]
  %v1956 = vld [vmem:[#allocation3 + $0xc8] sm:$0xff]
  %v1957 = vld [vmem:[#allocation3 + $0xe0] sm:$0xff]
  %v1958 = vld [vmem:[#allocation3 + $0xe8] sm:$0xff]
  %v1959 = vld [vmem:[#allocation3 + $0x140] sm:$0xff]
  %v1960 = vld [vmem:[#allocation3 + $0x148] sm:$0xff]
  %v1961 = vld [vmem:[#allocation3 + $0x160] sm:$0xff]
  %v1962 = vld [vmem:[#allocation3 + $0x168] sm:$0xff]
  %v1963 = vld [vmem:[#allocation3 + $0x180] sm:$0xff]
  %v1964 = vld [vmem:[#allocation3 + $0x188] sm:$0xff]
  %v1965 = vld [vmem:[#allocation3 + $0x1a0] sm:$0xff]
  %v1966 = vld [vmem:[#allocation3 + $0x1a8] sm:$0xff]
  %v1967 = vld [vmem:[#allocation3 + $0x1c0] sm:$0xff]
  %v1968 = vld [vmem:[#allocation3 + $0x1c8] sm:$0xff]
  %v1969 = vld [vmem:[#allocation3 + $0x1e0] sm:$0xff]
  %v1970 = vld [vmem:[#allocation3 + $0x1e8] sm:$0xff]
  %v1971 = vld [vmem:[#allocation3 + $0x200] sm:$0xff]
  %v1972 = vld [vmem:[#allocation3 + $0x208] sm:$0xff]
  %v1973 = vld [vmem:[#allocation3 + $0x220] sm:$0xff]
  %v1974 = vld [vmem:[#allocation3 + $0x228] sm:$0xff]
  %1975 = vst [vmem:[#allocation5] sm:$0xff] %v1943
  %1976 = vst.msk [vmem:[#allocation5 + $0x8] sm:$0xff] %vm503, %v1944
  %1977 = vst [vmem:[#allocation5 + $0x60] sm:$0xff] %v1945
  %1978 = vst.msk [vmem:[#allocation5 + $0x68] sm:$0xff] %vm503, %v1946
  %1979 = vst [vmem:[#allocation5 + $0xc0] sm:$0xff] %v1947
  %1980 = vst.msk [vmem:[#allocation5 + $0xc8] sm:$0xff] %vm503, %v1948
  %1981 = vst [vmem:[#allocation5 + $0x120] sm:$0xff] %v1949
  %1982 = vst.msk [vmem:[#allocation5 + $0x128] sm:$0xff] %vm503, %v1950
  %1983 = vst [vmem:[#allocation5 + $0x180] sm:$0xff] %v1951
  %1984 = vst.msk [vmem:[#allocation5 + $0x188] sm:$0xff] %vm503, %v1952
  %1985 = vst [vmem:[#allocation5 + $0x1e0] sm:$0xff] %v1953
  %1986 = vst.msk [vmem:[#allocation5 + $0x1e8] sm:$0xff] %vm503, %v1954
  %1987 = vst [vmem:[#allocation5 + $0x240] sm:$0xff] %v1955
  %1988 = vst.msk [vmem:[#allocation5 + $0x248] sm:$0xff] %vm503, %v1956
  %1989 = vst [vmem:[#allocation5 + $0x2a0] sm:$0xff] %v1957
  %1990 = vst.msk [vmem:[#allocation5 + $0x2a8] sm:$0xff] %vm503, %v1958
  %1991 = vst [vmem:[#allocation5 + $0x300] sm:$0xff] %v1959
  %1992 = vst.msk [vmem:[#allocation5 + $0x308] sm:$0xff] %vm503, %v1960
  %1993 = vst [vmem:[#allocation5 + $0x360] sm:$0xff] %v1961
  %1994 = vst.msk [vmem:[#allocation5 + $0x368] sm:$0xff] %vm503, %v1962
  %1995 = vst [vmem:[#allocation5 + $0x3c0] sm:$0xff] %v1963
  %1996 = vst.msk [vmem:[#allocation5 + $0x3c8] sm:$0xff] %vm503, %v1964
  %1997 = vst [vmem:[#allocation5 + $0x420] sm:$0xff] %v1965
  %1998 = vst.msk [vmem:[#allocation5 + $0x428] sm:$0xff] %vm503, %v1966
  %1999 = vst [vmem:[#allocation5 + $0x480] sm:$0xff] %v1967
  %2000 = vst.msk [vmem:[#allocation5 + $0x488] sm:$0xff] %vm503, %v1968
  %2001 = vst [vmem:[#allocation5 + $0x4e0] sm:$0xff] %v1969
  %2002 = vst.msk [vmem:[#allocation5 + $0x4e8] sm:$0xff] %vm503, %v1970
  %2003 = vst [vmem:[#allocation5 + $0x540] sm:$0xff] %v1971
  %2004 = vst.msk [vmem:[#allocation5 + $0x548] sm:$0xff] %vm503, %v1972
  %2005 = vst [vmem:[#allocation5 + $0x5a0] sm:$0xff] %v1973
  %2006 = vst.msk [vmem:[#allocation5 + $0x5a8] sm:$0xff] %vm503, %v1974
  %v2007 = vld [vmem:[#allocation3] sm:$0xfe]
  %v2008 = vld [vmem:[#allocation3 + $0x8] sm:$0xfe]
  %v2009 = vld [vmem:[#allocation3 + $0x10] sm:$0x1]
  %v2010 = vld [vmem:[#allocation3 + $0x18] sm:$0x1]
  %v2011 = vld [vmem:[#allocation3 + $0x20] sm:$0xfe]
  %v2012 = vld [vmem:[#allocation3 + $0x28] sm:$0xfe]
  %v2013 = vld [vmem:[#allocation3 + $0x30] sm:$0x1]
  %v2014 = vld [vmem:[#allocation3 + $0x38] sm:$0x1]
  %v2015 = vld [vmem:[#allocation3 + $0x40] sm:$0xfe]
  %v2016 = vld [vmem:[#allocation3 + $0x48] sm:$0xfe]
  %v2017 = vld [vmem:[#allocation3 + $0x50] sm:$0x1]
  %v2018 = vld [vmem:[#allocation3 + $0x58] sm:$0x1]
  %v2019 = vld [vmem:[#allocation3 + $0x60] sm:$0xfe]
  %v2020 = vld [vmem:[#allocation3 + $0x68] sm:$0xfe]
  %v2021 = vld [vmem:[#allocation3 + $0x70] sm:$0x1]
  %v2022 = vld [vmem:[#allocation3 + $0x78] sm:$0x1]
  %v2023 = vld [vmem:[#allocation3 + $0x80] sm:$0xfe]
  %v2024 = vld [vmem:[#allocation3 + $0x88] sm:$0xfe]
  %v2025 = vld [vmem:[#allocation3 + $0x90] sm:$0x1]
  %v2026 = vld [vmem:[#allocation3 + $0x98] sm:$0x1]
  %v2027 = vld [vmem:[#allocation3 + $0xa0] sm:$0xfe]
  %v2028 = vld [vmem:[#allocation3 + $0xa8] sm:$0xfe]
  %v2029 = vld [vmem:[#allocation3 + $0xb0] sm:$0x1]
  %v2030 = vld [vmem:[#allocation3 + $0xb8] sm:$0x1]
  %v2031 = vld [vmem:[#allocation3 + $0xc0] sm:$0xfe]
  %v2032 = vld [vmem:[#allocation3 + $0xc8] sm:$0xfe]
  %v2033 = vld [vmem:[#allocation3 + $0xd0] sm:$0x1]
  %v2034 = vld [vmem:[#allocation3 + $0xd8] sm:$0x1]
  %v2035 = vld [vmem:[#allocation3 + $0xe0] sm:$0xfe]
  %v2036 = vld [vmem:[#allocation3 + $0xe8] sm:$0xfe]
  %v2037 = vld [vmem:[#allocation3 + $0xf0] sm:$0x1]
  %v2038 = vld [vmem:[#allocation3 + $0xf8] sm:$0x1]
  %v2039 = vld [vmem:[#allocation3 + $0x140] sm:$0xfe]
  %v2040 = vld [vmem:[#allocation3 + $0x148] sm:$0xfe]
  %v2041 = vld [vmem:[#allocation3 + $0x150] sm:$0x1]
  %v2042 = vld [vmem:[#allocation3 + $0x158] sm:$0x1]
  %v2043 = vld [vmem:[#allocation3 + $0x160] sm:$0xfe]
  %v2044 = vld [vmem:[#allocation3 + $0x168] sm:$0xfe]
  %v2045 = vld [vmem:[#allocation3 + $0x170] sm:$0x1]
  %v2046 = vld [vmem:[#allocation3 + $0x178] sm:$0x1]
  %v2047 = vld [vmem:[#allocation3 + $0x180] sm:$0xfe]
  %v2048 = vld [vmem:[#allocation3 + $0x188] sm:$0xfe]
  %v2049 = vld [vmem:[#allocation3 + $0x190] sm:$0x1]
  %v2050 = vld [vmem:[#allocation3 + $0x198] sm:$0x1]
  %v2051 = vld [vmem:[#allocation3 + $0x1a0] sm:$0xfe]
  %v2052 = vld [vmem:[#allocation3 + $0x1a8] sm:$0xfe]
  %v2053 = vld [vmem:[#allocation3 + $0x1b0] sm:$0x1]
  %v2054 = vld [vmem:[#allocation3 + $0x1b8] sm:$0x1]
  %v2055 = vld [vmem:[#allocation3 + $0x1c0] sm:$0xfe]
  %v2056 = vld [vmem:[#allocation3 + $0x1c8] sm:$0xfe]
  %v2057 = vld [vmem:[#allocation3 + $0x1d0] sm:$0x1]
  %v2058 = vld [vmem:[#allocation3 + $0x1d8] sm:$0x1]
  %v2059 = vld [vmem:[#allocation3 + $0x1e0] sm:$0xfe]
  %v2060 = vld [vmem:[#allocation3 + $0x1e8] sm:$0xfe]
  %v2061 = vld [vmem:[#allocation3 + $0x1f0] sm:$0x1]
  %v2062 = vld [vmem:[#allocation3 + $0x1f8] sm:$0x1]
  %v2063 = vld [vmem:[#allocation3 + $0x200] sm:$0xfe]
  %v2064 = vld [vmem:[#allocation3 + $0x208] sm:$0xfe]
  %v2065 = vld [vmem:[#allocation3 + $0x210] sm:$0x1]
  %v2066 = vld [vmem:[#allocation3 + $0x218] sm:$0x1]
  %v2067 = vld [vmem:[#allocation3 + $0x220] sm:$0xfe]
  %v2068 = vld [vmem:[#allocation3 + $0x228] sm:$0xfe]
  %v2069 = vld [vmem:[#allocation3 + $0x230] sm:$0x1]
  %v2070 = vld [vmem:[#allocation3 + $0x238] sm:$0x1]
  %vm2135 = vcmask 1046528
  %v2136 = vrot.slane %v2007, 1
  %v2137 = vrot.slane %v2009, 1
  %v2138 = vsel %vm2135, %v2136, %v2137
  %v2139 = vrot.slane %v2008, 1
  %v2140 = vrot.slane %v2010, 1
  %v2141 = vsel %vm2135, %v2139, %v2140
  %v2142 = vrot.slane %v2011, 1
  %v2143 = vrot.slane %v2013, 1
  %v2144 = vsel %vm2135, %v2142, %v2143
  %v2145 = vrot.slane %v2012, 1
  %v2146 = vrot.slane %v2014, 1
  %v2147 = vsel %vm2135, %v2145, %v2146
  %v2148 = vrot.slane %v2015, 1
  %v2149 = vrot.slane %v2017, 1
  %v2150 = vsel %vm2135, %v2148, %v2149
  %v2151 = vrot.slane %v2016, 1
  %v2152 = vrot.slane %v2018, 1
  %v2153 = vsel %vm2135, %v2151, %v2152
  %v2154 = vrot.slane %v2019, 1
  %v2155 = vrot.slane %v2021, 1
  %v2156 = vsel %vm2135, %v2154, %v2155
  %v2157 = vrot.slane %v2020, 1
  %v2158 = vrot.slane %v2022, 1
  %v2159 = vsel %vm2135, %v2157, %v2158
  %v2160 = vrot.slane %v2023, 1
  %v2161 = vrot.slane %v2025, 1
  %v2162 = vsel %vm2135, %v2160, %v2161
  %v2163 = vrot.slane %v2024, 1
  %v2164 = vrot.slane %v2026, 1
  %v2165 = vsel %vm2135, %v2163, %v2164
  %v2166 = vrot.slane %v2027, 1
  %v2167 = vrot.slane %v2029, 1
  %v2168 = vsel %vm2135, %v2166, %v2167
  %v2169 = vrot.slane %v2028, 1
  %v2170 = vrot.slane %v2030, 1
  %v2171 = vsel %vm2135, %v2169, %v2170
  %v2172 = vrot.slane %v2031, 1
  %v2173 = vrot.slane %v2033, 1
  %v2174 = vsel %vm2135, %v2172, %v2173
  %v2175 = vrot.slane %v2032, 1
  %v2176 = vrot.slane %v2034, 1
  %v2177 = vsel %vm2135, %v2175, %v2176
  %v2178 = vrot.slane %v2035, 1
  %v2179 = vrot.slane %v2037, 1
  %v2180 = vsel %vm2135, %v2178, %v2179
  %v2181 = vrot.slane %v2036, 1
  %v2182 = vrot.slane %v2038, 1
  %v2183 = vsel %vm2135, %v2181, %v2182
  %v2184 = vrot.slane %v2039, 1
  %v2185 = vrot.slane %v2041, 1
  %v2186 = vsel %vm2135, %v2184, %v2185
  %v2187 = vrot.slane %v2040, 1
  %v2188 = vrot.slane %v2042, 1
  %v2189 = vsel %vm2135, %v2187, %v2188
  %v2190 = vrot.slane %v2043, 1
  %v2191 = vrot.slane %v2045, 1
  %v2192 = vsel %vm2135, %v2190, %v2191
  %v2193 = vrot.slane %v2044, 1
  %v2194 = vrot.slane %v2046, 1
  %v2195 = vsel %vm2135, %v2193, %v2194
  %v2196 = vrot.slane %v2047, 1
  %v2197 = vrot.slane %v2049, 1
  %v2198 = vsel %vm2135, %v2196, %v2197
  %v2199 = vrot.slane %v2048, 1
  %v2200 = vrot.slane %v2050, 1
  %v2201 = vsel %vm2135, %v2199, %v2200
  %v2202 = vrot.slane %v2051, 1
  %v2203 = vrot.slane %v2053, 1
  %v2204 = vsel %vm2135, %v2202, %v2203
  %v2205 = vrot.slane %v2052, 1
  %v2206 = vrot.slane %v2054, 1
  %v2207 = vsel %vm2135, %v2205, %v2206
  %v2208 = vrot.slane %v2055, 1
  %v2209 = vrot.slane %v2057, 1
  %v2210 = vsel %vm2135, %v2208, %v2209
  %v2211 = vrot.slane %v2056, 1
  %v2212 = vrot.slane %v2058, 1
  %v2213 = vsel %vm2135, %v2211, %v2212
  %v2214 = vrot.slane %v2059, 1
  %v2215 = vrot.slane %v2061, 1
  %v2216 = vsel %vm2135, %v2214, %v2215
  %v2217 = vrot.slane %v2060, 1
  %v2218 = vrot.slane %v2062, 1
  %v2219 = vsel %vm2135, %v2217, %v2218
  %v2220 = vrot.slane %v2063, 1
  %v2221 = vrot.slane %v2065, 1
  %v2222 = vsel %vm2135, %v2220, %v2221
  %v2223 = vrot.slane %v2064, 1
  %v2224 = vrot.slane %v2066, 1
  %v2225 = vsel %vm2135, %v2223, %v2224
  %v2226 = vrot.slane %v2067, 1
  %v2227 = vrot.slane %v2069, 1
  %v2228 = vsel %vm2135, %v2226, %v2227
  %v2229 = vrot.slane %v2068, 1
  %v2230 = vrot.slane %v2070, 1
  %v2231 = vsel %vm2135, %v2229, %v2230
  %2232 = vrot.lane.b32.xlu0 %v2138, 32
  %v2233 = vpop.permute.xlu0 %2232
  %2234 = vrot.lane.b32.xlu0 %v2141, 32
  %v2235 = vpop.permute.xlu0 %2234
  %2236 = vrot.lane.b32.xlu0 %v2144, 32
  %v2237 = vpop.permute.xlu0 %2236
  %2238 = vrot.lane.b32.xlu0 %v2147, 32
  %v2239 = vpop.permute.xlu0 %2238
  %2240 = vrot.lane.b32.xlu0 %v2150, 32
  %v2241 = vpop.permute.xlu0 %2240
  %2242 = vrot.lane.b32.xlu0 %v2153, 32
  %v2243 = vpop.permute.xlu0 %2242
  %2244 = vrot.lane.b32.xlu0 %v2156, 32
  %v2245 = vpop.permute.xlu0 %2244
  %2246 = vrot.lane.b32.xlu0 %v2159, 32
  %v2247 = vpop.permute.xlu0 %2246
  %2248 = vrot.lane.b32.xlu0 %v2162, 32
  %v2249 = vpop.permute.xlu0 %2248
  %2250 = vrot.lane.b32.xlu0 %v2165, 32
  %v2251 = vpop.permute.xlu0 %2250
  %2252 = vrot.lane.b32.xlu0 %v2168, 32
  %v2253 = vpop.permute.xlu0 %2252
  %2254 = vrot.lane.b32.xlu0 %v2171, 32
  %v2255 = vpop.permute.xlu0 %2254
  %2256 = vrot.lane.b32.xlu0 %v2174, 32
  %v2257 = vpop.permute.xlu0 %2256
  %2258 = vrot.lane.b32.xlu0 %v2177, 32
  %v2259 = vpop.permute.xlu0 %2258
  %2260 = vrot.lane.b32.xlu0 %v2180, 32
  %v2261 = vpop.permute.xlu0 %2260
  %2262 = vrot.lane.b32.xlu0 %v2183, 32
  %v2263 = vpop.permute.xlu0 %2262
  %2264 = vrot.lane.b32.xlu0 %v2186, 32
  %v2265 = vpop.permute.xlu0 %2264
  %2266 = vrot.lane.b32.xlu0 %v2189, 32
  %v2267 = vpop.permute.xlu0 %2266
  %2268 = vrot.lane.b32.xlu0 %v2192, 32
  %v2269 = vpop.permute.xlu0 %2268
  %2270 = vrot.lane.b32.xlu0 %v2195, 32
  %v2271 = vpop.permute.xlu0 %2270
  %2272 = vrot.lane.b32.xlu0 %v2198, 32
  %v2273 = vpop.permute.xlu0 %2272
  %2274 = vrot.lane.b32.xlu0 %v2201, 32
  %v2275 = vpop.permute.xlu0 %2274
  %2276 = vrot.lane.b32.xlu0 %v2204, 32
  %v2277 = vpop.permute.xlu0 %2276
  %2278 = vrot.lane.b32.xlu0 %v2207, 32
  %v2279 = vpop.permute.xlu0 %2278
  %2280 = vrot.lane.b32.xlu0 %v2210, 32
  %v2281 = vpop.permute.xlu0 %2280
  %2282 = vrot.lane.b32.xlu0 %v2213, 32
  %v2283 = vpop.permute.xlu0 %2282
  %2284 = vrot.lane.b32.xlu0 %v2216, 32
  %v2285 = vpop.permute.xlu0 %2284
  %2286 = vrot.lane.b32.xlu0 %v2219, 32
  %v2287 = vpop.permute.xlu0 %2286
  %2288 = vrot.lane.b32.xlu0 %v2222, 32
  %v2289 = vpop.permute.xlu0 %2288
  %2290 = vrot.lane.b32.xlu0 %v2225, 32
  %v2291 = vpop.permute.xlu0 %2290
  %2292 = vrot.lane.b32.xlu0 %v2228, 32
  %v2293 = vpop.permute.xlu0 %2292
  %2294 = vrot.lane.b32.xlu0 %v2231, 32
  %v2295 = vpop.permute.xlu0 %2294
  %v2296 = vsel %vm503, %v2233, %v2235
  %v2297 = vsel %vm503, %v2237, %v2239
  %v2298 = vsel %vm503, %v2241, %v2243
  %v2299 = vsel %vm503, %v2245, %v2247
  %v2300 = vsel %vm503, %v2249, %v2251
  %v2301 = vsel %vm503, %v2253, %v2255
  %v2302 = vsel %vm503, %v2257, %v2259
  %v2303 = vsel %vm503, %v2261, %v2263
  %v2304 = vsel %vm503, %v2265, %v2267
  %v2305 = vsel %vm503, %v2269, %v2271
  %v2306 = vsel %vm503, %v2273, %v2275
  %v2307 = vsel %vm503, %v2277, %v2279
  %v2308 = vsel %vm503, %v2281, %v2283
  %v2309 = vsel %vm503, %v2285, %v2287
  %v2310 = vsel %vm503, %v2289, %v2291
  %v2311 = vsel %vm503, %v2293, %v2295
  %vm2344 = vcmask 1047808
  %2345 = vst.msk [vmem:[#allocation5 + $0x8] sm:$0xff] %vm2344, %v2233
  %vm2346 = vcmask 523264
  %2347 = vst.msk [vmem:[#allocation5 + $0x10] sm:$0xff] %vm2346, %v2296
  %2348 = vst.msk [vmem:[#allocation5 + $0x68] sm:$0xff] %vm2344, %v2237
  %2349 = vst.msk [vmem:[#allocation5 + $0x70] sm:$0xff] %vm2346, %v2297
  %2350 = vst.msk [vmem:[#allocation5 + $0xc8] sm:$0xff] %vm2344, %v2241
  %2351 = vst.msk [vmem:[#allocation5 + $0xd0] sm:$0xff] %vm2346, %v2298
  %2352 = vst.msk [vmem:[#allocation5 + $0x128] sm:$0xff] %vm2344, %v2245
  %2353 = vst.msk [vmem:[#allocation5 + $0x130] sm:$0xff] %vm2346, %v2299
  %2354 = vst.msk [vmem:[#allocation5 + $0x188] sm:$0xff] %vm2344, %v2249
  %2355 = vst.msk [vmem:[#allocation5 + $0x190] sm:$0xff] %vm2346, %v2300
  %2356 = vst.msk [vmem:[#allocation5 + $0x1e8] sm:$0xff] %vm2344, %v2253
  %2357 = vst.msk [vmem:[#allocation5 + $0x1f0] sm:$0xff] %vm2346, %v2301
  %2358 = vst.msk [vmem:[#allocation5 + $0x248] sm:$0xff] %vm2344, %v2257
  %2359 = vst.msk [vmem:[#allocation5 + $0x250] sm:$0xff] %vm2346, %v2302
  %2360 = vst.msk [vmem:[#allocation5 + $0x2a8] sm:$0xff] %vm2344, %v2261
  %2361 = vst.msk [vmem:[#allocation5 + $0x2b0] sm:$0xff] %vm2346, %v2303
  %2362 = vst.msk [vmem:[#allocation5 + $0x308] sm:$0xff] %vm2344, %v2265
  %2363 = vst.msk [vmem:[#allocation5 + $0x310] sm:$0xff] %vm2346, %v2304
  %2364 = vst.msk [vmem:[#allocation5 + $0x368] sm:$0xff] %vm2344, %v2269
  %2365 = vst.msk [vmem:[#allocation5 + $0x370] sm:$0xff] %vm2346, %v2305
  %2366 = vst.msk [vmem:[#allocation5 + $0x3c8] sm:$0xff] %vm2344, %v2273
  %2367 = vst.msk [vmem:[#allocation5 + $0x3d0] sm:$0xff] %vm2346, %v2306
  %2368 = vst.msk [vmem:[#allocation5 + $0x428] sm:$0xff] %vm2344, %v2277
  %2369 = vst.msk [vmem:[#allocation5 + $0x430] sm:$0xff] %vm2346, %v2307
  %2370 = vst.msk [vmem:[#allocation5 + $0x488] sm:$0xff] %vm2344, %v2281
  %2371 = vst.msk [vmem:[#allocation5 + $0x490] sm:$0xff] %vm2346, %v2308
  %2372 = vst.msk [vmem:[#allocation5 + $0x4e8] sm:$0xff] %vm2344, %v2285
  %2373 = vst.msk [vmem:[#allocation5 + $0x4f0] sm:$0xff] %vm2346, %v2309
  %2374 = vst.msk [vmem:[#allocation5 + $0x548] sm:$0xff] %vm2344, %v2289
  %2375 = vst.msk [vmem:[#allocation5 + $0x550] sm:$0xff] %vm2346, %v2310
  %2376 = vst.msk [vmem:[#allocation5 + $0x5a8] sm:$0xff] %vm2344, %v2293
  %2377 = vst.msk [vmem:[#allocation5 + $0x5b0] sm:$0xff] %vm2346, %v2311
  %v2378 = vld [vmem:[#allocation3] sm:$0xfc]
  %v2379 = vld [vmem:[#allocation3 + $0x8] sm:$0xfc]
  %v2380 = vld [vmem:[#allocation3 + $0x10] sm:$0x3]
  %v2381 = vld [vmem:[#allocation3 + $0x18] sm:$0x3]
  %v2382 = vld [vmem:[#allocation3 + $0x20] sm:$0xfc]
  %v2383 = vld [vmem:[#allocation3 + $0x28] sm:$0xfc]
  %v2384 = vld [vmem:[#allocation3 + $0x30] sm:$0x3]
  %v2385 = vld [vmem:[#allocation3 + $0x38] sm:$0x3]
  %v2386 = vld [vmem:[#allocation3 + $0x40] sm:$0xfc]
  %v2387 = vld [vmem:[#allocation3 + $0x48] sm:$0xfc]
  %v2388 = vld [vmem:[#allocation3 + $0x50] sm:$0x3]
  %v2389 = vld [vmem:[#allocation3 + $0x58] sm:$0x3]
  %v2390 = vld [vmem:[#allocation3 + $0x60] sm:$0xfc]
  %v2391 = vld [vmem:[#allocation3 + $0x68] sm:$0xfc]
  %v2392 = vld [vmem:[#allocation3 + $0x70] sm:$0x3]
  %v2393 = vld [vmem:[#allocation3 + $0x78] sm:$0x3]
  %v2394 = vld [vmem:[#allocation3 + $0x80] sm:$0xfc]
  %v2395 = vld [vmem:[#allocation3 + $0x88] sm:$0xfc]
  %v2396 = vld [vmem:[#allocation3 + $0x90] sm:$0x3]
  %v2397 = vld [vmem:[#allocation3 + $0x98] sm:$0x3]
  %v2398 = vld [vmem:[#allocation3 + $0xa0] sm:$0xfc]
  %v2399 = vld [vmem:[#allocation3 + $0xa8] sm:$0xfc]
  %v2400 = vld [vmem:[#allocation3 + $0xb0] sm:$0x3]
  %v2401 = vld [vmem:[#allocation3 + $0xb8] sm:$0x3]
  %v2402 = vld [vmem:[#allocation3 + $0xc0] sm:$0xfc]
  %v2403 = vld [vmem:[#allocation3 + $0xc8] sm:$0xfc]
  %v2404 = vld [vmem:[#allocation3 + $0xd0] sm:$0x3]
  %v2405 = vld [vmem:[#allocation3 + $0xd8] sm:$0x3]
  %v2406 = vld [vmem:[#allocation3 + $0xe0] sm:$0xfc]
  %v2407 = vld [vmem:[#allocation3 + $0xe8] sm:$0xfc]
  %v2408 = vld [vmem:[#allocation3 + $0xf0] sm:$0x3]
  %v2409 = vld [vmem:[#allocation3 + $0xf8] sm:$0x3]
  %v2410 = vld [vmem:[#allocation3 + $0x140] sm:$0xfc]
  %v2411 = vld [vmem:[#allocation3 + $0x148] sm:$0xfc]
  %v2412 = vld [vmem:[#allocation3 + $0x150] sm:$0x3]
  %v2413 = vld [vmem:[#allocation3 + $0x158] sm:$0x3]
  %v2414 = vld [vmem:[#allocation3 + $0x160] sm:$0xfc]
  %v2415 = vld [vmem:[#allocation3 + $0x168] sm:$0xfc]
  %v2416 = vld [vmem:[#allocation3 + $0x170] sm:$0x3]
  %v2417 = vld [vmem:[#allocation3 + $0x178] sm:$0x3]
  %v2418 = vld [vmem:[#allocation3 + $0x180] sm:$0xfc]
  %v2419 = vld [vmem:[#allocation3 + $0x188] sm:$0xfc]
  %v2420 = vld [vmem:[#allocation3 + $0x190] sm:$0x3]
  %v2421 = vld [vmem:[#allocation3 + $0x198] sm:$0x3]
  %v2422 = vld [vmem:[#allocation3 + $0x1a0] sm:$0xfc]
  %v2423 = vld [vmem:[#allocation3 + $0x1a8] sm:$0xfc]
  %v2424 = vld [vmem:[#allocation3 + $0x1b0] sm:$0x3]
  %v2425 = vld [vmem:[#allocation3 + $0x1b8] sm:$0x3]
  %v2426 = vld [vmem:[#allocation3 + $0x1c0] sm:$0xfc]
  %v2427 = vld [vmem:[#allocation3 + $0x1c8] sm:$0xfc]
  %v2428 = vld [vmem:[#allocation3 + $0x1d0] sm:$0x3]
  %v2429 = vld [vmem:[#allocation3 + $0x1d8] sm:$0x3]
  %v2430 = vld [vmem:[#allocation3 + $0x1e0] sm:$0xfc]
  %v2431 = vld [vmem:[#allocation3 + $0x1e8] sm:$0xfc]
  %v2432 = vld [vmem:[#allocation3 + $0x1f0] sm:$0x3]
  %v2433 = vld [vmem:[#allocation3 + $0x1f8] sm:$0x3]
  %v2434 = vld [vmem:[#allocation3 + $0x200] sm:$0xfc]
  %v2435 = vld [vmem:[#allocation3 + $0x208] sm:$0xfc]
  %v2436 = vld [vmem:[#allocation3 + $0x210] sm:$0x3]
  %v2437 = vld [vmem:[#allocation3 + $0x218] sm:$0x3]
  %v2438 = vld [vmem:[#allocation3 + $0x220] sm:$0xfc]
  %v2439 = vld [vmem:[#allocation3 + $0x228] sm:$0xfc]
  %v2440 = vld [vmem:[#allocation3 + $0x230] sm:$0x3]
  %v2441 = vld [vmem:[#allocation3 + $0x238] sm:$0x3]
  %vm2506 = vcmask 1045504
  %v2507 = vrot.slane %v2378, 2
  %v2508 = vrot.slane %v2380, 2
  %v2509 = vsel %vm2506, %v2507, %v2508
  %v2510 = vrot.slane %v2379, 2
  %v2511 = vrot.slane %v2381, 2
  %v2512 = vsel %vm2506, %v2510, %v2511
  %v2513 = vrot.slane %v2382, 2
  %v2514 = vrot.slane %v2384, 2
  %v2515 = vsel %vm2506, %v2513, %v2514
  %v2516 = vrot.slane %v2383, 2
  %v2517 = vrot.slane %v2385, 2
  %v2518 = vsel %vm2506, %v2516, %v2517
  %v2519 = vrot.slane %v2386, 2
  %v2520 = vrot.slane %v2388, 2
  %v2521 = vsel %vm2506, %v2519, %v2520
  %v2522 = vrot.slane %v2387, 2
  %v2523 = vrot.slane %v2389, 2
  %v2524 = vsel %vm2506, %v2522, %v2523
  %v2525 = vrot.slane %v2390, 2
  %v2526 = vrot.slane %v2392, 2
  %v2527 = vsel %vm2506, %v2525, %v2526
  %v2528 = vrot.slane %v2391, 2
  %v2529 = vrot.slane %v2393, 2
  %v2530 = vsel %vm2506, %v2528, %v2529
  %v2531 = vrot.slane %v2394, 2
  %v2532 = vrot.slane %v2396, 2
  %v2533 = vsel %vm2506, %v2531, %v2532
  %v2534 = vrot.slane %v2395, 2
  %v2535 = vrot.slane %v2397, 2
  %v2536 = vsel %vm2506, %v2534, %v2535
  %v2537 = vrot.slane %v2398, 2
  %v2538 = vrot.slane %v2400, 2
  %v2539 = vsel %vm2506, %v2537, %v2538
  %v2540 = vrot.slane %v2399, 2
  %v2541 = vrot.slane %v2401, 2
  %v2542 = vsel %vm2506, %v2540, %v2541
  %v2543 = vrot.slane %v2402, 2
  %v2544 = vrot.slane %v2404, 2
  %v2545 = vsel %vm2506, %v2543, %v2544
  %v2546 = vrot.slane %v2403, 2
  %v2547 = vrot.slane %v2405, 2
  %v2548 = vsel %vm2506, %v2546, %v2547
  %v2549 = vrot.slane %v2406, 2
  %v2550 = vrot.slane %v2408, 2
  %v2551 = vsel %vm2506, %v2549, %v2550
  %v2552 = vrot.slane %v2407, 2
  %v2553 = vrot.slane %v2409, 2
  %v2554 = vsel %vm2506, %v2552, %v2553
  %v2555 = vrot.slane %v2410, 2
  %v2556 = vrot.slane %v2412, 2
  %v2557 = vsel %vm2506, %v2555, %v2556
  %v2558 = vrot.slane %v2411, 2
  %v2559 = vrot.slane %v2413, 2
  %v2560 = vsel %vm2506, %v2558, %v2559
  %v2561 = vrot.slane %v2414, 2
  %v2562 = vrot.slane %v2416, 2
  %v2563 = vsel %vm2506, %v2561, %v2562
  %v2564 = vrot.slane %v2415, 2
  %v2565 = vrot.slane %v2417, 2
  %v2566 = vsel %vm2506, %v2564, %v2565
  %v2567 = vrot.slane %v2418, 2
  %v2568 = vrot.slane %v2420, 2
  %v2569 = vsel %vm2506, %v2567, %v2568
  %v2570 = vrot.slane %v2419, 2
  %v2571 = vrot.slane %v2421, 2
  %v2572 = vsel %vm2506, %v2570, %v2571
  %v2573 = vrot.slane %v2422, 2
  %v2574 = vrot.slane %v2424, 2
  %v2575 = vsel %vm2506, %v2573, %v2574
  %v2576 = vrot.slane %v2423, 2
  %v2577 = vrot.slane %v2425, 2
  %v2578 = vsel %vm2506, %v2576, %v2577
  %v2579 = vrot.slane %v2426, 2
  %v2580 = vrot.slane %v2428, 2
  %v2581 = vsel %vm2506, %v2579, %v2580
  %v2582 = vrot.slane %v2427, 2
  %v2583 = vrot.slane %v2429, 2
  %v2584 = vsel %vm2506, %v2582, %v2583
  %v2585 = vrot.slane %v2430, 2
  %v2586 = vrot.slane %v2432, 2
  %v2587 = vsel %vm2506, %v2585, %v2586
  %v2588 = vrot.slane %v2431, 2
  %v2589 = vrot.slane %v2433, 2
  %v2590 = vsel %vm2506, %v2588, %v2589
  %v2591 = vrot.slane %v2434, 2
  %v2592 = vrot.slane %v2436, 2
  %v2593 = vsel %vm2506, %v2591, %v2592
  %v2594 = vrot.slane %v2435, 2
  %v2595 = vrot.slane %v2437, 2
  %v2596 = vsel %vm2506, %v2594, %v2595
  %v2597 = vrot.slane %v2438, 2
  %v2598 = vrot.slane %v2440, 2
  %v2599 = vsel %vm2506, %v2597, %v2598
  %v2600 = vrot.slane %v2439, 2
  %v2601 = vrot.slane %v2441, 2
  %v2602 = vsel %vm2506, %v2600, %v2601
  %2603 = vrot.lane.b32.xlu0 %v2509, 64
  %v2604 = vpop.permute.xlu0 %2603
  %2605 = vrot.lane.b32.xlu0 %v2512, 64
  %v2606 = vpop.permute.xlu0 %2605
  %2607 = vrot.lane.b32.xlu0 %v2515, 64
  %v2608 = vpop.permute.xlu0 %2607
  %2609 = vrot.lane.b32.xlu0 %v2518, 64
  %v2610 = vpop.permute.xlu0 %2609
  %2611 = vrot.lane.b32.xlu0 %v2521, 64
  %v2612 = vpop.permute.xlu0 %2611
  %2613 = vrot.lane.b32.xlu0 %v2524, 64
  %v2614 = vpop.permute.xlu0 %2613
  %2615 = vrot.lane.b32.xlu0 %v2527, 64
  %v2616 = vpop.permute.xlu0 %2615
  %2617 = vrot.lane.b32.xlu0 %v2530, 64
  %v2618 = vpop.permute.xlu0 %2617
  %2619 = vrot.lane.b32.xlu0 %v2533, 64
  %v2620 = vpop.permute.xlu0 %2619
  %2621 = vrot.lane.b32.xlu0 %v2536, 64
  %v2622 = vpop.permute.xlu0 %2621
  %2623 = vrot.lane.b32.xlu0 %v2539, 64
  %v2624 = vpop.permute.xlu0 %2623
  %2625 = vrot.lane.b32.xlu0 %v2542, 64
  %v2626 = vpop.permute.xlu0 %2625
  %2627 = vrot.lane.b32.xlu0 %v2545, 64
  %v2628 = vpop.permute.xlu0 %2627
  %2629 = vrot.lane.b32.xlu0 %v2548, 64
  %v2630 = vpop.permute.xlu0 %2629
  %2631 = vrot.lane.b32.xlu0 %v2551, 64
  %v2632 = vpop.permute.xlu0 %2631
  %2633 = vrot.lane.b32.xlu0 %v2554, 64
  %v2634 = vpop.permute.xlu0 %2633
  %2635 = vrot.lane.b32.xlu0 %v2557, 64
  %v2636 = vpop.permute.xlu0 %2635
  %2637 = vrot.lane.b32.xlu0 %v2560, 64
  %v2638 = vpop.permute.xlu0 %2637
  %2639 = vrot.lane.b32.xlu0 %v2563, 64
  %v2640 = vpop.permute.xlu0 %2639
  %2641 = vrot.lane.b32.xlu0 %v2566, 64
  %v2642 = vpop.permute.xlu0 %2641
  %2643 = vrot.lane.b32.xlu0 %v2569, 64
  %v2644 = vpop.permute.xlu0 %2643
  %2645 = vrot.lane.b32.xlu0 %v2572, 64
  %v2646 = vpop.permute.xlu0 %2645
  %2647 = vrot.lane.b32.xlu0 %v2575, 64
  %v2648 = vpop.permute.xlu0 %2647
  %2649 = vrot.lane.b32.xlu0 %v2578, 64
  %v2650 = vpop.permute.xlu0 %2649
  %2651 = vrot.lane.b32.xlu0 %v2581, 64
  %v2652 = vpop.permute.xlu0 %2651
  %2653 = vrot.lane.b32.xlu0 %v2584, 64
  %v2654 = vpop.permute.xlu0 %2653
  %2655 = vrot.lane.b32.xlu0 %v2587, 64
  %v2656 = vpop.permute.xlu0 %2655
  %2657 = vrot.lane.b32.xlu0 %v2590, 64
  %v2658 = vpop.permute.xlu0 %2657
  %2659 = vrot.lane.b32.xlu0 %v2593, 64
  %v2660 = vpop.permute.xlu0 %2659
  %2661 = vrot.lane.b32.xlu0 %v2596, 64
  %v2662 = vpop.permute.xlu0 %2661
  %2663 = vrot.lane.b32.xlu0 %v2599, 64
  %v2664 = vpop.permute.xlu0 %2663
  %2665 = vrot.lane.b32.xlu0 %v2602, 64
  %v2666 = vpop.permute.xlu0 %2665
  %v2667 = vsel %vm2346, %v2604, %v2606
  %v2668 = vsel %vm2346, %v2608, %v2610
  %v2669 = vsel %vm2346, %v2612, %v2614
  %v2670 = vsel %vm2346, %v2616, %v2618
  %v2671 = vsel %vm2346, %v2620, %v2622
  %v2672 = vsel %vm2346, %v2624, %v2626
  %v2673 = vsel %vm2346, %v2628, %v2630
  %v2674 = vsel %vm2346, %v2632, %v2634
  %v2675 = vsel %vm2346, %v2636, %v2638
  %v2676 = vsel %vm2346, %v2640, %v2642
  %v2677 = vsel %vm2346, %v2644, %v2646
  %v2678 = vsel %vm2346, %v2648, %v2650
  %v2679 = vsel %vm2346, %v2652, %v2654
  %v2680 = vsel %vm2346, %v2656, %v2658
  %v2681 = vsel %vm2346, %v2660, %v2662
  %v2682 = vsel %vm2346, %v2664, %v2666
  %vm2715 = vcmask 1048064
  %2716 = vst.msk [vmem:[#allocation5 + $0x10] sm:$0xff] %vm2715, %v2604
  %vm2717 = vcmask 785408
  %2718 = vst.msk [vmem:[#allocation5 + $0x18] sm:$0xff] %vm2717, %v2667
  %2719 = vst.msk [vmem:[#allocation5 + $0x70] sm:$0xff] %vm2715, %v2608
  %2720 = vst.msk [vmem:[#allocation5 + $0x78] sm:$0xff] %vm2717, %v2668
  %2721 = vst.msk [vmem:[#allocation5 + $0xd0] sm:$0xff] %vm2715, %v2612
  %2722 = vst.msk [vmem:[#allocation5 + $0xd8] sm:$0xff] %vm2717, %v2669
  %2723 = vst.msk [vmem:[#allocation5 + $0x130] sm:$0xff] %vm2715, %v2616
  %2724 = vst.msk [vmem:[#allocation5 + $0x138] sm:$0xff] %vm2717, %v2670
  %2725 = vst.msk [vmem:[#allocation5 + $0x190] sm:$0xff] %vm2715, %v2620
  %2726 = vst.msk [vmem:[#allocation5 + $0x198] sm:$0xff] %vm2717, %v2671
  %2727 = vst.msk [vmem:[#allocation5 + $0x1f0] sm:$0xff] %vm2715, %v2624
  %2728 = vst.msk [vmem:[#allocation5 + $0x1f8] sm:$0xff] %vm2717, %v2672
  %2729 = vst.msk [vmem:[#allocation5 + $0x250] sm:$0xff] %vm2715, %v2628
  %2730 = vst.msk [vmem:[#allocation5 + $0x258] sm:$0xff] %vm2717, %v2673
  %2731 = vst.msk [vmem:[#allocation5 + $0x2b0] sm:$0xff] %vm2715, %v2632
  %2732 = vst.msk [vmem:[#allocation5 + $0x2b8] sm:$0xff] %vm2717, %v2674
  %2733 = vst.msk [vmem:[#allocation5 + $0x310] sm:$0xff] %vm2715, %v2636
  %2734 = vst.msk [vmem:[#allocation5 + $0x318] sm:$0xff] %vm2717, %v2675
  %2735 = vst.msk [vmem:[#allocation5 + $0x370] sm:$0xff] %vm2715, %v2640
  %2736 = vst.msk [vmem:[#allocation5 + $0x378] sm:$0xff] %vm2717, %v2676
  %2737 = vst.msk [vmem:[#allocation5 + $0x3d0] sm:$0xff] %vm2715, %v2644
  %2738 = vst.msk [vmem:[#allocation5 + $0x3d8] sm:$0xff] %vm2717, %v2677
  %2739 = vst.msk [vmem:[#allocation5 + $0x430] sm:$0xff] %vm2715, %v2648
  %2740 = vst.msk [vmem:[#allocation5 + $0x438] sm:$0xff] %vm2717, %v2678
  %2741 = vst.msk [vmem:[#allocation5 + $0x490] sm:$0xff] %vm2715, %v2652
  %2742 = vst.msk [vmem:[#allocation5 + $0x498] sm:$0xff] %vm2717, %v2679
  %2743 = vst.msk [vmem:[#allocation5 + $0x4f0] sm:$0xff] %vm2715, %v2656
  %2744 = vst.msk [vmem:[#allocation5 + $0x4f8] sm:$0xff] %vm2717, %v2680
  %2745 = vst.msk [vmem:[#allocation5 + $0x550] sm:$0xff] %vm2715, %v2660
  %2746 = vst.msk [vmem:[#allocation5 + $0x558] sm:$0xff] %vm2717, %v2681
  %2747 = vst.msk [vmem:[#allocation5 + $0x5b0] sm:$0xff] %vm2715, %v2664
  %2748 = vst.msk [vmem:[#allocation5 + $0x5b8] sm:$0xff] %vm2717, %v2682
  %v2749 = vld [vmem:[%s1876] sm:$0xff]
  %v2750 = vld [vmem:[%s1876 + $0x8] sm:$0xff]
  %v2751 = vld [vmem:[%s1876 + $0x20] sm:$0xff]
  %v2752 = vld [vmem:[%s1876 + $0x28] sm:$0xff]
  %v2753 = vld [vmem:[%s1876 + $0x40] sm:$0xff]
  %v2754 = vld [vmem:[%s1876 + $0x48] sm:$0xff]
  %v2755 = vld [vmem:[%s1876 + $0x60] sm:$0xff]
  %v2756 = vld [vmem:[%s1876 + $0x68] sm:$0xff]
  %v2757 = vld [vmem:[%s1876 + $0x80] sm:$0xff]
  %v2758 = vld [vmem:[%s1876 + $0x88] sm:$0xff]
  %v2759 = vld [vmem:[%s1876 + $0xa0] sm:$0xff]
  %v2760 = vld [vmem:[%s1876 + $0xa8] sm:$0xff]
  %v2761 = vld [vmem:[%s1876 + $0xc0] sm:$0xff]
  %v2762 = vld [vmem:[%s1876 + $0xc8] sm:$0xff]
  %v2763 = vld [vmem:[%s1876 + $0xe0] sm:$0xff]
  %v2764 = vld [vmem:[%s1876 + $0xe8] sm:$0xff]
  %v2765 = vld [vmem:[%s1876 + $0x140] sm:$0xff]
  %v2766 = vld [vmem:[%s1876 + $0x148] sm:$0xff]
  %v2767 = vld [vmem:[%s1876 + $0x160] sm:$0xff]
  %v2768 = vld [vmem:[%s1876 + $0x168] sm:$0xff]
  %v2769 = vld [vmem:[%s1876 + $0x180] sm:$0xff]
  %v2770 = vld [vmem:[%s1876 + $0x188] sm:$0xff]
  %v2771 = vld [vmem:[%s1876 + $0x1a0] sm:$0xff]
  %v2772 = vld [vmem:[%s1876 + $0x1a8] sm:$0xff]
  %v2773 = vld [vmem:[%s1876 + $0x1c0] sm:$0xff]
  %v2774 = vld [vmem:[%s1876 + $0x1c8] sm:$0xff]
  %v2775 = vld [vmem:[%s1876 + $0x1e0] sm:$0xff]
  %v2776 = vld [vmem:[%s1876 + $0x1e8] sm:$0xff]
  %v2777 = vld [vmem:[%s1876 + $0x200] sm:$0xff]
  %v2778 = vld [vmem:[%s1876 + $0x208] sm:$0xff]
  %v2779 = vld [vmem:[%s1876 + $0x220] sm:$0xff]
  %v2780 = vld [vmem:[%s1876 + $0x228] sm:$0xff]
  %2813 = vrot.lane.b32.xlu0 %v2749, 96
  %v2814 = vpop.permute.xlu0 %2813
  %2815 = vrot.lane.b32.xlu0 %v2750, 96
  %v2816 = vpop.permute.xlu0 %2815
  %2817 = vrot.lane.b32.xlu0 %v2751, 96
  %v2818 = vpop.permute.xlu0 %2817
  %2819 = vrot.lane.b32.xlu0 %v2752, 96
  %v2820 = vpop.permute.xlu0 %2819
  %2821 = vrot.lane.b32.xlu0 %v2753, 96
  %v2822 = vpop.permute.xlu0 %2821
  %2823 = vrot.lane.b32.xlu0 %v2754, 96
  %v2824 = vpop.permute.xlu0 %2823
  %2825 = vrot.lane.b32.xlu0 %v2755, 96
  %v2826 = vpop.permute.xlu0 %2825
  %2827 = vrot.lane.b32.xlu0 %v2756, 96
  %v2828 = vpop.permute.xlu0 %2827
  %2829 = vrot.lane.b32.xlu0 %v2757, 96
  %v2830 = vpop.permute.xlu0 %2829
  %2831 = vrot.lane.b32.xlu0 %v2758, 96
  %v2832 = vpop.permute.xlu0 %2831
  %2833 = vrot.lane.b32.xlu0 %v2759, 96
  %v2834 = vpop.permute.xlu0 %2833
  %2835 = vrot.lane.b32.xlu0 %v2760, 96
  %v2836 = vpop.permute.xlu0 %2835
  %2837 = vrot.lane.b32.xlu0 %v2761, 96
  %v2838 = vpop.permute.xlu0 %2837
  %2839 = vrot.lane.b32.xlu0 %v2762, 96
  %v2840 = vpop.permute.xlu0 %2839
  %2841 = vrot.lane.b32.xlu0 %v2763, 96
  %v2842 = vpop.permute.xlu0 %2841
  %2843 = vrot.lane.b32.xlu0 %v2764, 96
  %v2844 = vpop.permute.xlu0 %2843
  %2845 = vrot.lane.b32.xlu0 %v2765, 96
  %v2846 = vpop.permute.xlu0 %2845
  %2847 = vrot.lane.b32.xlu0 %v2766, 96
  %v2848 = vpop.permute.xlu0 %2847
  %2849 = vrot.lane.b32.xlu0 %v2767, 96
  %v2850 = vpop.permute.xlu0 %2849
  %2851 = vrot.lane.b32.xlu0 %v2768, 96
  %v2852 = vpop.permute.xlu0 %2851
  %2853 = vrot.lane.b32.xlu0 %v2769, 96
  %v2854 = vpop.permute.xlu0 %2853
  %2855 = vrot.lane.b32.xlu0 %v2770, 96
  %v2856 = vpop.permute.xlu0 %2855
  %2857 = vrot.lane.b32.xlu0 %v2771, 96
  %v2858 = vpop.permute.xlu0 %2857
  %2859 = vrot.lane.b32.xlu0 %v2772, 96
  %v2860 = vpop.permute.xlu0 %2859
  %2861 = vrot.lane.b32.xlu0 %v2773, 96
  %v2862 = vpop.permute.xlu0 %2861
  %2863 = vrot.lane.b32.xlu0 %v2774, 96
  %v2864 = vpop.permute.xlu0 %2863
  %2865 = vrot.lane.b32.xlu0 %v2775, 96
  %v2866 = vpop.permute.xlu0 %2865
  %2867 = vrot.lane.b32.xlu0 %v2776, 96
  %v2868 = vpop.permute.xlu0 %2867
  %2869 = vrot.lane.b32.xlu0 %v2777, 96
  %v2870 = vpop.permute.xlu0 %2869
  %2871 = vrot.lane.b32.xlu0 %v2778, 96
  %v2872 = vpop.permute.xlu0 %2871
  %2873 = vrot.lane.b32.xlu0 %v2779, 96
  %v2874 = vpop.permute.xlu0 %2873
  %2875 = vrot.lane.b32.xlu0 %v2780, 96
  %v2876 = vpop.permute.xlu0 %2875
  %v2877 = vsel %vm2717, %v2814, %v2816
  %v2878 = vsel %vm2717, %v2818, %v2820
  %v2879 = vsel %vm2717, %v2822, %v2824
  %v2880 = vsel %vm2717, %v2826, %v2828
  %v2881 = vsel %vm2717, %v2830, %v2832
  %v2882 = vsel %vm2717, %v2834, %v2836
  %v2883 = vsel %vm2717, %v2838, %v2840
  %v2884 = vsel %vm2717, %v2842, %v2844
  %v2885 = vsel %vm2717, %v2846, %v2848
  %v2886 = vsel %vm2717, %v2850, %v2852
  %v2887 = vsel %vm2717, %v2854, %v2856
  %v2888 = vsel %vm2717, %v2858, %v2860
  %v2889 = vsel %vm2717, %v2862, %v2864
  %v2890 = vsel %vm2717, %v2866, %v2868
  %v2891 = vsel %vm2717, %v2870, %v2872
  %v2892 = vsel %vm2717, %v2874, %v2876
  %vm2925 = vcmask 1048320
  %2926 = vst.msk [vmem:[#allocation5 + $0x18] sm:$0xff] %vm2925, %v2814
  %2927 = vst [vmem:[#allocation5 + $0x20] sm:$0xff] %v2877
  %2928 = vst.msk [vmem:[#allocation5 + $0x78] sm:$0xff] %vm2925, %v2818
  %2929 = vst [vmem:[#allocation5 + $0x80] sm:$0xff] %v2878
  %2930 = vst.msk [vmem:[#allocation5 + $0xd8] sm:$0xff] %vm2925, %v2822
  %2931 = vst [vmem:[#allocation5 + $0xe0] sm:$0xff] %v2879
  %2932 = vst.msk [vmem:[#allocation5 + $0x138] sm:$0xff] %vm2925, %v2826
  %2933 = vst [vmem:[#allocation5 + $0x140] sm:$0xff] %v2880
  %2934 = vst.msk [vmem:[#allocation5 + $0x198] sm:$0xff] %vm2925, %v2830
  %2935 = vst [vmem:[#allocation5 + $0x1a0] sm:$0xff] %v2881
  %2936 = vst.msk [vmem:[#allocation5 + $0x1f8] sm:$0xff] %vm2925, %v2834
  %2937 = vst [vmem:[#allocation5 + $0x200] sm:$0xff] %v2882
  %2938 = vst.msk [vmem:[#allocation5 + $0x258] sm:$0xff] %vm2925, %v2838
  %2939 = vst [vmem:[#allocation5 + $0x260] sm:$0xff] %v2883
  %2940 = vst.msk [vmem:[#allocation5 + $0x2b8] sm:$0xff] %vm2925, %v2842
  %2941 = vst [vmem:[#allocation5 + $0x2c0] sm:$0xff] %v2884
  %2942 = vst.msk [vmem:[#allocation5 + $0x318] sm:$0xff] %vm2925, %v2846
  %2943 = vst [vmem:[#allocation5 + $0x320] sm:$0xff] %v2885
  %2944 = vst.msk [vmem:[#allocation5 + $0x378] sm:$0xff] %vm2925, %v2850
  %2945 = vst [vmem:[#allocation5 + $0x380] sm:$0xff] %v2886
  %2946 = vst.msk [vmem:[#allocation5 + $0x3d8] sm:$0xff] %vm2925, %v2854
  %2947 = vst [vmem:[#allocation5 + $0x3e0] sm:$0xff] %v2887
  %2948 = vst.msk [vmem:[#allocation5 + $0x438] sm:$0xff] %vm2925, %v2858
  %2949 = vst [vmem:[#allocation5 + $0x440] sm:$0xff] %v2888
  %2950 = vst.msk [vmem:[#allocation5 + $0x498] sm:$0xff] %vm2925, %v2862
  %2951 = vst [vmem:[#allocation5 + $0x4a0] sm:$0xff] %v2889
  %2952 = vst.msk [vmem:[#allocation5 + $0x4f8] sm:$0xff] %vm2925, %v2866
  %2953 = vst [vmem:[#allocation5 + $0x500] sm:$0xff] %v2890
  %2954 = vst.msk [vmem:[#allocation5 + $0x558] sm:$0xff] %vm2925, %v2870
  %2955 = vst [vmem:[#allocation5 + $0x560] sm:$0xff] %v2891
  %2956 = vst.msk [vmem:[#allocation5 + $0x5b8] sm:$0xff] %vm2925, %v2874
  %2957 = vst [vmem:[#allocation5 + $0x5c0] sm:$0xff] %v2892
  %v2958 = vld [vmem:[%s1876] sm:$0xfe]
  %v2959 = vld [vmem:[%s1876 + $0x8] sm:$0xfe]
  %v2960 = vld [vmem:[%s1876 + $0x10] sm:$0x1]
  %v2961 = vld [vmem:[%s1876 + $0x18] sm:$0x1]
  %v2962 = vld [vmem:[%s1876 + $0x20] sm:$0xfe]
  %v2963 = vld [vmem:[%s1876 + $0x28] sm:$0xfe]
  %v2964 = vld [vmem:[%s1876 + $0x30] sm:$0x1]
  %v2965 = vld [vmem:[%s1876 + $0x38] sm:$0x1]
  %v2966 = vld [vmem:[%s1876 + $0x40] sm:$0xfe]
  %v2967 = vld [vmem:[%s1876 + $0x48] sm:$0xfe]
  %v2968 = vld [vmem:[%s1876 + $0x50] sm:$0x1]
  %v2969 = vld [vmem:[%s1876 + $0x58] sm:$0x1]
  %v2970 = vld [vmem:[%s1876 + $0x60] sm:$0xfe]
  %v2971 = vld [vmem:[%s1876 + $0x68] sm:$0xfe]
  %v2972 = vld [vmem:[%s1876 + $0x70] sm:$0x1]
  %v2973 = vld [vmem:[%s1876 + $0x78] sm:$0x1]
  %v2974 = vld [vmem:[%s1876 + $0x80] sm:$0xfe]
  %v2975 = vld [vmem:[%s1876 + $0x88] sm:$0xfe]
  %v2976 = vld [vmem:[%s1876 + $0x90] sm:$0x1]
  %v2977 = vld [vmem:[%s1876 + $0x98] sm:$0x1]
  %v2978 = vld [vmem:[%s1876 + $0xa0] sm:$0xfe]
  %v2979 = vld [vmem:[%s1876 + $0xa8] sm:$0xfe]
  %v2980 = vld [vmem:[%s1876 + $0xb0] sm:$0x1]
  %v2981 = vld [vmem:[%s1876 + $0xb8] sm:$0x1]
  %v2982 = vld [vmem:[%s1876 + $0xc0] sm:$0xfe]
  %v2983 = vld [vmem:[%s1876 + $0xc8] sm:$0xfe]
  %v2984 = vld [vmem:[%s1876 + $0xd0] sm:$0x1]
  %v2985 = vld [vmem:[%s1876 + $0xd8] sm:$0x1]
  %v2986 = vld [vmem:[%s1876 + $0xe0] sm:$0xfe]
  %v2987 = vld [vmem:[%s1876 + $0xe8] sm:$0xfe]
  %v2988 = vld [vmem:[%s1876 + $0xf0] sm:$0x1]
  %v2989 = vld [vmem:[%s1876 + $0xf8] sm:$0x1]
  %v2990 = vld [vmem:[%s1876 + $0x140] sm:$0xfe]
  %v2991 = vld [vmem:[%s1876 + $0x148] sm:$0xfe]
  %v2992 = vld [vmem:[%s1876 + $0x150] sm:$0x1]
  %v2993 = vld [vmem:[%s1876 + $0x158] sm:$0x1]
  %v2994 = vld [vmem:[%s1876 + $0x160] sm:$0xfe]
  %v2995 = vld [vmem:[%s1876 + $0x168] sm:$0xfe]
  %v2996 = vld [vmem:[%s1876 + $0x170] sm:$0x1]
  %v2997 = vld [vmem:[%s1876 + $0x178] sm:$0x1]
  %v2998 = vld [vmem:[%s1876 + $0x180] sm:$0xfe]
  %v2999 = vld [vmem:[%s1876 + $0x188] sm:$0xfe]
  %v3000 = vld [vmem:[%s1876 + $0x190] sm:$0x1]
  %v3001 = vld [vmem:[%s1876 + $0x198] sm:$0x1]
  %v3002 = vld [vmem:[%s1876 + $0x1a0] sm:$0xfe]
  %v3003 = vld [vmem:[%s1876 + $0x1a8] sm:$0xfe]
  %v3004 = vld [vmem:[%s1876 + $0x1b0] sm:$0x1]
  %v3005 = vld [vmem:[%s1876 + $0x1b8] sm:$0x1]
  %v3006 = vld [vmem:[%s1876 + $0x1c0] sm:$0xfe]
  %v3007 = vld [vmem:[%s1876 + $0x1c8] sm:$0xfe]
  %v3008 = vld [vmem:[%s1876 + $0x1d0] sm:$0x1]
  %v3009 = vld [vmem:[%s1876 + $0x1d8] sm:$0x1]
  %v3010 = vld [vmem:[%s1876 + $0x1e0] sm:$0xfe]
  %v3011 = vld [vmem:[%s1876 + $0x1e8] sm:$0xfe]
  %v3012 = vld [vmem:[%s1876 + $0x1f0] sm:$0x1]
  %v3013 = vld [vmem:[%s1876 + $0x1f8] sm:$0x1]
  %v3014 = vld [vmem:[%s1876 + $0x200] sm:$0xfe]
  %v3015 = vld [vmem:[%s1876 + $0x208] sm:$0xfe]
  %v3016 = vld [vmem:[%s1876 + $0x210] sm:$0x1]
  %v3017 = vld [vmem:[%s1876 + $0x218] sm:$0x1]
  %v3018 = vld [vmem:[%s1876 + $0x220] sm:$0xfe]
  %v3019 = vld [vmem:[%s1876 + $0x228] sm:$0xfe]
  %v3020 = vld [vmem:[%s1876 + $0x230] sm:$0x1]
  %v3021 = vld [vmem:[%s1876 + $0x238] sm:$0x1]
  %v3086 = vrot.slane %v2958, 1
  %v3087 = vrot.slane %v2960, 1
  %v3088 = vsel %vm2135, %v3086, %v3087
  %v3089 = vrot.slane %v2959, 1
  %v3090 = vrot.slane %v2961, 1
  %v3091 = vsel %vm2135, %v3089, %v3090
  %v3092 = vrot.slane %v2962, 1
  %v3093 = vrot.slane %v2964, 1
  %v3094 = vsel %vm2135, %v3092, %v3093
  %v3095 = vrot.slane %v2963, 1
  %v3096 = vrot.slane %v2965, 1
  %v3097 = vsel %vm2135, %v3095, %v3096
  %v3098 = vrot.slane %v2966, 1
  %v3099 = vrot.slane %v2968, 1
  %v3100 = vsel %vm2135, %v3098, %v3099
  %v3101 = vrot.slane %v2967, 1
  %v3102 = vrot.slane %v2969, 1
  %v3103 = vsel %vm2135, %v3101, %v3102
  %v3104 = vrot.slane %v2970, 1
  %v3105 = vrot.slane %v2972, 1
  %v3106 = vsel %vm2135, %v3104, %v3105
  %v3107 = vrot.slane %v2971, 1
  %v3108 = vrot.slane %v2973, 1
  %v3109 = vsel %vm2135, %v3107, %v3108
  %v3110 = vrot.slane %v2974, 1
  %v3111 = vrot.slane %v2976, 1
  %v3112 = vsel %vm2135, %v3110, %v3111
  %v3113 = vrot.slane %v2975, 1
  %v3114 = vrot.slane %v2977, 1
  %v3115 = vsel %vm2135, %v3113, %v3114
  %v3116 = vrot.slane %v2978, 1
  %v3117 = vrot.slane %v2980, 1
  %v3118 = vsel %vm2135, %v3116, %v3117
  %v3119 = vrot.slane %v2979, 1
  %v3120 = vrot.slane %v2981, 1
  %v3121 = vsel %vm2135, %v3119, %v3120
  %v3122 = vrot.slane %v2982, 1
  %v3123 = vrot.slane %v2984, 1
  %v3124 = vsel %vm2135, %v3122, %v3123
  %v3125 = vrot.slane %v2983, 1
  %v3126 = vrot.slane %v2985, 1
  %v3127 = vsel %vm2135, %v3125, %v3126
  %v3128 = vrot.slane %v2986, 1
  %v3129 = vrot.slane %v2988, 1
  %v3130 = vsel %vm2135, %v3128, %v3129
  %v3131 = vrot.slane %v2987, 1
  %v3132 = vrot.slane %v2989, 1
  %v3133 = vsel %vm2135, %v3131, %v3132
  %v3134 = vrot.slane %v2990, 1
  %v3135 = vrot.slane %v2992, 1
  %v3136 = vsel %vm2135, %v3134, %v3135
  %v3137 = vrot.slane %v2991, 1
  %v3138 = vrot.slane %v2993, 1
  %v3139 = vsel %vm2135, %v3137, %v3138
  %v3140 = vrot.slane %v2994, 1
  %v3141 = vrot.slane %v2996, 1
  %v3142 = vsel %vm2135, %v3140, %v3141
  %v3143 = vrot.slane %v2995, 1
  %v3144 = vrot.slane %v2997, 1
  %v3145 = vsel %vm2135, %v3143, %v3144
  %v3146 = vrot.slane %v2998, 1
  %v3147 = vrot.slane %v3000, 1
  %v3148 = vsel %vm2135, %v3146, %v3147
  %v3149 = vrot.slane %v2999, 1
  %v3150 = vrot.slane %v3001, 1
  %v3151 = vsel %vm2135, %v3149, %v3150
  %v3152 = vrot.slane %v3002, 1
  %v3153 = vrot.slane %v3004, 1
  %v3154 = vsel %vm2135, %v3152, %v3153
  %v3155 = vrot.slane %v3003, 1
  %v3156 = vrot.slane %v3005, 1
  %v3157 = vsel %vm2135, %v3155, %v3156
  %v3158 = vrot.slane %v3006, 1
  %v3159 = vrot.slane %v3008, 1
  %v3160 = vsel %vm2135, %v3158, %v3159
  %v3161 = vrot.slane %v3007, 1
  %v3162 = vrot.slane %v3009, 1
  %v3163 = vsel %vm2135, %v3161, %v3162
  %v3164 = vrot.slane %v3010, 1
  %v3165 = vrot.slane %v3012, 1
  %v3166 = vsel %vm2135, %v3164, %v3165
  %v3167 = vrot.slane %v3011, 1
  %v3168 = vrot.slane %v3013, 1
  %v3169 = vsel %vm2135, %v3167, %v3168
  %v3170 = vrot.slane %v3014, 1
  %v3171 = vrot.slane %v3016, 1
  %v3172 = vsel %vm2135, %v3170, %v3171
  %v3173 = vrot.slane %v3015, 1
  %v3174 = vrot.slane %v3017, 1
  %v3175 = vsel %vm2135, %v3173, %v3174
  %v3176 = vrot.slane %v3018, 1
  %v3177 = vrot.slane %v3020, 1
  %v3178 = vsel %vm2135, %v3176, %v3177
  %v3179 = vrot.slane %v3019, 1
  %v3180 = vrot.slane %v3021, 1
  %v3181 = vsel %vm2135, %v3179, %v3180
  %3214 = vst [vmem:[#allocation5 + $0x28] sm:$0xff] %v3088
  %3215 = vst.msk [vmem:[#allocation5 + $0x30] sm:$0xff] %vm503, %v3091
  %3216 = vst [vmem:[#allocation5 + $0x88] sm:$0xff] %v3094
  %3217 = vst.msk [vmem:[#allocation5 + $0x90] sm:$0xff] %vm503, %v3097
  %3218 = vst [vmem:[#allocation5 + $0xe8] sm:$0xff] %v3100
  %3219 = vst.msk [vmem:[#allocation5 + $0xf0] sm:$0xff] %vm503, %v3103
  %3220 = vst [vmem:[#allocation5 + $0x148] sm:$0xff] %v3106
  %3221 = vst.msk [vmem:[#allocation5 + $0x150] sm:$0xff] %vm503, %v3109
  %3222 = vst [vmem:[#allocation5 + $0x1a8] sm:$0xff] %v3112
  %3223 = vst.msk [vmem:[#allocation5 + $0x1b0] sm:$0xff] %vm503, %v3115
  %3224 = vst [vmem:[#allocation5 + $0x208] sm:$0xff] %v3118
  %3225 = vst.msk [vmem:[#allocation5 + $0x210] sm:$0xff] %vm503, %v3121
  %3226 = vst [vmem:[#allocation5 + $0x268] sm:$0xff] %v3124
  %3227 = vst.msk [vmem:[#allocation5 + $0x270] sm:$0xff] %vm503, %v3127
  %3228 = vst [vmem:[#allocation5 + $0x2c8] sm:$0xff] %v3130
  %3229 = vst.msk [vmem:[#allocation5 + $0x2d0] sm:$0xff] %vm503, %v3133
  %3230 = vst [vmem:[#allocation5 + $0x328] sm:$0xff] %v3136
  %3231 = vst.msk [vmem:[#allocation5 + $0x330] sm:$0xff] %vm503, %v3139
  %3232 = vst [vmem:[#allocation5 + $0x388] sm:$0xff] %v3142
  %3233 = vst.msk [vmem:[#allocation5 + $0x390] sm:$0xff] %vm503, %v3145
  %3234 = vst [vmem:[#allocation5 + $0x3e8] sm:$0xff] %v3148
  %3235 = vst.msk [vmem:[#allocation5 + $0x3f0] sm:$0xff] %vm503, %v3151
  %3236 = vst [vmem:[#allocation5 + $0x448] sm:$0xff] %v3154
  %3237 = vst.msk [vmem:[#allocation5 + $0x450] sm:$0xff] %vm503, %v3157
  %3238 = vst [vmem:[#allocation5 + $0x4a8] sm:$0xff] %v3160
  %3239 = vst.msk [vmem:[#allocation5 + $0x4b0] sm:$0xff] %vm503, %v3163
  %3240 = vst [vmem:[#allocation5 + $0x508] sm:$0xff] %v3166
  %3241 = vst.msk [vmem:[#allocation5 + $0x510] sm:$0xff] %vm503, %v3169
  %3242 = vst [vmem:[#allocation5 + $0x568] sm:$0xff] %v3172
  %3243 = vst.msk [vmem:[#allocation5 + $0x570] sm:$0xff] %vm503, %v3175
  %3244 = vst [vmem:[#allocation5 + $0x5c8] sm:$0xff] %v3178
  %3245 = vst.msk [vmem:[#allocation5 + $0x5d0] sm:$0xff] %vm503, %v3181
  %v3246 = vld [vmem:[%s1876] sm:$0xfc]
  %v3247 = vld [vmem:[%s1876 + $0x8] sm:$0xfc]
  %v3248 = vld [vmem:[%s1876 + $0x10] sm:$0x3]
  %v3249 = vld [vmem:[%s1876 + $0x18] sm:$0x3]
  %v3250 = vld [vmem:[%s1876 + $0x20] sm:$0xfc]
  %v3251 = vld [vmem:[%s1876 + $0x28] sm:$0xfc]
  %v3252 = vld [vmem:[%s1876 + $0x30] sm:$0x3]
  %v3253 = vld [vmem:[%s1876 + $0x38] sm:$0x3]
  %v3254 = vld [vmem:[%s1876 + $0x40] sm:$0xfc]
  %v3255 = vld [vmem:[%s1876 + $0x48] sm:$0xfc]
  %v3256 = vld [vmem:[%s1876 + $0x50] sm:$0x3]
  %v3257 = vld [vmem:[%s1876 + $0x58] sm:$0x3]
  %v3258 = vld [vmem:[%s1876 + $0x60] sm:$0xfc]
  %v3259 = vld [vmem:[%s1876 + $0x68] sm:$0xfc]
  %v3260 = vld [vmem:[%s1876 + $0x70] sm:$0x3]
  %v3261 = vld [vmem:[%s1876 + $0x78] sm:$0x3]
  %v3262 = vld [vmem:[%s1876 + $0x80] sm:$0xfc]
  %v3263 = vld [vmem:[%s1876 + $0x88] sm:$0xfc]
  %v3264 = vld [vmem:[%s1876 + $0x90] sm:$0x3]
  %v3265 = vld [vmem:[%s1876 + $0x98] sm:$0x3]
  %v3266 = vld [vmem:[%s1876 + $0xa0] sm:$0xfc]
  %v3267 = vld [vmem:[%s1876 + $0xa8] sm:$0xfc]
  %v3268 = vld [vmem:[%s1876 + $0xb0] sm:$0x3]
  %v3269 = vld [vmem:[%s1876 + $0xb8] sm:$0x3]
  %v3270 = vld [vmem:[%s1876 + $0xc0] sm:$0xfc]
  %v3271 = vld [vmem:[%s1876 + $0xc8] sm:$0xfc]
  %v3272 = vld [vmem:[%s1876 + $0xd0] sm:$0x3]
  %v3273 = vld [vmem:[%s1876 + $0xd8] sm:$0x3]
  %v3274 = vld [vmem:[%s1876 + $0xe0] sm:$0xfc]
  %v3275 = vld [vmem:[%s1876 + $0xe8] sm:$0xfc]
  %v3276 = vld [vmem:[%s1876 + $0xf0] sm:$0x3]
  %v3277 = vld [vmem:[%s1876 + $0xf8] sm:$0x3]
  %v3278 = vld [vmem:[%s1876 + $0x140] sm:$0xfc]
  %v3279 = vld [vmem:[%s1876 + $0x148] sm:$0xfc]
  %v3280 = vld [vmem:[%s1876 + $0x150] sm:$0x3]
  %v3281 = vld [vmem:[%s1876 + $0x158] sm:$0x3]
  %v3282 = vld [vmem:[%s1876 + $0x160] sm:$0xfc]
  %v3283 = vld [vmem:[%s1876 + $0x168] sm:$0xfc]
  %v3284 = vld [vmem:[%s1876 + $0x170] sm:$0x3]
  %v3285 = vld [vmem:[%s1876 + $0x178] sm:$0x3]
  %v3286 = vld [vmem:[%s1876 + $0x180] sm:$0xfc]
  %v3287 = vld [vmem:[%s1876 + $0x188] sm:$0xfc]
  %v3288 = vld [vmem:[%s1876 + $0x190] sm:$0x3]
  %v3289 = vld [vmem:[%s1876 + $0x198] sm:$0x3]
  %v3290 = vld [vmem:[%s1876 + $0x1a0] sm:$0xfc]
  %v3291 = vld [vmem:[%s1876 + $0x1a8] sm:$0xfc]
  %v3292 = vld [vmem:[%s1876 + $0x1b0] sm:$0x3]
  %v3293 = vld [vmem:[%s1876 + $0x1b8] sm:$0x3]
  %v3294 = vld [vmem:[%s1876 + $0x1c0] sm:$0xfc]
  %v3295 = vld [vmem:[%s1876 + $0x1c8] sm:$0xfc]
  %v3296 = vld [vmem:[%s1876 + $0x1d0] sm:$0x3]
  %v3297 = vld [vmem:[%s1876 + $0x1d8] sm:$0x3]
  %v3298 = vld [vmem:[%s1876 + $0x1e0] sm:$0xfc]
  %v3299 = vld [vmem:[%s1876 + $0x1e8] sm:$0xfc]
  %v3300 = vld [vmem:[%s1876 + $0x1f0] sm:$0x3]
  %v3301 = vld [vmem:[%s1876 + $0x1f8] sm:$0x3]
  %v3302 = vld [vmem:[%s1876 + $0x200] sm:$0xfc]
  %v3303 = vld [vmem:[%s1876 + $0x208] sm:$0xfc]
  %v3304 = vld [vmem:[%s1876 + $0x210] sm:$0x3]
  %v3305 = vld [vmem:[%s1876 + $0x218] sm:$0x3]
  %v3306 = vld [vmem:[%s1876 + $0x220] sm:$0xfc]
  %v3307 = vld [vmem:[%s1876 + $0x228] sm:$0xfc]
  %v3308 = vld [vmem:[%s1876 + $0x230] sm:$0x3]
  %v3309 = vld [vmem:[%s1876 + $0x238] sm:$0x3]
  %v3374 = vrot.slane %v3246, 2
  %v3375 = vrot.slane %v3248, 2
  %v3376 = vsel %vm2506, %v3374, %v3375
  %v3377 = vrot.slane %v3247, 2
  %v3378 = vrot.slane %v3249, 2
  %v3379 = vsel %vm2506, %v3377, %v3378
  %v3380 = vrot.slane %v3250, 2
  %v3381 = vrot.slane %v3252, 2
  %v3382 = vsel %vm2506, %v3380, %v3381
  %v3383 = vrot.slane %v3251, 2
  %v3384 = vrot.slane %v3253, 2
  %v3385 = vsel %vm2506, %v3383, %v3384
  %v3386 = vrot.slane %v3254, 2
  %v3387 = vrot.slane %v3256, 2
  %v3388 = vsel %vm2506, %v3386, %v3387
  %v3389 = vrot.slane %v3255, 2
  %v3390 = vrot.slane %v3257, 2
  %v3391 = vsel %vm2506, %v3389, %v3390
  %v3392 = vrot.slane %v3258, 2
  %v3393 = vrot.slane %v3260, 2
  %v3394 = vsel %vm2506, %v3392, %v3393
  %v3395 = vrot.slane %v3259, 2
  %v3396 = vrot.slane %v3261, 2
  %v3397 = vsel %vm2506, %v3395, %v3396
  %v3398 = vrot.slane %v3262, 2
  %v3399 = vrot.slane %v3264, 2
  %v3400 = vsel %vm2506, %v3398, %v3399
  %v3401 = vrot.slane %v3263, 2
  %v3402 = vrot.slane %v3265, 2
  %v3403 = vsel %vm2506, %v3401, %v3402
  %v3404 = vrot.slane %v3266, 2
  %v3405 = vrot.slane %v3268, 2
  %v3406 = vsel %vm2506, %v3404, %v3405
  %v3407 = vrot.slane %v3267, 2
  %v3408 = vrot.slane %v3269, 2
  %v3409 = vsel %vm2506, %v3407, %v3408
  %v3410 = vrot.slane %v3270, 2
  %v3411 = vrot.slane %v3272, 2
  %v3412 = vsel %vm2506, %v3410, %v3411
  %v3413 = vrot.slane %v3271, 2
  %v3414 = vrot.slane %v3273, 2
  %v3415 = vsel %vm2506, %v3413, %v3414
  %v3416 = vrot.slane %v3274, 2
  %v3417 = vrot.slane %v3276, 2
  %v3418 = vsel %vm2506, %v3416, %v3417
  %v3419 = vrot.slane %v3275, 2
  %v3420 = vrot.slane %v3277, 2
  %v3421 = vsel %vm2506, %v3419, %v3420
  %v3422 = vrot.slane %v3278, 2
  %v3423 = vrot.slane %v3280, 2
  %v3424 = vsel %vm2506, %v3422, %v3423
  %v3425 = vrot.slane %v3279, 2
  %v3426 = vrot.slane %v3281, 2
  %v3427 = vsel %vm2506, %v3425, %v3426
  %v3428 = vrot.slane %v3282, 2
  %v3429 = vrot.slane %v3284, 2
  %v3430 = vsel %vm2506, %v3428, %v3429
  %v3431 = vrot.slane %v3283, 2
  %v3432 = vrot.slane %v3285, 2
  %v3433 = vsel %vm2506, %v3431, %v3432
  %v3434 = vrot.slane %v3286, 2
  %v3435 = vrot.slane %v3288, 2
  %v3436 = vsel %vm2506, %v3434, %v3435
  %v3437 = vrot.slane %v3287, 2
  %v3438 = vrot.slane %v3289, 2
  %v3439 = vsel %vm2506, %v3437, %v3438
  %v3440 = vrot.slane %v3290, 2
  %v3441 = vrot.slane %v3292, 2
  %v3442 = vsel %vm2506, %v3440, %v3441
  %v3443 = vrot.slane %v3291, 2
  %v3444 = vrot.slane %v3293, 2
  %v3445 = vsel %vm2506, %v3443, %v3444
  %v3446 = vrot.slane %v3294, 2
  %v3447 = vrot.slane %v3296, 2
  %v3448 = vsel %vm2506, %v3446, %v3447
  %v3449 = vrot.slane %v3295, 2
  %v3450 = vrot.slane %v3297, 2
  %v3451 = vsel %vm2506, %v3449, %v3450
  %v3452 = vrot.slane %v3298, 2
  %v3453 = vrot.slane %v3300, 2
  %v3454 = vsel %vm2506, %v3452, %v3453
  %v3455 = vrot.slane %v3299, 2
  %v3456 = vrot.slane %v3301, 2
  %v3457 = vsel %vm2506, %v3455, %v3456
  %v3458 = vrot.slane %v3302, 2
  %v3459 = vrot.slane %v3304, 2
  %v3460 = vsel %vm2506, %v3458, %v3459
  %v3461 = vrot.slane %v3303, 2
  %v3462 = vrot.slane %v3305, 2
  %v3463 = vsel %vm2506, %v3461, %v3462
  %v3464 = vrot.slane %v3306, 2
  %v3465 = vrot.slane %v3308, 2
  %v3466 = vsel %vm2506, %v3464, %v3465
  %v3467 = vrot.slane %v3307, 2
  %v3468 = vrot.slane %v3309, 2
  %v3469 = vsel %vm2506, %v3467, %v3468
  %3470 = vrot.lane.b32.xlu0 %v3376, 32
  %v3471 = vpop.permute.xlu0 %3470
  %3472 = vrot.lane.b32.xlu0 %v3379, 32
  %v3473 = vpop.permute.xlu0 %3472
  %3474 = vrot.lane.b32.xlu0 %v3382, 32
  %v3475 = vpop.permute.xlu0 %3474
  %3476 = vrot.lane.b32.xlu0 %v3385, 32
  %v3477 = vpop.permute.xlu0 %3476
  %3478 = vrot.lane.b32.xlu0 %v3388, 32
  %v3479 = vpop.permute.xlu0 %3478
  %3480 = vrot.lane.b32.xlu0 %v3391, 32
  %v3481 = vpop.permute.xlu0 %3480
  %3482 = vrot.lane.b32.xlu0 %v3394, 32
  %v3483 = vpop.permute.xlu0 %3482
  %3484 = vrot.lane.b32.xlu0 %v3397, 32
  %v3485 = vpop.permute.xlu0 %3484
  %3486 = vrot.lane.b32.xlu0 %v3400, 32
  %v3487 = vpop.permute.xlu0 %3486
  %3488 = vrot.lane.b32.xlu0 %v3403, 32
  %v3489 = vpop.permute.xlu0 %3488
  %3490 = vrot.lane.b32.xlu0 %v3406, 32
  %v3491 = vpop.permute.xlu0 %3490
  %3492 = vrot.lane.b32.xlu0 %v3409, 32
  %v3493 = vpop.permute.xlu0 %3492
  %3494 = vrot.lane.b32.xlu0 %v3412, 32
  %v3495 = vpop.permute.xlu0 %3494
  %3496 = vrot.lane.b32.xlu0 %v3415, 32
  %v3497 = vpop.permute.xlu0 %3496
  %3498 = vrot.lane.b32.xlu0 %v3418, 32
  %v3499 = vpop.permute.xlu0 %3498
  %3500 = vrot.lane.b32.xlu0 %v3421, 32
  %v3501 = vpop.permute.xlu0 %3500
  %3502 = vrot.lane.b32.xlu0 %v3424, 32
  %v3503 = vpop.permute.xlu0 %3502
  %3504 = vrot.lane.b32.xlu0 %v3427, 32
  %v3505 = vpop.permute.xlu0 %3504
  %3506 = vrot.lane.b32.xlu0 %v3430, 32
  %v3507 = vpop.permute.xlu0 %3506
  %3508 = vrot.lane.b32.xlu0 %v3433, 32
  %v3509 = vpop.permute.xlu0 %3508
  %3510 = vrot.lane.b32.xlu0 %v3436, 32
  %v3511 = vpop.permute.xlu0 %3510
  %3512 = vrot.lane.b32.xlu0 %v3439, 32
  %v3513 = vpop.permute.xlu0 %3512
  %3514 = vrot.lane.b32.xlu0 %v3442, 32
  %v3515 = vpop.permute.xlu0 %3514
  %3516 = vrot.lane.b32.xlu0 %v3445, 32
  %v3517 = vpop.permute.xlu0 %3516
  %3518 = vrot.lane.b32.xlu0 %v3448, 32
  %v3519 = vpop.permute.xlu0 %3518
  %3520 = vrot.lane.b32.xlu0 %v3451, 32
  %v3521 = vpop.permute.xlu0 %3520
  %3522 = vrot.lane.b32.xlu0 %v3454, 32
  %v3523 = vpop.permute.xlu0 %3522
  %3524 = vrot.lane.b32.xlu0 %v3457, 32
  %v3525 = vpop.permute.xlu0 %3524
  %3526 = vrot.lane.b32.xlu0 %v3460, 32
  %v3527 = vpop.permute.xlu0 %3526
  %3528 = vrot.lane.b32.xlu0 %v3463, 32
  %v3529 = vpop.permute.xlu0 %3528
  %3530 = vrot.lane.b32.xlu0 %v3466, 32
  %v3531 = vpop.permute.xlu0 %3530
  %3532 = vrot.lane.b32.xlu0 %v3469, 32
  %v3533 = vpop.permute.xlu0 %3532
  %v3534 = vsel %vm503, %v3471, %v3473
  %v3535 = vsel %vm503, %v3475, %v3477
  %v3536 = vsel %vm503, %v3479, %v3481
  %v3537 = vsel %vm503, %v3483, %v3485
  %v3538 = vsel %vm503, %v3487, %v3489
  %v3539 = vsel %vm503, %v3491, %v3493
  %v3540 = vsel %vm503, %v3495, %v3497
  %v3541 = vsel %vm503, %v3499, %v3501
  %v3542 = vsel %vm503, %v3503, %v3505
  %v3543 = vsel %vm503, %v3507, %v3509
  %v3544 = vsel %vm503, %v3511, %v3513
  %v3545 = vsel %vm503, %v3515, %v3517
  %v3546 = vsel %vm503, %v3519, %v3521
  %v3547 = vsel %vm503, %v3523, %v3525
  %v3548 = vsel %vm503, %v3527, %v3529
  %v3549 = vsel %vm503, %v3531, %v3533
  %3582 = vst.msk [vmem:[#allocation5 + $0x30] sm:$0xff] %vm2344, %v3471
  %3583 = vst.msk [vmem:[#allocation5 + $0x38] sm:$0xff] %vm2346, %v3534
  %3584 = vst.msk [vmem:[#allocation5 + $0x90] sm:$0xff] %vm2344, %v3475
  %3585 = vst.msk [vmem:[#allocation5 + $0x98] sm:$0xff] %vm2346, %v3535
  %3586 = vst.msk [vmem:[#allocation5 + $0xf0] sm:$0xff] %vm2344, %v3479
  %3587 = vst.msk [vmem:[#allocation5 + $0xf8] sm:$0xff] %vm2346, %v3536
  %3588 = vst.msk [vmem:[#allocation5 + $0x150] sm:$0xff] %vm2344, %v3483
  %3589 = vst.msk [vmem:[#allocation5 + $0x158] sm:$0xff] %vm2346, %v3537
  %3590 = vst.msk [vmem:[#allocation5 + $0x1b0] sm:$0xff] %vm2344, %v3487
  %3591 = vst.msk [vmem:[#allocation5 + $0x1b8] sm:$0xff] %vm2346, %v3538
  %3592 = vst.msk [vmem:[#allocation5 + $0x210] sm:$0xff] %vm2344, %v3491
  %3593 = vst.msk [vmem:[#allocation5 + $0x218] sm:$0xff] %vm2346, %v3539
  %3594 = vst.msk [vmem:[#allocation5 + $0x270] sm:$0xff] %vm2344, %v3495
  %3595 = vst.msk [vmem:[#allocation5 + $0x278] sm:$0xff] %vm2346, %v3540
  %3596 = vst.msk [vmem:[#allocation5 + $0x2d0] sm:$0xff] %vm2344, %v3499
  %3597 = vst.msk [vmem:[#allocation5 + $0x2d8] sm:$0xff] %vm2346, %v3541
  %3598 = vst.msk [vmem:[#allocation5 + $0x330] sm:$0xff] %vm2344, %v3503
  %3599 = vst.msk [vmem:[#allocation5 + $0x338] sm:$0xff] %vm2346, %v3542
  %3600 = vst.msk [vmem:[#allocation5 + $0x390] sm:$0xff] %vm2344, %v3507
  %3601 = vst.msk [vmem:[#allocation5 + $0x398] sm:$0xff] %vm2346, %v3543
  %3602 = vst.msk [vmem:[#allocation5 + $0x3f0] sm:$0xff] %vm2344, %v3511
  %3603 = vst.msk [vmem:[#allocation5 + $0x3f8] sm:$0xff] %vm2346, %v3544
  %3604 = vst.msk [vmem:[#allocation5 + $0x450] sm:$0xff] %vm2344, %v3515
  %3605 = vst.msk [vmem:[#allocation5 + $0x458] sm:$0xff] %vm2346, %v3545
  %3606 = vst.msk [vmem:[#allocation5 + $0x4b0] sm:$0xff] %vm2344, %v3519
  %3607 = vst.msk [vmem:[#allocation5 + $0x4b8] sm:$0xff] %vm2346, %v3546
  %3608 = vst.msk [vmem:[#allocation5 + $0x510] sm:$0xff] %vm2344, %v3523
  %3609 = vst.msk [vmem:[#allocation5 + $0x518] sm:$0xff] %vm2346, %v3547
  %3610 = vst.msk [vmem:[#allocation5 + $0x570] sm:$0xff] %vm2344, %v3527
  %3611 = vst.msk [vmem:[#allocation5 + $0x578] sm:$0xff] %vm2346, %v3548
  %3612 = vst.msk [vmem:[#allocation5 + $0x5d0] sm:$0xff] %vm2344, %v3531
  %3613 = vst.msk [vmem:[#allocation5 + $0x5d8] sm:$0xff] %vm2346, %v3549
  %s3614 = scalar_lea.vmem [#allocation3], 64
  %v3615 = vld [vmem:[%s3614] sm:$0xff]
  %v3616 = vld [vmem:[%s3614 + $0x8] sm:$0xff]
  %v3617 = vld [vmem:[%s3614 + $0x20] sm:$0xff]
  %v3618 = vld [vmem:[%s3614 + $0x28] sm:$0xff]
  %v3619 = vld [vmem:[%s3614 + $0x40] sm:$0xff]
  %v3620 = vld [vmem:[%s3614 + $0x48] sm:$0xff]
  %v3621 = vld [vmem:[%s3614 + $0x60] sm:$0xff]
  %v3622 = vld [vmem:[%s3614 + $0x68] sm:$0xff]
  %v3623 = vld [vmem:[%s3614 + $0x80] sm:$0xff]
  %v3624 = vld [vmem:[%s3614 + $0x88] sm:$0xff]
  %v3625 = vld [vmem:[%s3614 + $0xa0] sm:$0xff]
  %v3626 = vld [vmem:[%s3614 + $0xa8] sm:$0xff]
  %v3627 = vld [vmem:[%s3614 + $0xc0] sm:$0xff]
  %v3628 = vld [vmem:[%s3614 + $0xc8] sm:$0xff]
  %v3629 = vld [vmem:[%s3614 + $0xe0] sm:$0xff]
  %v3630 = vld [vmem:[%s3614 + $0xe8] sm:$0xff]
  %v3631 = vld [vmem:[%s3614 + $0x140] sm:$0xff]
  %v3632 = vld [vmem:[%s3614 + $0x148] sm:$0xff]
  %v3633 = vld [vmem:[%s3614 + $0x160] sm:$0xff]
  %v3634 = vld [vmem:[%s3614 + $0x168] sm:$0xff]
  %v3635 = vld [vmem:[%s3614 + $0x180] sm:$0xff]
  %v3636 = vld [vmem:[%s3614 + $0x188] sm:$0xff]
  %v3637 = vld [vmem:[%s3614 + $0x1a0] sm:$0xff]
  %v3638 = vld [vmem:[%s3614 + $0x1a8] sm:$0xff]
  %v3639 = vld [vmem:[%s3614 + $0x1c0] sm:$0xff]
  %v3640 = vld [vmem:[%s3614 + $0x1c8] sm:$0xff]
  %v3641 = vld [vmem:[%s3614 + $0x1e0] sm:$0xff]
  %v3642 = vld [vmem:[%s3614 + $0x1e8] sm:$0xff]
  %v3643 = vld [vmem:[%s3614 + $0x200] sm:$0xff]
  %v3644 = vld [vmem:[%s3614 + $0x208] sm:$0xff]
  %v3645 = vld [vmem:[%s3614 + $0x220] sm:$0xff]
  %v3646 = vld [vmem:[%s3614 + $0x228] sm:$0xff]
  %3679 = vrot.lane.b32.xlu0 %v3615, 64
  %v3680 = vpop.permute.xlu0 %3679
  %3681 = vrot.lane.b32.xlu0 %v3616, 64
  %v3682 = vpop.permute.xlu0 %3681
  %3683 = vrot.lane.b32.xlu0 %v3617, 64
  %v3684 = vpop.permute.xlu0 %3683
  %3685 = vrot.lane.b32.xlu0 %v3618, 64
  %v3686 = vpop.permute.xlu0 %3685
  %3687 = vrot.lane.b32.xlu0 %v3619, 64
  %v3688 = vpop.permute.xlu0 %3687
  %3689 = vrot.lane.b32.xlu0 %v3620, 64
  %v3690 = vpop.permute.xlu0 %3689
  %3691 = vrot.lane.b32.xlu0 %v3621, 64
  %v3692 = vpop.permute.xlu0 %3691
  %3693 = vrot.lane.b32.xlu0 %v3622, 64
  %v3694 = vpop.permute.xlu0 %3693
  %3695 = vrot.lane.b32.xlu0 %v3623, 64
  %v3696 = vpop.permute.xlu0 %3695
  %3697 = vrot.lane.b32.xlu0 %v3624, 64
  %v3698 = vpop.permute.xlu0 %3697
  %3699 = vrot.lane.b32.xlu0 %v3625, 64
  %v3700 = vpop.permute.xlu0 %3699
  %3701 = vrot.lane.b32.xlu0 %v3626, 64
  %v3702 = vpop.permute.xlu0 %3701
  %3703 = vrot.lane.b32.xlu0 %v3627, 64
  %v3704 = vpop.permute.xlu0 %3703
  %3705 = vrot.lane.b32.xlu0 %v3628, 64
  %v3706 = vpop.permute.xlu0 %3705
  %3707 = vrot.lane.b32.xlu0 %v3629, 64
  %v3708 = vpop.permute.xlu0 %3707
  %3709 = vrot.lane.b32.xlu0 %v3630, 64
  %v3710 = vpop.permute.xlu0 %3709
  %3711 = vrot.lane.b32.xlu0 %v3631, 64
  %v3712 = vpop.permute.xlu0 %3711
  %3713 = vrot.lane.b32.xlu0 %v3632, 64
  %v3714 = vpop.permute.xlu0 %3713
  %3715 = vrot.lane.b32.xlu0 %v3633, 64
  %v3716 = vpop.permute.xlu0 %3715
  %3717 = vrot.lane.b32.xlu0 %v3634, 64
  %v3718 = vpop.permute.xlu0 %3717
  %3719 = vrot.lane.b32.xlu0 %v3635, 64
  %v3720 = vpop.permute.xlu0 %3719
  %3721 = vrot.lane.b32.xlu0 %v3636, 64
  %v3722 = vpop.permute.xlu0 %3721
  %3723 = vrot.lane.b32.xlu0 %v3637, 64
  %v3724 = vpop.permute.xlu0 %3723
  %3725 = vrot.lane.b32.xlu0 %v3638, 64
  %v3726 = vpop.permute.xlu0 %3725
  %3727 = vrot.lane.b32.xlu0 %v3639, 64
  %v3728 = vpop.permute.xlu0 %3727
  %3729 = vrot.lane.b32.xlu0 %v3640, 64
  %v3730 = vpop.permute.xlu0 %3729
  %3731 = vrot.lane.b32.xlu0 %v3641, 64
  %v3732 = vpop.permute.xlu0 %3731
  %3733 = vrot.lane.b32.xlu0 %v3642, 64
  %v3734 = vpop.permute.xlu0 %3733
  %3735 = vrot.lane.b32.xlu0 %v3643, 64
  %v3736 = vpop.permute.xlu0 %3735
  %3737 = vrot.lane.b32.xlu0 %v3644, 64
  %v3738 = vpop.permute.xlu0 %3737
  %3739 = vrot.lane.b32.xlu0 %v3645, 64
  %v3740 = vpop.permute.xlu0 %3739
  %3741 = vrot.lane.b32.xlu0 %v3646, 64
  %v3742 = vpop.permute.xlu0 %3741
  %v3743 = vsel %vm2346, %v3680, %v3682
  %v3744 = vsel %vm2346, %v3684, %v3686
  %v3745 = vsel %vm2346, %v3688, %v3690
  %v3746 = vsel %vm2346, %v3692, %v3694
  %v3747 = vsel %vm2346, %v3696, %v3698
  %v3748 = vsel %vm2346, %v3700, %v3702
  %v3749 = vsel %vm2346, %v3704, %v3706
  %v3750 = vsel %vm2346, %v3708, %v3710
  %v3751 = vsel %vm2346, %v3712, %v3714
  %v3752 = vsel %vm2346, %v3716, %v3718
  %v3753 = vsel %vm2346, %v3720, %v3722
  %v3754 = vsel %vm2346, %v3724, %v3726
  %v3755 = vsel %vm2346, %v3728, %v3730
  %v3756 = vsel %vm2346, %v3732, %v3734
  %v3757 = vsel %vm2346, %v3736, %v3738
  %v3758 = vsel %vm2346, %v3740, %v3742
  %3791 = vst.msk [vmem:[#allocation5 + $0x38] sm:$0xff] %vm2715, %v3680
  %3792 = vst.msk [vmem:[#allocation5 + $0x40] sm:$0xff] %vm2717, %v3743
  %3793 = vst.msk [vmem:[#allocation5 + $0x98] sm:$0xff] %vm2715, %v3684
  %3794 = vst.msk [vmem:[#allocation5 + $0xa0] sm:$0xff] %vm2717, %v3744
  %3795 = vst.msk [vmem:[#allocation5 + $0xf8] sm:$0xff] %vm2715, %v3688
  %3796 = vst.msk [vmem:[#allocation5 + $0x100] sm:$0xff] %vm2717, %v3745
  %3797 = vst.msk [vmem:[#allocation5 + $0x158] sm:$0xff] %vm2715, %v3692
  %3798 = vst.msk [vmem:[#allocation5 + $0x160] sm:$0xff] %vm2717, %v3746
  %3799 = vst.msk [vmem:[#allocation5 + $0x1b8] sm:$0xff] %vm2715, %v3696
  %3800 = vst.msk [vmem:[#allocation5 + $0x1c0] sm:$0xff] %vm2717, %v3747
  %3801 = vst.msk [vmem:[#allocation5 + $0x218] sm:$0xff] %vm2715, %v3700
  %3802 = vst.msk [vmem:[#allocation5 + $0x220] sm:$0xff] %vm2717, %v3748
  %3803 = vst.msk [vmem:[#allocation5 + $0x278] sm:$0xff] %vm2715, %v3704
  %3804 = vst.msk [vmem:[#allocation5 + $0x280] sm:$0xff] %vm2717, %v3749
  %3805 = vst.msk [vmem:[#allocation5 + $0x2d8] sm:$0xff] %vm2715, %v3708
  %3806 = vst.msk [vmem:[#allocation5 + $0x2e0] sm:$0xff] %vm2717, %v3750
  %3807 = vst.msk [vmem:[#allocation5 + $0x338] sm:$0xff] %vm2715, %v3712
  %3808 = vst.msk [vmem:[#allocation5 + $0x340] sm:$0xff] %vm2717, %v3751
  %3809 = vst.msk [vmem:[#allocation5 + $0x398] sm:$0xff] %vm2715, %v3716
  %3810 = vst.msk [vmem:[#allocation5 + $0x3a0] sm:$0xff] %vm2717, %v3752
  %3811 = vst.msk [vmem:[#allocation5 + $0x3f8] sm:$0xff] %vm2715, %v3720
  %3812 = vst.msk [vmem:[#allocation5 + $0x400] sm:$0xff] %vm2717, %v3753
  %3813 = vst.msk [vmem:[#allocation5 + $0x458] sm:$0xff] %vm2715, %v3724
  %3814 = vst.msk [vmem:[#allocation5 + $0x460] sm:$0xff] %vm2717, %v3754
  %3815 = vst.msk [vmem:[#allocation5 + $0x4b8] sm:$0xff] %vm2715, %v3728
  %3816 = vst.msk [vmem:[#allocation5 + $0x4c0] sm:$0xff] %vm2717, %v3755
  %3817 = vst.msk [vmem:[#allocation5 + $0x518] sm:$0xff] %vm2715, %v3732
  %3818 = vst.msk [vmem:[#allocation5 + $0x520] sm:$0xff] %vm2717, %v3756
  %3819 = vst.msk [vmem:[#allocation5 + $0x578] sm:$0xff] %vm2715, %v3736
  %3820 = vst.msk [vmem:[#allocation5 + $0x580] sm:$0xff] %vm2717, %v3757
  %3821 = vst.msk [vmem:[#allocation5 + $0x5d8] sm:$0xff] %vm2715, %v3740
  %3822 = vst.msk [vmem:[#allocation5 + $0x5e0] sm:$0xff] %vm2717, %v3758
  %v3823 = vld [vmem:[%s3614] sm:$0xfe]
  %v3824 = vld [vmem:[%s3614 + $0x8] sm:$0xfe]
  %v3825 = vld [vmem:[%s3614 + $0x10] sm:$0x1]
  %v3826 = vld [vmem:[%s3614 + $0x18] sm:$0x1]
  %v3827 = vld [vmem:[%s3614 + $0x20] sm:$0xfe]
  %v3828 = vld [vmem:[%s3614 + $0x28] sm:$0xfe]
  %v3829 = vld [vmem:[%s3614 + $0x30] sm:$0x1]
  %v3830 = vld [vmem:[%s3614 + $0x38] sm:$0x1]
  %v3831 = vld [vmem:[%s3614 + $0x40] sm:$0xfe]
  %v3832 = vld [vmem:[%s3614 + $0x48] sm:$0xfe]
  %v3833 = vld [vmem:[%s3614 + $0x50] sm:$0x1]
  %v3834 = vld [vmem:[%s3614 + $0x58] sm:$0x1]
  %v3835 = vld [vmem:[%s3614 + $0x60] sm:$0xfe]
  %v3836 = vld [vmem:[%s3614 + $0x68] sm:$0xfe]
  %v3837 = vld [vmem:[%s3614 + $0x70] sm:$0x1]
  %v3838 = vld [vmem:[%s3614 + $0x78] sm:$0x1]
  %v3839 = vld [vmem:[%s3614 + $0x80] sm:$0xfe]
  %v3840 = vld [vmem:[%s3614 + $0x88] sm:$0xfe]
  %v3841 = vld [vmem:[%s3614 + $0x90] sm:$0x1]
  %v3842 = vld [vmem:[%s3614 + $0x98] sm:$0x1]
  %v3843 = vld [vmem:[%s3614 + $0xa0] sm:$0xfe]
  %v3844 = vld [vmem:[%s3614 + $0xa8] sm:$0xfe]
  %v3845 = vld [vmem:[%s3614 + $0xb0] sm:$0x1]
  %v3846 = vld [vmem:[%s3614 + $0xb8] sm:$0x1]
  %v3847 = vld [vmem:[%s3614 + $0xc0] sm:$0xfe]
  %v3848 = vld [vmem:[%s3614 + $0xc8] sm:$0xfe]
  %v3849 = vld [vmem:[%s3614 + $0xd0] sm:$0x1]
  %v3850 = vld [vmem:[%s3614 + $0xd8] sm:$0x1]
  %v3851 = vld [vmem:[%s3614 + $0xe0] sm:$0xfe]
  %v3852 = vld [vmem:[%s3614 + $0xe8] sm:$0xfe]
  %v3853 = vld [vmem:[%s3614 + $0xf0] sm:$0x1]
  %v3854 = vld [vmem:[%s3614 + $0xf8] sm:$0x1]
  %v3855 = vld [vmem:[%s3614 + $0x140] sm:$0xfe]
  %v3856 = vld [vmem:[%s3614 + $0x148] sm:$0xfe]
  %v3857 = vld [vmem:[%s3614 + $0x150] sm:$0x1]
  %v3858 = vld [vmem:[%s3614 + $0x158] sm:$0x1]
  %v3859 = vld [vmem:[%s3614 + $0x160] sm:$0xfe]
  %v3860 = vld [vmem:[%s3614 + $0x168] sm:$0xfe]
  %v3861 = vld [vmem:[%s3614 + $0x170] sm:$0x1]
  %v3862 = vld [vmem:[%s3614 + $0x178] sm:$0x1]
  %v3863 = vld [vmem:[%s3614 + $0x180] sm:$0xfe]
  %v3864 = vld [vmem:[%s3614 + $0x188] sm:$0xfe]
  %v3865 = vld [vmem:[%s3614 + $0x190] sm:$0x1]
  %v3866 = vld [vmem:[%s3614 + $0x198] sm:$0x1]
  %v3867 = vld [vmem:[%s3614 + $0x1a0] sm:$0xfe]
  %v3868 = vld [vmem:[%s3614 + $0x1a8] sm:$0xfe]
  %v3869 = vld [vmem:[%s3614 + $0x1b0] sm:$0x1]
  %v3870 = vld [vmem:[%s3614 + $0x1b8] sm:$0x1]
  %v3871 = vld [vmem:[%s3614 + $0x1c0] sm:$0xfe]
  %v3872 = vld [vmem:[%s3614 + $0x1c8] sm:$0xfe]
  %v3873 = vld [vmem:[%s3614 + $0x1d0] sm:$0x1]
  %v3874 = vld [vmem:[%s3614 + $0x1d8] sm:$0x1]
  %v3875 = vld [vmem:[%s3614 + $0x1e0] sm:$0xfe]
  %v3876 = vld [vmem:[%s3614 + $0x1e8] sm:$0xfe]
  %v3877 = vld [vmem:[%s3614 + $0x1f0] sm:$0x1]
  %v3878 = vld [vmem:[%s3614 + $0x1f8] sm:$0x1]
  %v3879 = vld [vmem:[%s3614 + $0x200] sm:$0xfe]
  %v3880 = vld [vmem:[%s3614 + $0x208] sm:$0xfe]
  %v3881 = vld [vmem:[%s3614 + $0x210] sm:$0x1]
  %v3882 = vld [vmem:[%s3614 + $0x218] sm:$0x1]
  %v3883 = vld [vmem:[%s3614 + $0x220] sm:$0xfe]
  %v3884 = vld [vmem:[%s3614 + $0x228] sm:$0xfe]
  %v3885 = vld [vmem:[%s3614 + $0x230] sm:$0x1]
  %v3886 = vld [vmem:[%s3614 + $0x238] sm:$0x1]
  %v3951 = vrot.slane %v3823, 1
  %v3952 = vrot.slane %v3825, 1
  %v3953 = vsel %vm2135, %v3951, %v3952
  %v3954 = vrot.slane %v3824, 1
  %v3955 = vrot.slane %v3826, 1
  %v3956 = vsel %vm2135, %v3954, %v3955
  %v3957 = vrot.slane %v3827, 1
  %v3958 = vrot.slane %v3829, 1
  %v3959 = vsel %vm2135, %v3957, %v3958
  %v3960 = vrot.slane %v3828, 1
  %v3961 = vrot.slane %v3830, 1
  %v3962 = vsel %vm2135, %v3960, %v3961
  %v3963 = vrot.slane %v3831, 1
  %v3964 = vrot.slane %v3833, 1
  %v3965 = vsel %vm2135, %v3963, %v3964
  %v3966 = vrot.slane %v3832, 1
  %v3967 = vrot.slane %v3834, 1
  %v3968 = vsel %vm2135, %v3966, %v3967
  %v3969 = vrot.slane %v3835, 1
  %v3970 = vrot.slane %v3837, 1
  %v3971 = vsel %vm2135, %v3969, %v3970
  %v3972 = vrot.slane %v3836, 1
  %v3973 = vrot.slane %v3838, 1
  %v3974 = vsel %vm2135, %v3972, %v3973
  %v3975 = vrot.slane %v3839, 1
  %v3976 = vrot.slane %v3841, 1
  %v3977 = vsel %vm2135, %v3975, %v3976
  %v3978 = vrot.slane %v3840, 1
  %v3979 = vrot.slane %v3842, 1
  %v3980 = vsel %vm2135, %v3978, %v3979
  %v3981 = vrot.slane %v3843, 1
  %v3982 = vrot.slane %v3845, 1
  %v3983 = vsel %vm2135, %v3981, %v3982
  %v3984 = vrot.slane %v3844, 1
  %v3985 = vrot.slane %v3846, 1
  %v3986 = vsel %vm2135, %v3984, %v3985
  %v3987 = vrot.slane %v3847, 1
  %v3988 = vrot.slane %v3849, 1
  %v3989 = vsel %vm2135, %v3987, %v3988
  %v3990 = vrot.slane %v3848, 1
  %v3991 = vrot.slane %v3850, 1
  %v3992 = vsel %vm2135, %v3990, %v3991
  %v3993 = vrot.slane %v3851, 1
  %v3994 = vrot.slane %v3853, 1
  %v3995 = vsel %vm2135, %v3993, %v3994
  %v3996 = vrot.slane %v3852, 1
  %v3997 = vrot.slane %v3854, 1
  %v3998 = vsel %vm2135, %v3996, %v3997
  %v3999 = vrot.slane %v3855, 1
  %v4000 = vrot.slane %v3857, 1
  %v4001 = vsel %vm2135, %v3999, %v4000
  %v4002 = vrot.slane %v3856, 1
  %v4003 = vrot.slane %v3858, 1
  %v4004 = vsel %vm2135, %v4002, %v4003
  %v4005 = vrot.slane %v3859, 1
  %v4006 = vrot.slane %v3861, 1
  %v4007 = vsel %vm2135, %v4005, %v4006
  %v4008 = vrot.slane %v3860, 1
  %v4009 = vrot.slane %v3862, 1
  %v4010 = vsel %vm2135, %v4008, %v4009
  %v4011 = vrot.slane %v3863, 1
  %v4012 = vrot.slane %v3865, 1
  %v4013 = vsel %vm2135, %v4011, %v4012
  %v4014 = vrot.slane %v3864, 1
  %v4015 = vrot.slane %v3866, 1
  %v4016 = vsel %vm2135, %v4014, %v4015
  %v4017 = vrot.slane %v3867, 1
  %v4018 = vrot.slane %v3869, 1
  %v4019 = vsel %vm2135, %v4017, %v4018
  %v4020 = vrot.slane %v3868, 1
  %v4021 = vrot.slane %v3870, 1
  %v4022 = vsel %vm2135, %v4020, %v4021
  %v4023 = vrot.slane %v3871, 1
  %v4024 = vrot.slane %v3873, 1
  %v4025 = vsel %vm2135, %v4023, %v4024
  %v4026 = vrot.slane %v3872, 1
  %v4027 = vrot.slane %v3874, 1
  %v4028 = vsel %vm2135, %v4026, %v4027
  %v4029 = vrot.slane %v3875, 1
  %v4030 = vrot.slane %v3877, 1
  %v4031 = vsel %vm2135, %v4029, %v4030
  %v4032 = vrot.slane %v3876, 1
  %v4033 = vrot.slane %v3878, 1
  %v4034 = vsel %vm2135, %v4032, %v4033
  %v4035 = vrot.slane %v3879, 1
  %v4036 = vrot.slane %v3881, 1
  %v4037 = vsel %vm2135, %v4035, %v4036
  %v4038 = vrot.slane %v3880, 1
  %v4039 = vrot.slane %v3882, 1
  %v4040 = vsel %vm2135, %v4038, %v4039
  %v4041 = vrot.slane %v3883, 1
  %v4042 = vrot.slane %v3885, 1
  %v4043 = vsel %vm2135, %v4041, %v4042
  %v4044 = vrot.slane %v3884, 1
  %v4045 = vrot.slane %v3886, 1
  %v4046 = vsel %vm2135, %v4044, %v4045
  %4047 = vrot.lane.b32.xlu0 %v3953, 96
  %v4048 = vpop.permute.xlu0 %4047
  %4049 = vrot.lane.b32.xlu0 %v3956, 96
  %v4050 = vpop.permute.xlu0 %4049
  %4051 = vrot.lane.b32.xlu0 %v3959, 96
  %v4052 = vpop.permute.xlu0 %4051
  %4053 = vrot.lane.b32.xlu0 %v3962, 96
  %v4054 = vpop.permute.xlu0 %4053
  %4055 = vrot.lane.b32.xlu0 %v3965, 96
  %v4056 = vpop.permute.xlu0 %4055
  %4057 = vrot.lane.b32.xlu0 %v3968, 96
  %v4058 = vpop.permute.xlu0 %4057
  %4059 = vrot.lane.b32.xlu0 %v3971, 96
  %v4060 = vpop.permute.xlu0 %4059
  %4061 = vrot.lane.b32.xlu0 %v3974, 96
  %v4062 = vpop.permute.xlu0 %4061
  %4063 = vrot.lane.b32.xlu0 %v3977, 96
  %v4064 = vpop.permute.xlu0 %4063
  %4065 = vrot.lane.b32.xlu0 %v3980, 96
  %v4066 = vpop.permute.xlu0 %4065
  %4067 = vrot.lane.b32.xlu0 %v3983, 96
  %v4068 = vpop.permute.xlu0 %4067
  %4069 = vrot.lane.b32.xlu0 %v3986, 96
  %v4070 = vpop.permute.xlu0 %4069
  %4071 = vrot.lane.b32.xlu0 %v3989, 96
  %v4072 = vpop.permute.xlu0 %4071
  %4073 = vrot.lane.b32.xlu0 %v3992, 96
  %v4074 = vpop.permute.xlu0 %4073
  %4075 = vrot.lane.b32.xlu0 %v3995, 96
  %v4076 = vpop.permute.xlu0 %4075
  %4077 = vrot.lane.b32.xlu0 %v3998, 96
  %v4078 = vpop.permute.xlu0 %4077
  %4079 = vrot.lane.b32.xlu0 %v4001, 96
  %v4080 = vpop.permute.xlu0 %4079
  %4081 = vrot.lane.b32.xlu0 %v4004, 96
  %v4082 = vpop.permute.xlu0 %4081
  %4083 = vrot.lane.b32.xlu0 %v4007, 96
  %v4084 = vpop.permute.xlu0 %4083
  %4085 = vrot.lane.b32.xlu0 %v4010, 96
  %v4086 = vpop.permute.xlu0 %4085
  %4087 = vrot.lane.b32.xlu0 %v4013, 96
  %v4088 = vpop.permute.xlu0 %4087
  %4089 = vrot.lane.b32.xlu0 %v4016, 96
  %v4090 = vpop.permute.xlu0 %4089
  %4091 = vrot.lane.b32.xlu0 %v4019, 96
  %v4092 = vpop.permute.xlu0 %4091
  %4093 = vrot.lane.b32.xlu0 %v4022, 96
  %v4094 = vpop.permute.xlu0 %4093
  %4095 = vrot.lane.b32.xlu0 %v4025, 96
  %v4096 = vpop.permute.xlu0 %4095
  %4097 = vrot.lane.b32.xlu0 %v4028, 96
  %v4098 = vpop.permute.xlu0 %4097
  %4099 = vrot.lane.b32.xlu0 %v4031, 96
  %v4100 = vpop.permute.xlu0 %4099
  %4101 = vrot.lane.b32.xlu0 %v4034, 96
  %v4102 = vpop.permute.xlu0 %4101
  %4103 = vrot.lane.b32.xlu0 %v4037, 96
  %v4104 = vpop.permute.xlu0 %4103
  %4105 = vrot.lane.b32.xlu0 %v4040, 96
  %v4106 = vpop.permute.xlu0 %4105
  %4107 = vrot.lane.b32.xlu0 %v4043, 96
  %v4108 = vpop.permute.xlu0 %4107
  %4109 = vrot.lane.b32.xlu0 %v4046, 96
  %v4110 = vpop.permute.xlu0 %4109
  %v4111 = vsel %vm2717, %v4048, %v4050
  %v4112 = vsel %vm2717, %v4052, %v4054
  %v4113 = vsel %vm2717, %v4056, %v4058
  %v4114 = vsel %vm2717, %v4060, %v4062
  %v4115 = vsel %vm2717, %v4064, %v4066
  %v4116 = vsel %vm2717, %v4068, %v4070
  %v4117 = vsel %vm2717, %v4072, %v4074
  %v4118 = vsel %vm2717, %v4076, %v4078
  %v4119 = vsel %vm2717, %v4080, %v4082
  %v4120 = vsel %vm2717, %v4084, %v4086
  %v4121 = vsel %vm2717, %v4088, %v4090
  %v4122 = vsel %vm2717, %v4092, %v4094
  %v4123 = vsel %vm2717, %v4096, %v4098
  %v4124 = vsel %vm2717, %v4100, %v4102
  %v4125 = vsel %vm2717, %v4104, %v4106
  %v4126 = vsel %vm2717, %v4108, %v4110
  %4159 = vst.msk [vmem:[#allocation5 + $0x40] sm:$0xff] %vm2925, %v4048
  %4160 = vst [vmem:[#allocation5 + $0x48] sm:$0xff] %v4111
  %4161 = vst.msk [vmem:[#allocation5 + $0xa0] sm:$0xff] %vm2925, %v4052
  %4162 = vst [vmem:[#allocation5 + $0xa8] sm:$0xff] %v4112
  %4163 = vst.msk [vmem:[#allocation5 + $0x100] sm:$0xff] %vm2925, %v4056
  %4164 = vst [vmem:[#allocation5 + $0x108] sm:$0xff] %v4113
  %4165 = vst.msk [vmem:[#allocation5 + $0x160] sm:$0xff] %vm2925, %v4060
  %4166 = vst [vmem:[#allocation5 + $0x168] sm:$0xff] %v4114
  %4167 = vst.msk [vmem:[#allocation5 + $0x1c0] sm:$0xff] %vm2925, %v4064
  %4168 = vst [vmem:[#allocation5 + $0x1c8] sm:$0xff] %v4115
  %4169 = vst.msk [vmem:[#allocation5 + $0x220] sm:$0xff] %vm2925, %v4068
  %4170 = vst [vmem:[#allocation5 + $0x228] sm:$0xff] %v4116
  %4171 = vst.msk [vmem:[#allocation5 + $0x280] sm:$0xff] %vm2925, %v4072
  %4172 = vst [vmem:[#allocation5 + $0x288] sm:$0xff] %v4117
  %4173 = vst.msk [vmem:[#allocation5 + $0x2e0] sm:$0xff] %vm2925, %v4076
  %4174 = vst [vmem:[#allocation5 + $0x2e8] sm:$0xff] %v4118
  %4175 = vst.msk [vmem:[#allocation5 + $0x340] sm:$0xff] %vm2925, %v4080
  %4176 = vst [vmem:[#allocation5 + $0x348] sm:$0xff] %v4119
  %4177 = vst.msk [vmem:[#allocation5 + $0x3a0] sm:$0xff] %vm2925, %v4084
  %4178 = vst [vmem:[#allocation5 + $0x3a8] sm:$0xff] %v4120
  %4179 = vst.msk [vmem:[#allocation5 + $0x400] sm:$0xff] %vm2925, %v4088
  %4180 = vst [vmem:[#allocation5 + $0x408] sm:$0xff] %v4121
  %4181 = vst.msk [vmem:[#allocation5 + $0x460] sm:$0xff] %vm2925, %v4092
  %4182 = vst [vmem:[#allocation5 + $0x468] sm:$0xff] %v4122
  %4183 = vst.msk [vmem:[#allocation5 + $0x4c0] sm:$0xff] %vm2925, %v4096
  %4184 = vst [vmem:[#allocation5 + $0x4c8] sm:$0xff] %v4123
  %4185 = vst.msk [vmem:[#allocation5 + $0x520] sm:$0xff] %vm2925, %v4100
  %4186 = vst [vmem:[#allocation5 + $0x528] sm:$0xff] %v4124
  %4187 = vst.msk [vmem:[#allocation5 + $0x580] sm:$0xff] %vm2925, %v4104
  %4188 = vst [vmem:[#allocation5 + $0x588] sm:$0xff] %v4125
  %4189 = vst.msk [vmem:[#allocation5 + $0x5e0] sm:$0xff] %vm2925, %v4108
  %4190 = vst [vmem:[#allocation5 + $0x5e8] sm:$0xff] %v4126
  %v4191 = vld [vmem:[%s3614] sm:$0xfc]
  %v4192 = vld [vmem:[%s3614 + $0x8] sm:$0xfc]
  %v4193 = vld [vmem:[%s3614 + $0x10] sm:$0x3]
  %v4194 = vld [vmem:[%s3614 + $0x18] sm:$0x3]
  %v4195 = vld [vmem:[%s3614 + $0x20] sm:$0xfc]
  %v4196 = vld [vmem:[%s3614 + $0x28] sm:$0xfc]
  %v4197 = vld [vmem:[%s3614 + $0x30] sm:$0x3]
  %v4198 = vld [vmem:[%s3614 + $0x38] sm:$0x3]
  %v4199 = vld [vmem:[%s3614 + $0x40] sm:$0xfc]
  %v4200 = vld [vmem:[%s3614 + $0x48] sm:$0xfc]
  %v4201 = vld [vmem:[%s3614 + $0x50] sm:$0x3]
  %v4202 = vld [vmem:[%s3614 + $0x58] sm:$0x3]
  %v4203 = vld [vmem:[%s3614 + $0x60] sm:$0xfc]
  %v4204 = vld [vmem:[%s3614 + $0x68] sm:$0xfc]
  %v4205 = vld [vmem:[%s3614 + $0x70] sm:$0x3]
  %v4206 = vld [vmem:[%s3614 + $0x78] sm:$0x3]
  %v4207 = vld [vmem:[%s3614 + $0x80] sm:$0xfc]
  %v4208 = vld [vmem:[%s3614 + $0x88] sm:$0xfc]
  %v4209 = vld [vmem:[%s3614 + $0x90] sm:$0x3]
  %v4210 = vld [vmem:[%s3614 + $0x98] sm:$0x3]
  %v4211 = vld [vmem:[%s3614 + $0xa0] sm:$0xfc]
  %v4212 = vld [vmem:[%s3614 + $0xa8] sm:$0xfc]
  %v4213 = vld [vmem:[%s3614 + $0xb0] sm:$0x3]
  %v4214 = vld [vmem:[%s3614 + $0xb8] sm:$0x3]
  %v4215 = vld [vmem:[%s3614 + $0xc0] sm:$0xfc]
  %v4216 = vld [vmem:[%s3614 + $0xc8] sm:$0xfc]
  %v4217 = vld [vmem:[%s3614 + $0xd0] sm:$0x3]
  %v4218 = vld [vmem:[%s3614 + $0xd8] sm:$0x3]
  %v4219 = vld [vmem:[%s3614 + $0xe0] sm:$0xfc]
  %v4220 = vld [vmem:[%s3614 + $0xe8] sm:$0xfc]
  %v4221 = vld [vmem:[%s3614 + $0xf0] sm:$0x3]
  %v4222 = vld [vmem:[%s3614 + $0xf8] sm:$0x3]
  %v4223 = vld [vmem:[%s3614 + $0x140] sm:$0xfc]
  %v4224 = vld [vmem:[%s3614 + $0x148] sm:$0xfc]
  %v4225 = vld [vmem:[%s3614 + $0x150] sm:$0x3]
  %v4226 = vld [vmem:[%s3614 + $0x158] sm:$0x3]
  %v4227 = vld [vmem:[%s3614 + $0x160] sm:$0xfc]
  %v4228 = vld [vmem:[%s3614 + $0x168] sm:$0xfc]
  %v4229 = vld [vmem:[%s3614 + $0x170] sm:$0x3]
  %v4230 = vld [vmem:[%s3614 + $0x178] sm:$0x3]
  %v4231 = vld [vmem:[%s3614 + $0x180] sm:$0xfc]
  %v4232 = vld [vmem:[%s3614 + $0x188] sm:$0xfc]
  %v4233 = vld [vmem:[%s3614 + $0x190] sm:$0x3]
  %v4234 = vld [vmem:[%s3614 + $0x198] sm:$0x3]
  %v4235 = vld [vmem:[%s3614 + $0x1a0] sm:$0xfc]
  %v4236 = vld [vmem:[%s3614 + $0x1a8] sm:$0xfc]
  %v4237 = vld [vmem:[%s3614 + $0x1b0] sm:$0x3]
  %v4238 = vld [vmem:[%s3614 + $0x1b8] sm:$0x3]
  %v4239 = vld [vmem:[%s3614 + $0x1c0] sm:$0xfc]
  %v4240 = vld [vmem:[%s3614 + $0x1c8] sm:$0xfc]
  %v4241 = vld [vmem:[%s3614 + $0x1d0] sm:$0x3]
  %v4242 = vld [vmem:[%s3614 + $0x1d8] sm:$0x3]
  %v4243 = vld [vmem:[%s3614 + $0x1e0] sm:$0xfc]
  %v4244 = vld [vmem:[%s3614 + $0x1e8] sm:$0xfc]
  %v4245 = vld [vmem:[%s3614 + $0x1f0] sm:$0x3]
  %v4246 = vld [vmem:[%s3614 + $0x1f8] sm:$0x3]
  %v4247 = vld [vmem:[%s3614 + $0x200] sm:$0xfc]
  %v4248 = vld [vmem:[%s3614 + $0x208] sm:$0xfc]
  %v4249 = vld [vmem:[%s3614 + $0x210] sm:$0x3]
  %v4250 = vld [vmem:[%s3614 + $0x218] sm:$0x3]
  %v4251 = vld [vmem:[%s3614 + $0x220] sm:$0xfc]
  %v4252 = vld [vmem:[%s3614 + $0x228] sm:$0xfc]
  %v4253 = vld [vmem:[%s3614 + $0x230] sm:$0x3]
  %v4254 = vld [vmem:[%s3614 + $0x238] sm:$0x3]
  %v4319 = vrot.slane %v4191, 2
  %v4320 = vrot.slane %v4193, 2
  %v4321 = vsel %vm2506, %v4319, %v4320
  %v4322 = vrot.slane %v4192, 2
  %v4323 = vrot.slane %v4194, 2
  %v4324 = vsel %vm2506, %v4322, %v4323
  %v4325 = vrot.slane %v4195, 2
  %v4326 = vrot.slane %v4197, 2
  %v4327 = vsel %vm2506, %v4325, %v4326
  %v4328 = vrot.slane %v4196, 2
  %v4329 = vrot.slane %v4198, 2
  %v4330 = vsel %vm2506, %v4328, %v4329
  %v4331 = vrot.slane %v4199, 2
  %v4332 = vrot.slane %v4201, 2
  %v4333 = vsel %vm2506, %v4331, %v4332
  %v4334 = vrot.slane %v4200, 2
  %v4335 = vrot.slane %v4202, 2
  %v4336 = vsel %vm2506, %v4334, %v4335
  %v4337 = vrot.slane %v4203, 2
  %v4338 = vrot.slane %v4205, 2
  %v4339 = vsel %vm2506, %v4337, %v4338
  %v4340 = vrot.slane %v4204, 2
  %v4341 = vrot.slane %v4206, 2
  %v4342 = vsel %vm2506, %v4340, %v4341
  %v4343 = vrot.slane %v4207, 2
  %v4344 = vrot.slane %v4209, 2
  %v4345 = vsel %vm2506, %v4343, %v4344
  %v4346 = vrot.slane %v4208, 2
  %v4347 = vrot.slane %v4210, 2
  %v4348 = vsel %vm2506, %v4346, %v4347
  %v4349 = vrot.slane %v4211, 2
  %v4350 = vrot.slane %v4213, 2
  %v4351 = vsel %vm2506, %v4349, %v4350
  %v4352 = vrot.slane %v4212, 2
  %v4353 = vrot.slane %v4214, 2
  %v4354 = vsel %vm2506, %v4352, %v4353
  %v4355 = vrot.slane %v4215, 2
  %v4356 = vrot.slane %v4217, 2
  %v4357 = vsel %vm2506, %v4355, %v4356
  %v4358 = vrot.slane %v4216, 2
  %v4359 = vrot.slane %v4218, 2
  %v4360 = vsel %vm2506, %v4358, %v4359
  %v4361 = vrot.slane %v4219, 2
  %v4362 = vrot.slane %v4221, 2
  %v4363 = vsel %vm2506, %v4361, %v4362
  %v4364 = vrot.slane %v4220, 2
  %v4365 = vrot.slane %v4222, 2
  %v4366 = vsel %vm2506, %v4364, %v4365
  %v4367 = vrot.slane %v4223, 2
  %v4368 = vrot.slane %v4225, 2
  %v4369 = vsel %vm2506, %v4367, %v4368
  %v4370 = vrot.slane %v4224, 2
  %v4371 = vrot.slane %v4226, 2
  %v4372 = vsel %vm2506, %v4370, %v4371
  %v4373 = vrot.slane %v4227, 2
  %v4374 = vrot.slane %v4229, 2
  %v4375 = vsel %vm2506, %v4373, %v4374
  %v4376 = vrot.slane %v4228, 2
  %v4377 = vrot.slane %v4230, 2
  %v4378 = vsel %vm2506, %v4376, %v4377
  %v4379 = vrot.slane %v4231, 2
  %v4380 = vrot.slane %v4233, 2
  %v4381 = vsel %vm2506, %v4379, %v4380
  %v4382 = vrot.slane %v4232, 2
  %v4383 = vrot.slane %v4234, 2
  %v4384 = vsel %vm2506, %v4382, %v4383
  %v4385 = vrot.slane %v4235, 2
  %v4386 = vrot.slane %v4237, 2
  %v4387 = vsel %vm2506, %v4385, %v4386
  %v4388 = vrot.slane %v4236, 2
  %v4389 = vrot.slane %v4238, 2
  %v4390 = vsel %vm2506, %v4388, %v4389
  %v4391 = vrot.slane %v4239, 2
  %v4392 = vrot.slane %v4241, 2
  %v4393 = vsel %vm2506, %v4391, %v4392
  %v4394 = vrot.slane %v4240, 2
  %v4395 = vrot.slane %v4242, 2
  %v4396 = vsel %vm2506, %v4394, %v4395
  %v4397 = vrot.slane %v4243, 2
  %v4398 = vrot.slane %v4245, 2
  %v4399 = vsel %vm2506, %v4397, %v4398
  %v4400 = vrot.slane %v4244, 2
  %v4401 = vrot.slane %v4246, 2
  %v4402 = vsel %vm2506, %v4400, %v4401
  %v4403 = vrot.slane %v4247, 2
  %v4404 = vrot.slane %v4249, 2
  %v4405 = vsel %vm2506, %v4403, %v4404
  %v4406 = vrot.slane %v4248, 2
  %v4407 = vrot.slane %v4250, 2
  %v4408 = vsel %vm2506, %v4406, %v4407
  %v4409 = vrot.slane %v4251, 2
  %v4410 = vrot.slane %v4253, 2
  %v4411 = vsel %vm2506, %v4409, %v4410
  %v4412 = vrot.slane %v4252, 2
  %v4413 = vrot.slane %v4254, 2
  %v4414 = vsel %vm2506, %v4412, %v4413
  %4447 = vst [vmem:[#allocation5 + $0x50] sm:$0xff] %v4321
  %4448 = vst.msk [vmem:[#allocation5 + $0x58] sm:$0xff] %vm503, %v4324
  %4449 = vst [vmem:[#allocation5 + $0xb0] sm:$0xff] %v4327
  %4450 = vst.msk [vmem:[#allocation5 + $0xb8] sm:$0xff] %vm503, %v4330
  %4451 = vst [vmem:[#allocation5 + $0x110] sm:$0xff] %v4333
  %4452 = vst.msk [vmem:[#allocation5 + $0x118] sm:$0xff] %vm503, %v4336
  %4453 = vst [vmem:[#allocation5 + $0x170] sm:$0xff] %v4339
  %4454 = vst.msk [vmem:[#allocation5 + $0x178] sm:$0xff] %vm503, %v4342
  %4455 = vst [vmem:[#allocation5 + $0x1d0] sm:$0xff] %v4345
  %4456 = vst.msk [vmem:[#allocation5 + $0x1d8] sm:$0xff] %vm503, %v4348
  %4457 = vst [vmem:[#allocation5 + $0x230] sm:$0xff] %v4351
  %4458 = vst.msk [vmem:[#allocation5 + $0x238] sm:$0xff] %vm503, %v4354
  %4459 = vst [vmem:[#allocation5 + $0x290] sm:$0xff] %v4357
  %4460 = vst.msk [vmem:[#allocation5 + $0x298] sm:$0xff] %vm503, %v4360
  %4461 = vst [vmem:[#allocation5 + $0x2f0] sm:$0xff] %v4363
  %4462 = vst.msk [vmem:[#allocation5 + $0x2f8] sm:$0xff] %vm503, %v4366
  %4463 = vst [vmem:[#allocation5 + $0x350] sm:$0xff] %v4369
  %4464 = vst.msk [vmem:[#allocation5 + $0x358] sm:$0xff] %vm503, %v4372
  %4465 = vst [vmem:[#allocation5 + $0x3b0] sm:$0xff] %v4375
  %4466 = vst.msk [vmem:[#allocation5 + $0x3b8] sm:$0xff] %vm503, %v4378
  %4467 = vst [vmem:[#allocation5 + $0x410] sm:$0xff] %v4381
  %4468 = vst.msk [vmem:[#allocation5 + $0x418] sm:$0xff] %vm503, %v4384
  %4469 = vst [vmem:[#allocation5 + $0x470] sm:$0xff] %v4387
  %4470 = vst.msk [vmem:[#allocation5 + $0x478] sm:$0xff] %vm503, %v4390
  %4471 = vst [vmem:[#allocation5 + $0x4d0] sm:$0xff] %v4393
  %4472 = vst.msk [vmem:[#allocation5 + $0x4d8] sm:$0xff] %vm503, %v4396
  %4473 = vst [vmem:[#allocation5 + $0x530] sm:$0xff] %v4399
  %4474 = vst.msk [vmem:[#allocation5 + $0x538] sm:$0xff] %vm503, %v4402
  %4475 = vst [vmem:[#allocation5 + $0x590] sm:$0xff] %v4405
  %4476 = vst.msk [vmem:[#allocation5 + $0x598] sm:$0xff] %vm503, %v4408
  %4477 = vst [vmem:[#allocation5 + $0x5f0] sm:$0xff] %v4411
  %4478 = vst.msk [vmem:[#allocation5 + $0x5f8] sm:$0xff] %vm503, %v4414
  %v4479 = vld [vmem:[#allocation5] sm:$0xff]
  %v4480 = vld [vmem:[#allocation5 + $0x8] sm:$0xff]
  %v4481 = vld [vmem:[#allocation5 + $0x10] sm:$0xff]
  %v4482 = vld [vmem:[#allocation5 + $0x18] sm:$0xff]
  %v4483 = vld [vmem:[#allocation5 + $0x20] sm:$0xff]
  %v4484 = vld [vmem:[#allocation5 + $0x28] sm:$0xff]
  %v4485 = vld [vmem:[#allocation5 + $0x30] sm:$0xff]
  %v4486 = vld [vmem:[#allocation5 + $0x38] sm:$0xff]
  %v4487 = vld [vmem:[#allocation5 + $0x40] sm:$0xff]
  %v4488 = vld [vmem:[#allocation5 + $0x48] sm:$0xff]
  %v4489 = vld [vmem:[#allocation5 + $0x50] sm:$0xff]
  %v4490 = vld [vmem:[#allocation5 + $0x58] sm:$0xff]
  %v4491 = vld [vmem:[#allocation5 + $0x60] sm:$0xff]
  %v4492 = vld [vmem:[#allocation5 + $0x68] sm:$0xff]
  %v4493 = vld [vmem:[#allocation5 + $0x70] sm:$0xff]
  %v4494 = vld [vmem:[#allocation5 + $0x78] sm:$0xff]
  %v4495 = vld [vmem:[#allocation5 + $0x80] sm:$0xff]
  %v4496 = vld [vmem:[#allocation5 + $0x88] sm:$0xff]
  %v4497 = vld [vmem:[#allocation5 + $0x90] sm:$0xff]
  %v4498 = vld [vmem:[#allocation5 + $0x98] sm:$0xff]
  %v4499 = vld [vmem:[#allocation5 + $0xa0] sm:$0xff]
  %v4500 = vld [vmem:[#allocation5 + $0xa8] sm:$0xff]
  %v4501 = vld [vmem:[#allocation5 + $0xb0] sm:$0xff]
  %v4502 = vld [vmem:[#allocation5 + $0xb8] sm:$0xff]
  %v4503 = vld [vmem:[#allocation5 + $0xc0] sm:$0xff]
  %v4504 = vld [vmem:[#allocation5 + $0xc8] sm:$0xff]
  %v4505 = vld [vmem:[#allocation5 + $0xd0] sm:$0xff]
  %v4506 = vld [vmem:[#allocation5 + $0xd8] sm:$0xff]
  %v4507 = vld [vmem:[#allocation5 + $0xe0] sm:$0xff]
  %v4508 = vld [vmem:[#allocation5 + $0xe8] sm:$0xff]
  %v4509 = vld [vmem:[#allocation5 + $0xf0] sm:$0xff]
  %v4510 = vld [vmem:[#allocation5 + $0xf8] sm:$0xff]
  %v4511 = vld [vmem:[#allocation5 + $0x100] sm:$0xff]
  %v4512 = vld [vmem:[#allocation5 + $0x108] sm:$0xff]
  %v4513 = vld [vmem:[#allocation5 + $0x110] sm:$0xff]
  %v4514 = vld [vmem:[#allocation5 + $0x118] sm:$0xff]
  %v4515 = vld [vmem:[#allocation5 + $0x120] sm:$0xff]
  %v4516 = vld [vmem:[#allocation5 + $0x128] sm:$0xff]
  %v4517 = vld [vmem:[#allocation5 + $0x130] sm:$0xff]
  %v4518 = vld [vmem:[#allocation5 + $0x138] sm:$0xff]
  %v4519 = vld [vmem:[#allocation5 + $0x140] sm:$0xff]
  %v4520 = vld [vmem:[#allocation5 + $0x148] sm:$0xff]
  %v4521 = vld [vmem:[#allocation5 + $0x150] sm:$0xff]
  %v4522 = vld [vmem:[#allocation5 + $0x158] sm:$0xff]
  %v4523 = vld [vmem:[#allocation5 + $0x160] sm:$0xff]
  %v4524 = vld [vmem:[#allocation5 + $0x168] sm:$0xff]
  %v4525 = vld [vmem:[#allocation5 + $0x170] sm:$0xff]
  %v4526 = vld [vmem:[#allocation5 + $0x178] sm:$0xff]
  %v4527 = vld [vmem:[#allocation5 + $0x180] sm:$0xff]
  %v4528 = vld [vmem:[#allocation5 + $0x188] sm:$0xff]
  %v4529 = vld [vmem:[#allocation5 + $0x190] sm:$0xff]
  %v4530 = vld [vmem:[#allocation5 + $0x198] sm:$0xff]
  %v4531 = vld [vmem:[#allocation5 + $0x1a0] sm:$0xff]
  %v4532 = vld [vmem:[#allocation5 + $0x1a8] sm:$0xff]
  %v4533 = vld [vmem:[#allocation5 + $0x1b0] sm:$0xff]
  %v4534 = vld [vmem:[#allocation5 + $0x1b8] sm:$0xff]
  %v4535 = vld [vmem:[#allocation5 + $0x1c0] sm:$0xff]
  %v4536 = vld [vmem:[#allocation5 + $0x1c8] sm:$0xff]
  %v4537 = vld [vmem:[#allocation5 + $0x1d0] sm:$0xff]
  %v4538 = vld [vmem:[#allocation5 + $0x1d8] sm:$0xff]
  %v4539 = vld [vmem:[#allocation5 + $0x1e0] sm:$0xff]
  %v4540 = vld [vmem:[#allocation5 + $0x1e8] sm:$0xff]
  %v4541 = vld [vmem:[#allocation5 + $0x1f0] sm:$0xff]
  %v4542 = vld [vmem:[#allocation5 + $0x1f8] sm:$0xff]
  %v4543 = vld [vmem:[#allocation5 + $0x200] sm:$0xff]
  %v4544 = vld [vmem:[#allocation5 + $0x208] sm:$0xff]
  %v4545 = vld [vmem:[#allocation5 + $0x210] sm:$0xff]
  %v4546 = vld [vmem:[#allocation5 + $0x218] sm:$0xff]
  %v4547 = vld [vmem:[#allocation5 + $0x220] sm:$0xff]
  %v4548 = vld [vmem:[#allocation5 + $0x228] sm:$0xff]
  %v4549 = vld [vmem:[#allocation5 + $0x230] sm:$0xff]
  %v4550 = vld [vmem:[#allocation5 + $0x238] sm:$0xff]
  %v4551 = vld [vmem:[#allocation5 + $0x240] sm:$0xff]
  %v4552 = vld [vmem:[#allocation5 + $0x248] sm:$0xff]
  %v4553 = vld [vmem:[#allocation5 + $0x250] sm:$0xff]
  %v4554 = vld [vmem:[#allocation5 + $0x258] sm:$0xff]
  %v4555 = vld [vmem:[#allocation5 + $0x260] sm:$0xff]
  %v4556 = vld [vmem:[#allocation5 + $0x268] sm:$0xff]
  %v4557 = vld [vmem:[#allocation5 + $0x270] sm:$0xff]
  %v4558 = vld [vmem:[#allocation5 + $0x278] sm:$0xff]
  %v4559 = vld [vmem:[#allocation5 + $0x280] sm:$0xff]
  %v4560 = vld [vmem:[#allocation5 + $0x288] sm:$0xff]
  %v4561 = vld [vmem:[#allocation5 + $0x290] sm:$0xff]
  %v4562 = vld [vmem:[#allocation5 + $0x298] sm:$0xff]
  %v4563 = vld [vmem:[#allocation5 + $0x2a0] sm:$0xff]
  %v4564 = vld [vmem:[#allocation5 + $0x2a8] sm:$0xff]
  %v4565 = vld [vmem:[#allocation5 + $0x2b0] sm:$0xff]
  %v4566 = vld [vmem:[#allocation5 + $0x2b8] sm:$0xff]
  %v4567 = vld [vmem:[#allocation5 + $0x2c0] sm:$0xff]
  %v4568 = vld [vmem:[#allocation5 + $0x2c8] sm:$0xff]
  %v4569 = vld [vmem:[#allocation5 + $0x2d0] sm:$0xff]
  %v4570 = vld [vmem:[#allocation5 + $0x2d8] sm:$0xff]
  %v4571 = vld [vmem:[#allocation5 + $0x2e0] sm:$0xff]
  %v4572 = vld [vmem:[#allocation5 + $0x2e8] sm:$0xff]
  %v4573 = vld [vmem:[#allocation5 + $0x2f0] sm:$0xff]
  %v4574 = vld [vmem:[#allocation5 + $0x2f8] sm:$0xff]
  %v4575 = vld [vmem:[#allocation5 + $0x300] sm:$0xff]
  %v4576 = vld [vmem:[#allocation5 + $0x308] sm:$0xff]
  %v4577 = vld [vmem:[#allocation5 + $0x310] sm:$0xff]
  %v4578 = vld [vmem:[#allocation5 + $0x318] sm:$0xff]
  %v4579 = vld [vmem:[#allocation5 + $0x320] sm:$0xff]
  %v4580 = vld [vmem:[#allocation5 + $0x328] sm:$0xff]
  %v4581 = vld [vmem:[#allocation5 + $0x330] sm:$0xff]
  %v4582 = vld [vmem:[#allocation5 + $0x338] sm:$0xff]
  %v4583 = vld [vmem:[#allocation5 + $0x340] sm:$0xff]
  %v4584 = vld [vmem:[#allocation5 + $0x348] sm:$0xff]
  %v4585 = vld [vmem:[#allocation5 + $0x350] sm:$0xff]
  %v4586 = vld [vmem:[#allocation5 + $0x358] sm:$0xff]
  %v4587 = vld [vmem:[#allocation5 + $0x360] sm:$0xff]
  %v4588 = vld [vmem:[#allocation5 + $0x368] sm:$0xff]
  %v4589 = vld [vmem:[#allocation5 + $0x370] sm:$0xff]
  %v4590 = vld [vmem:[#allocation5 + $0x378] sm:$0xff]
  %v4591 = vld [vmem:[#allocation5 + $0x380] sm:$0xff]
  %v4592 = vld [vmem:[#allocation5 + $0x388] sm:$0xff]
  %v4593 = vld [vmem:[#allocation5 + $0x390] sm:$0xff]
  %v4594 = vld [vmem:[#allocation5 + $0x398] sm:$0xff]
  %v4595 = vld [vmem:[#allocation5 + $0x3a0] sm:$0xff]
  %v4596 = vld [vmem:[#allocation5 + $0x3a8] sm:$0xff]
  %v4597 = vld [vmem:[#allocation5 + $0x3b0] sm:$0xff]
  %v4598 = vld [vmem:[#allocation5 + $0x3b8] sm:$0xff]
  %v4599 = vld [vmem:[#allocation5 + $0x3c0] sm:$0xff]
  %v4600 = vld [vmem:[#allocation5 + $0x3c8] sm:$0xff]
  %v4601 = vld [vmem:[#allocation5 + $0x3d0] sm:$0xff]
  %v4602 = vld [vmem:[#allocation5 + $0x3d8] sm:$0xff]
  %v4603 = vld [vmem:[#allocation5 + $0x3e0] sm:$0xff]
  %v4604 = vld [vmem:[#allocation5 + $0x3e8] sm:$0xff]
  %v4605 = vld [vmem:[#allocation5 + $0x3f0] sm:$0xff]
  %v4606 = vld [vmem:[#allocation5 + $0x3f8] sm:$0xff]
  %v4607 = vld [vmem:[#allocation5 + $0x400] sm:$0xff]
  %v4608 = vld [vmem:[#allocation5 + $0x408] sm:$0xff]
  %v4609 = vld [vmem:[#allocation5 + $0x410] sm:$0xff]
  %v4610 = vld [vmem:[#allocation5 + $0x418] sm:$0xff]
  %v4611 = vld [vmem:[#allocation5 + $0x420] sm:$0xff]
  %v4612 = vld [vmem:[#allocation5 + $0x428] sm:$0xff]
  %v4613 = vld [vmem:[#allocation5 + $0x430] sm:$0xff]
  %v4614 = vld [vmem:[#allocation5 + $0x438] sm:$0xff]
  %v4615 = vld [vmem:[#allocation5 + $0x440] sm:$0xff]
  %v4616 = vld [vmem:[#allocation5 + $0x448] sm:$0xff]
  %v4617 = vld [vmem:[#allocation5 + $0x450] sm:$0xff]
  %v4618 = vld [vmem:[#allocation5 + $0x458] sm:$0xff]
  %v4619 = vld [vmem:[#allocation5 + $0x460] sm:$0xff]
  %v4620 = vld [vmem:[#allocation5 + $0x468] sm:$0xff]
  %v4621 = vld [vmem:[#allocation5 + $0x470] sm:$0xff]
  %v4622 = vld [vmem:[#allocation5 + $0x478] sm:$0xff]
  %v4623 = vld [vmem:[#allocation5 + $0x480] sm:$0xff]
  %v4624 = vld [vmem:[#allocation5 + $0x488] sm:$0xff]
  %v4625 = vld [vmem:[#allocation5 + $0x490] sm:$0xff]
  %v4626 = vld [vmem:[#allocation5 + $0x498] sm:$0xff]
  %v4627 = vld [vmem:[#allocation5 + $0x4a0] sm:$0xff]
  %v4628 = vld [vmem:[#allocation5 + $0x4a8] sm:$0xff]
  %v4629 = vld [vmem:[#allocation5 + $0x4b0] sm:$0xff]
  %v4630 = vld [vmem:[#allocation5 + $0x4b8] sm:$0xff]
  %v4631 = vld [vmem:[#allocation5 + $0x4c0] sm:$0xff]
  %v4632 = vld [vmem:[#allocation5 + $0x4c8] sm:$0xff]
  %v4633 = vld [vmem:[#allocation5 + $0x4d0] sm:$0xff]
  %v4634 = vld [vmem:[#allocation5 + $0x4d8] sm:$0xff]
  %v4635 = vld [vmem:[#allocation5 + $0x4e0] sm:$0xff]
  %v4636 = vld [vmem:[#allocation5 + $0x4e8] sm:$0xff]
  %v4637 = vld [vmem:[#allocation5 + $0x4f0] sm:$0xff]
  %v4638 = vld [vmem:[#allocation5 + $0x4f8] sm:$0xff]
  %v4639 = vld [vmem:[#allocation5 + $0x500] sm:$0xff]
  %v4640 = vld [vmem:[#allocation5 + $0x508] sm:$0xff]
  %v4641 = vld [vmem:[#allocation5 + $0x510] sm:$0xff]
  %v4642 = vld [vmem:[#allocation5 + $0x518] sm:$0xff]
  %v4643 = vld [vmem:[#allocation5 + $0x520] sm:$0xff]
  %v4644 = vld [vmem:[#allocation5 + $0x528] sm:$0xff]
  %v4645 = vld [vmem:[#allocation5 + $0x530] sm:$0xff]
  %v4646 = vld [vmem:[#allocation5 + $0x538] sm:$0xff]
  %v4647 = vld [vmem:[#allocation5 + $0x540] sm:$0xff]
  %v4648 = vld [vmem:[#allocation5 + $0x548] sm:$0xff]
  %v4649 = vld [vmem:[#allocation5 + $0x550] sm:$0xff]
  %v4650 = vld [vmem:[#allocation5 + $0x558] sm:$0xff]
  %v4651 = vld [vmem:[#allocation5 + $0x560] sm:$0xff]
  %v4652 = vld [vmem:[#allocation5 + $0x568] sm:$0xff]
  %v4653 = vld [vmem:[#allocation5 + $0x570] sm:$0xff]
  %v4654 = vld [vmem:[#allocation5 + $0x578] sm:$0xff]
  %v4655 = vld [vmem:[#allocation5 + $0x580] sm:$0xff]
  %v4656 = vld [vmem:[#allocation5 + $0x588] sm:$0xff]
  %v4657 = vld [vmem:[#allocation5 + $0x590] sm:$0xff]
  %v4658 = vld [vmem:[#allocation5 + $0x598] sm:$0xff]
  %v4659 = vld [vmem:[#allocation5 + $0x5a0] sm:$0xff]
  %v4660 = vld [vmem:[#allocation5 + $0x5a8] sm:$0xff]
  %v4661 = vld [vmem:[#allocation5 + $0x5b0] sm:$0xff]
  %v4662 = vld [vmem:[#allocation5 + $0x5b8] sm:$0xff]
  %v4663 = vld [vmem:[#allocation5 + $0x5c0] sm:$0xff]
  %v4664 = vld [vmem:[#allocation5 + $0x5c8] sm:$0xff]
  %v4665 = vld [vmem:[#allocation5 + $0x5d0] sm:$0xff]
  %v4666 = vld [vmem:[#allocation5 + $0x5d8] sm:$0xff]
  %v4667 = vld [vmem:[#allocation5 + $0x5e0] sm:$0xff]
  %v4668 = vld [vmem:[#allocation5 + $0x5e8] sm:$0xff]
  %v4669 = vld [vmem:[#allocation5 + $0x5f0] sm:$0xff]
  %v4670 = vld [vmem:[#allocation5 + $0x5f8] sm:$0xff]
  %v4671 = vld [vmem:[%s2] sm:$0xff]
  %v4672 = vld [vmem:[%s2 + $0x8] sm:$0xff]
  %v4673 = vld [vmem:[%s2 + $0x10] sm:$0xff]
  %v4674 = vld [vmem:[%s2 + $0x18] sm:$0xff]
  %v4675 = vld [vmem:[%s2 + $0x20] sm:$0xff]
  %v4676 = vld [vmem:[%s2 + $0x28] sm:$0xff]
  %v4677 = vld [vmem:[%s2 + $0x30] sm:$0xff]
  %v4678 = vld [vmem:[%s2 + $0x38] sm:$0xff]
  %v4679 = vld [vmem:[%s2 + $0x40] sm:$0xff]
  %v4680 = vld [vmem:[%s2 + $0x48] sm:$0xff]
  %v4681 = vld [vmem:[%s2 + $0x50] sm:$0xff]
  %v4682 = vld [vmem:[%s2 + $0x58] sm:$0xff]
  %v4683 = vld [vmem:[%s2 + $0x60] sm:$0xff]
  %v4684 = vld [vmem:[%s2 + $0x68] sm:$0xff]
  %v4685 = vld [vmem:[%s2 + $0x70] sm:$0xff]
  %v4686 = vld [vmem:[%s2 + $0x78] sm:$0xff]
  %v4687 = vld [vmem:[%s2 + $0x80] sm:$0xff]
  %v4688 = vld [vmem:[%s2 + $0x88] sm:$0xff]
  %v4689 = vld [vmem:[%s2 + $0x90] sm:$0xff]
  %v4690 = vld [vmem:[%s2 + $0x98] sm:$0xff]
  %v4691 = vld [vmem:[%s2 + $0xa0] sm:$0xff]
  %v4692 = vld [vmem:[%s2 + $0xa8] sm:$0xff]
  %v4693 = vld [vmem:[%s2 + $0xb0] sm:$0xff]
  %v4694 = vld [vmem:[%s2 + $0xb8] sm:$0xff]
  %v4695 = vld [vmem:[%s2 + $0xc0] sm:$0xff]
  %v4696 = vld [vmem:[%s2 + $0xc8] sm:$0xff]
  %v4697 = vld [vmem:[%s2 + $0xd0] sm:$0xff]
  %v4698 = vld [vmem:[%s2 + $0xd8] sm:$0xff]
  %v4699 = vld [vmem:[%s2 + $0xe0] sm:$0xff]
  %v4700 = vld [vmem:[%s2 + $0xe8] sm:$0xff]
  %v4701 = vld [vmem:[%s2 + $0xf0] sm:$0xff]
  %v4702 = vld [vmem:[%s2 + $0xf8] sm:$0xff]
  %v4703 = vld [vmem:[%s2 + $0x100] sm:$0xff]
  %v4704 = vld [vmem:[%s2 + $0x108] sm:$0xff]
  %v4705 = vld [vmem:[%s2 + $0x110] sm:$0xff]
  %v4706 = vld [vmem:[%s2 + $0x118] sm:$0xff]
  %v4707 = vld [vmem:[%s2 + $0x120] sm:$0xff]
  %v4708 = vld [vmem:[%s2 + $0x128] sm:$0xff]
  %v4709 = vld [vmem:[%s2 + $0x130] sm:$0xff]
  %v4710 = vld [vmem:[%s2 + $0x138] sm:$0xff]
  %v4711 = vld [vmem:[%s2 + $0x140] sm:$0xff]
  %v4712 = vld [vmem:[%s2 + $0x148] sm:$0xff]
  %v4713 = vld [vmem:[%s2 + $0x150] sm:$0xff]
  %v4714 = vld [vmem:[%s2 + $0x158] sm:$0xff]
  %v4715 = vld [vmem:[%s2 + $0x160] sm:$0xff]
  %v4716 = vld [vmem:[%s2 + $0x168] sm:$0xff]
  %v4717 = vld [vmem:[%s2 + $0x170] sm:$0xff]
  %v4718 = vld [vmem:[%s2 + $0x178] sm:$0xff]
  %v4719 = vld [vmem:[%s2 + $0x180] sm:$0xff]
  %v4720 = vld [vmem:[%s2 + $0x188] sm:$0xff]
  %v4721 = vld [vmem:[%s2 + $0x190] sm:$0xff]
  %v4722 = vld [vmem:[%s2 + $0x198] sm:$0xff]
  %v4723 = vld [vmem:[%s2 + $0x1a0] sm:$0xff]
  %v4724 = vld [vmem:[%s2 + $0x1a8] sm:$0xff]
  %v4725 = vld [vmem:[%s2 + $0x1b0] sm:$0xff]
  %v4726 = vld [vmem:[%s2 + $0x1b8] sm:$0xff]
  %v4727 = vld [vmem:[%s2 + $0x1c0] sm:$0xff]
  %v4728 = vld [vmem:[%s2 + $0x1c8] sm:$0xff]
  %v4729 = vld [vmem:[%s2 + $0x1d0] sm:$0xff]
  %v4730 = vld [vmem:[%s2 + $0x1d8] sm:$0xff]
  %v4731 = vld [vmem:[%s2 + $0x1e0] sm:$0xff]
  %v4732 = vld [vmem:[%s2 + $0x1e8] sm:$0xff]
  %v4733 = vld [vmem:[%s2 + $0x1f0] sm:$0xff]
  %v4734 = vld [vmem:[%s2 + $0x1f8] sm:$0xff]
  %v4735 = vld [vmem:[%s2 + $0x200] sm:$0xff]
  %v4736 = vld [vmem:[%s2 + $0x208] sm:$0xff]
  %v4737 = vld [vmem:[%s2 + $0x210] sm:$0xff]
  %v4738 = vld [vmem:[%s2 + $0x218] sm:$0xff]
  %v4739 = vld [vmem:[%s2 + $0x220] sm:$0xff]
  %v4740 = vld [vmem:[%s2 + $0x228] sm:$0xff]
  %v4741 = vld [vmem:[%s2 + $0x230] sm:$0xff]
  %v4742 = vld [vmem:[%s2 + $0x238] sm:$0xff]
  %v4743 = vld [vmem:[%s2 + $0x240] sm:$0xff]
  %v4744 = vld [vmem:[%s2 + $0x248] sm:$0xff]
  %v4745 = vld [vmem:[%s2 + $0x250] sm:$0xff]
  %v4746 = vld [vmem:[%s2 + $0x258] sm:$0xff]
  %v4747 = vld [vmem:[%s2 + $0x260] sm:$0xff]
  %v4748 = vld [vmem:[%s2 + $0x268] sm:$0xff]
  %v4749 = vld [vmem:[%s2 + $0x270] sm:$0xff]
  %v4750 = vld [vmem:[%s2 + $0x278] sm:$0xff]
  %v4751 = vld [vmem:[%s2 + $0x280] sm:$0xff]
  %v4752 = vld [vmem:[%s2 + $0x288] sm:$0xff]
  %v4753 = vld [vmem:[%s2 + $0x290] sm:$0xff]
  %v4754 = vld [vmem:[%s2 + $0x298] sm:$0xff]
  %v4755 = vld [vmem:[%s2 + $0x2a0] sm:$0xff]
  %v4756 = vld [vmem:[%s2 + $0x2a8] sm:$0xff]
  %v4757 = vld [vmem:[%s2 + $0x2b0] sm:$0xff]
  %v4758 = vld [vmem:[%s2 + $0x2b8] sm:$0xff]
  %v4759 = vld [vmem:[%s2 + $0x2c0] sm:$0xff]
  %v4760 = vld [vmem:[%s2 + $0x2c8] sm:$0xff]
  %v4761 = vld [vmem:[%s2 + $0x2d0] sm:$0xff]
  %v4762 = vld [vmem:[%s2 + $0x2d8] sm:$0xff]
  %v4763 = vld [vmem:[%s2 + $0x2e0] sm:$0xff]
  %v4764 = vld [vmem:[%s2 + $0x2e8] sm:$0xff]
  %v4765 = vld [vmem:[%s2 + $0x2f0] sm:$0xff]
  %v4766 = vld [vmem:[%s2 + $0x2f8] sm:$0xff]
  %v4767 = vld [vmem:[%s2 + $0x300] sm:$0xff]
  %v4768 = vld [vmem:[%s2 + $0x308] sm:$0xff]
  %v4769 = vld [vmem:[%s2 + $0x310] sm:$0xff]
  %v4770 = vld [vmem:[%s2 + $0x318] sm:$0xff]
  %v4771 = vld [vmem:[%s2 + $0x320] sm:$0xff]
  %v4772 = vld [vmem:[%s2 + $0x328] sm:$0xff]
  %v4773 = vld [vmem:[%s2 + $0x330] sm:$0xff]
  %v4774 = vld [vmem:[%s2 + $0x338] sm:$0xff]
  %v4775 = vld [vmem:[%s2 + $0x340] sm:$0xff]
  %v4776 = vld [vmem:[%s2 + $0x348] sm:$0xff]
  %v4777 = vld [vmem:[%s2 + $0x350] sm:$0xff]
  %v4778 = vld [vmem:[%s2 + $0x358] sm:$0xff]
  %v4779 = vld [vmem:[%s2 + $0x360] sm:$0xff]
  %v4780 = vld [vmem:[%s2 + $0x368] sm:$0xff]
  %v4781 = vld [vmem:[%s2 + $0x370] sm:$0xff]
  %v4782 = vld [vmem:[%s2 + $0x378] sm:$0xff]
  %v4783 = vld [vmem:[%s2 + $0x380] sm:$0xff]
  %v4784 = vld [vmem:[%s2 + $0x388] sm:$0xff]
  %v4785 = vld [vmem:[%s2 + $0x390] sm:$0xff]
  %v4786 = vld [vmem:[%s2 + $0x398] sm:$0xff]
  %v4787 = vld [vmem:[%s2 + $0x3a0] sm:$0xff]
  %v4788 = vld [vmem:[%s2 + $0x3a8] sm:$0xff]
  %v4789 = vld [vmem:[%s2 + $0x3b0] sm:$0xff]
  %v4790 = vld [vmem:[%s2 + $0x3b8] sm:$0xff]
  %v4791 = vld [vmem:[%s2 + $0x3c0] sm:$0xff]
  %v4792 = vld [vmem:[%s2 + $0x3c8] sm:$0xff]
  %v4793 = vld [vmem:[%s2 + $0x3d0] sm:$0xff]
  %v4794 = vld [vmem:[%s2 + $0x3d8] sm:$0xff]
  %v4795 = vld [vmem:[%s2 + $0x3e0] sm:$0xff]
  %v4796 = vld [vmem:[%s2 + $0x3e8] sm:$0xff]
  %v4797 = vld [vmem:[%s2 + $0x3f0] sm:$0xff]
  %v4798 = vld [vmem:[%s2 + $0x3f8] sm:$0xff]
  %v4799 = vld [vmem:[%s2 + $0x400] sm:$0xff]
  %v4800 = vld [vmem:[%s2 + $0x408] sm:$0xff]
  %v4801 = vld [vmem:[%s2 + $0x410] sm:$0xff]
  %v4802 = vld [vmem:[%s2 + $0x418] sm:$0xff]
  %v4803 = vld [vmem:[%s2 + $0x420] sm:$0xff]
  %v4804 = vld [vmem:[%s2 + $0x428] sm:$0xff]
  %v4805 = vld [vmem:[%s2 + $0x430] sm:$0xff]
  %v4806 = vld [vmem:[%s2 + $0x438] sm:$0xff]
  %v4807 = vld [vmem:[%s2 + $0x440] sm:$0xff]
  %v4808 = vld [vmem:[%s2 + $0x448] sm:$0xff]
  %v4809 = vld [vmem:[%s2 + $0x450] sm:$0xff]
  %v4810 = vld [vmem:[%s2 + $0x458] sm:$0xff]
  %v4811 = vld [vmem:[%s2 + $0x460] sm:$0xff]
  %v4812 = vld [vmem:[%s2 + $0x468] sm:$0xff]
  %v4813 = vld [vmem:[%s2 + $0x470] sm:$0xff]
  %v4814 = vld [vmem:[%s2 + $0x478] sm:$0xff]
  %v4815 = vld [vmem:[%s2 + $0x480] sm:$0xff]
  %v4816 = vld [vmem:[%s2 + $0x488] sm:$0xff]
  %v4817 = vld [vmem:[%s2 + $0x490] sm:$0xff]
  %v4818 = vld [vmem:[%s2 + $0x498] sm:$0xff]
  %v4819 = vld [vmem:[%s2 + $0x4a0] sm:$0xff]
  %v4820 = vld [vmem:[%s2 + $0x4a8] sm:$0xff]
  %v4821 = vld [vmem:[%s2 + $0x4b0] sm:$0xff]
  %v4822 = vld [vmem:[%s2 + $0x4b8] sm:$0xff]
  %v4823 = vld [vmem:[%s2 + $0x4c0] sm:$0xff]
  %v4824 = vld [vmem:[%s2 + $0x4c8] sm:$0xff]
  %v4825 = vld [vmem:[%s2 + $0x4d0] sm:$0xff]
  %v4826 = vld [vmem:[%s2 + $0x4d8] sm:$0xff]
  %v4827 = vld [vmem:[%s2 + $0x4e0] sm:$0xff]
  %v4828 = vld [vmem:[%s2 + $0x4e8] sm:$0xff]
  %v4829 = vld [vmem:[%s2 + $0x4f0] sm:$0xff]
  %v4830 = vld [vmem:[%s2 + $0x4f8] sm:$0xff]
  %v4831 = vld [vmem:[%s2 + $0x500] sm:$0xff]
  %v4832 = vld [vmem:[%s2 + $0x508] sm:$0xff]
  %v4833 = vld [vmem:[%s2 + $0x510] sm:$0xff]
  %v4834 = vld [vmem:[%s2 + $0x518] sm:$0xff]
  %v4835 = vld [vmem:[%s2 + $0x520] sm:$0xff]
  %v4836 = vld [vmem:[%s2 + $0x528] sm:$0xff]
  %v4837 = vld [vmem:[%s2 + $0x530] sm:$0xff]
  %v4838 = vld [vmem:[%s2 + $0x538] sm:$0xff]
  %v4839 = vld [vmem:[%s2 + $0x540] sm:$0xff]
  %v4840 = vld [vmem:[%s2 + $0x548] sm:$0xff]
  %v4841 = vld [vmem:[%s2 + $0x550] sm:$0xff]
  %v4842 = vld [vmem:[%s2 + $0x558] sm:$0xff]
  %v4843 = vld [vmem:[%s2 + $0x560] sm:$0xff]
  %v4844 = vld [vmem:[%s2 + $0x568] sm:$0xff]
  %v4845 = vld [vmem:[%s2 + $0x570] sm:$0xff]
  %v4846 = vld [vmem:[%s2 + $0x578] sm:$0xff]
  %v4847 = vld [vmem:[%s2 + $0x580] sm:$0xff]
  %v4848 = vld [vmem:[%s2 + $0x588] sm:$0xff]
  %v4849 = vld [vmem:[%s2 + $0x590] sm:$0xff]
  %v4850 = vld [vmem:[%s2 + $0x598] sm:$0xff]
  %v4852 = vsel %vm503, %v4490, 0
  %v4855 = vsel %vm503, %v4502, 0
  %v4858 = vsel %vm503, %v4514, 0
  %v4861 = vsel %vm503, %v4526, 0
  %v4864 = vsel %vm503, %v4538, 0
  %v4867 = vsel %vm503, %v4550, 0
  %v4870 = vsel %vm503, %v4562, 0
  %v4873 = vsel %vm503, %v4574, 0
  %v4876 = vsel %vm503, %v4586, 0
  %v4879 = vsel %vm503, %v4598, 0
  %v4882 = vsel %vm503, %v4610, 0
  %v4885 = vsel %vm503, %v4622, 0
  %v4888 = vsel %vm503, %v4634, 0
  %v4891 = vsel %vm503, %v4646, 0
  %v4894 = vsel %vm503, %v4658, 0
  %v4897 = vsel %vm503, %v4670, 0
  %4899 = vmatprep.subr.mxu0 0.0
  %4900 = vmatpush1.msra.mxu0 %v4686
  %4901 = vmatprep.subr.mxu0 0.0
  %4902 = vmatpush1.msra.mxu0 %v4685
  %4903 = vmatprep.subr.mxu0 0.0
  %4904 = vmatpush1.msra.mxu0 %v4684
  %4905 = vmatprep.subr.mxu0 0.0
  %4906 = vmatpush1.msra.mxu0 %v4683
  %4907 = vmatprep.subr.mxu0 0.0
  %4908 = vmatpush1.msra.mxu0 %v4682
  %4909 = vmatprep.subr.mxu0 0.0
  %4910 = vmatpush1.msra.mxu0 %v4681
  %4911 = vmatprep.subr.mxu0 0.0
  %4912 = vmatpush1.msra.mxu0 %v4680
  %4913 = vmatprep.subr.mxu0 0.0
  %4914 = vmatpush1.msra.mxu0 %v4679
  %4915 = vmatprep.subr.mxu0 0.0
  %4916 = vmatpush1.msra.mxu0 %v4678
  %4917 = vmatprep.subr.mxu0 0.0
  %4918 = vmatpush1.msra.mxu0 %v4677
  %4919 = vmatprep.subr.mxu0 0.0
  %4920 = vmatpush1.msra.mxu0 %v4676
  %4921 = vmatprep.subr.mxu0 0.0
  %4922 = vmatpush1.msra.mxu0 %v4675
  %4923 = vmatprep.subr.mxu0 0.0
  %4924 = vmatpush1.msra.mxu0 %v4674
  %4925 = vmatprep.subr.mxu0 0.0
  %4926 = vmatpush1.msra.mxu0 %v4673
  %4927 = vmatprep.subr.mxu0 0.0
  %4928 = vmatpush1.msra.mxu0 %v4672
  %4929 = vmatprep.subr.mxu0 0.0
  %4930 = vmatpush1.msra.mxu0 %v4671
  %4931 = vmatprep.subr.mxu0 0.0
  %4932 = vmatpush2.msra.mxu0 %v4702
  %4933 = vmatprep.subr.mxu0 0.0
  %4934 = vmatpush2.msra.mxu0 %v4701
  %4935 = vmatprep.subr.mxu0 0.0
  %4936 = vmatpush2.msra.mxu0 %v4700
  %4937 = vmatprep.subr.mxu0 0.0
  %4938 = vmatpush2.msra.mxu0 %v4699
  %4939 = vmatprep.subr.mxu0 0.0
  %4940 = vmatpush2.msra.mxu0 %v4698
  %4941 = vmatprep.subr.mxu0 0.0
  %4942 = vmatpush2.msra.mxu0 %v4697
  %4943 = vmatprep.subr.mxu0 0.0
  %4944 = vmatpush2.msra.mxu0 %v4696
  %4945 = vmatprep.subr.mxu0 0.0
  %4946 = vmatpush2.msra.mxu0 %v4695
  %4947 = vmatprep.subr.mxu0 0.0
  %4948 = vmatpush2.msra.mxu0 %v4694
  %4949 = vmatprep.subr.mxu0 0.0
  %4950 = vmatpush2.msra.mxu0 %v4693
  %4951 = vmatprep.subr.mxu0 0.0
  %4952 = vmatpush2.msra.mxu0 %v4692
  %4953 = vmatprep.subr.mxu0 0.0
  %4954 = vmatpush2.msra.mxu0 %v4691
  %4955 = vmatprep.subr.mxu0 0.0
  %4956 = vmatpush2.msra.mxu0 %v4690
  %4957 = vmatprep.subr.mxu0 0.0
  %4958 = vmatpush2.msra.mxu0 %v4689
  %4959 = vmatprep.subr.mxu0 0.0
  %4960 = vmatpush2.msra.mxu0 %v4688
  %4961 = vmatprep.subr.mxu0 0.0
  %4962 = vmatpush2.msra.mxu0 %v4687
  %4963 = vmatprep.mubr.f32.mxu0 %v4480
  %4964 = vmatmul.mubr.f32.gmra.mxu0 %v4479
  %v4965 = vpop.f32.mrf.mxu0
  %v4966 = vadd.f32 0.0, %v4965
  %v4967 = vpop.f32.mrf.mxu0
  %4968 = vmatprep.mubr.f32.mxu0 %v4492
  %4969 = vmatmul.mubr.f32.gmra.mxu0 %v4491
  %v4970 = vpop.f32.mrf.mxu0
  %v4971 = vadd.f32 0.0, %v4970
  %v4972 = vpop.f32.mrf.mxu0
  %4973 = vmatprep.mubr.f32.mxu0 %v4504
  %4974 = vmatmul.mubr.f32.gmra.mxu0 %v4503
  %v4975 = vpop.f32.mrf.mxu0
  %v4976 = vadd.f32 0.0, %v4975
  %v4977 = vpop.f32.mrf.mxu0
  %4978 = vmatprep.mubr.f32.mxu0 %v4516
  %4979 = vmatmul.mubr.f32.gmra.mxu0 %v4515
  %v4980 = vpop.f32.mrf.mxu0
  %v4981 = vadd.f32 0.0, %v4980
  %v4982 = vpop.f32.mrf.mxu0
  %4983 = vmatprep.mubr.f32.mxu0 %v4528
  %4984 = vmatmul.mubr.f32.gmra.mxu0 %v4527
  %v4985 = vpop.f32.mrf.mxu0
  %v4986 = vadd.f32 0.0, %v4985
  %v4987 = vpop.f32.mrf.mxu0
  %4988 = vmatprep.mubr.f32.mxu0 %v4540
  %4989 = vmatmul.mubr.f32.gmra.mxu0 %v4539
  %v4990 = vpop.f32.mrf.mxu0
  %v4991 = vadd.f32 0.0, %v4990
  %v4992 = vpop.f32.mrf.mxu0
  %4993 = vmatprep.mubr.f32.mxu0 %v4552
  %4994 = vmatmul.mubr.f32.gmra.mxu0 %v4551
  %v4995 = vpop.f32.mrf.mxu0
  %v4996 = vadd.f32 0.0, %v4995
  %v4997 = vpop.f32.mrf.mxu0
  %4998 = vmatprep.mubr.f32.mxu0 %v4564
  %4999 = vmatmul.mubr.f32.gmra.mxu0 %v4563
  %v5000 = vpop.f32.mrf.mxu0
  %v5001 = vadd.f32 0.0, %v5000
  %v5002 = vpop.f32.mrf.mxu0
  %5003 = vmatprep.mubr.f32.mxu0 %v4576
  %5004 = vmatmul.mubr.f32.gmra.mxu0 %v4575
  %v5005 = vpop.f32.mrf.mxu0
  %v5006 = vadd.f32 0.0, %v5005
  %v5007 = vpop.f32.mrf.mxu0
  %5008 = vmatprep.mubr.f32.mxu0 %v4588
  %5009 = vmatmul.mubr.f32.gmra.mxu0 %v4587
  %v5010 = vpop.f32.mrf.mxu0
  %v5011 = vadd.f32 0.0, %v5010
  %v5012 = vpop.f32.mrf.mxu0
  %5013 = vmatprep.mubr.f32.mxu0 %v4600
  %5014 = vmatmul.mubr.f32.gmra.mxu0 %v4599
  %v5015 = vpop.f32.mrf.mxu0
  %v5016 = vadd.f32 0.0, %v5015
  %v5017 = vpop.f32.mrf.mxu0
  %5018 = vmatprep.mubr.f32.mxu0 %v4612
  %5019 = vmatmul.mubr.f32.gmra.mxu0 %v4611
  %v5020 = vpop.f32.mrf.mxu0
  %v5021 = vadd.f32 0.0, %v5020
  %v5022 = vpop.f32.mrf.mxu0
  %5023 = vmatprep.mubr.f32.mxu0 %v4624
  %5024 = vmatmul.mubr.f32.gmra.mxu0 %v4623
  %v5025 = vpop.f32.mrf.mxu0
  %v5026 = vadd.f32 0.0, %v5025
  %v5027 = vpop.f32.mrf.mxu0
  %5028 = vmatprep.mubr.f32.mxu0 %v4636
  %5029 = vmatmul.mubr.f32.gmra.mxu0 %v4635
  %v5030 = vpop.f32.mrf.mxu0
  %v5031 = vadd.f32 0.0, %v5030
  %v5032 = vpop.f32.mrf.mxu0
  %5033 = vmatprep.mubr.f32.mxu0 %v4648
  %5034 = vmatmul.mubr.f32.gmra.mxu0 %v4647
  %v5035 = vpop.f32.mrf.mxu0
  %v5036 = vadd.f32 0.0, %v5035
  %v5037 = vpop.f32.mrf.mxu0
  %5038 = vmatprep.mubr.f32.mxu0 %v4660
  %5039 = vmatmul.mubr.f32.gmra.mxu0 %v4659
  %v5040 = vpop.f32.mrf.mxu0
  %v5041 = vadd.f32 0.0, %v5040
  %v5042 = vpop.f32.mrf.mxu0
  %5043 = vdwg.mxu0
  %5044 = vmatprep.subr.mxu0 0.0
  %5045 = vmatpush1.msra.mxu0 %v4718
  %5046 = vmatprep.subr.mxu0 0.0
  %5047 = vmatpush1.msra.mxu0 %v4717
  %5048 = vmatprep.subr.mxu0 0.0
  %5049 = vmatpush1.msra.mxu0 %v4716
  %5050 = vmatprep.subr.mxu0 0.0
  %5051 = vmatpush1.msra.mxu0 %v4715
  %5052 = vmatprep.subr.mxu0 0.0
  %5053 = vmatpush1.msra.mxu0 %v4714
  %5054 = vmatprep.subr.mxu0 0.0
  %5055 = vmatpush1.msra.mxu0 %v4713
  %5056 = vmatprep.subr.mxu0 0.0
  %5057 = vmatpush1.msra.mxu0 %v4712
  %5058 = vmatprep.subr.mxu0 0.0
  %5059 = vmatpush1.msra.mxu0 %v4711
  %5060 = vmatprep.subr.mxu0 0.0
  %5061 = vmatpush1.msra.mxu0 %v4710
  %5062 = vmatprep.subr.mxu0 0.0
  %5063 = vmatpush1.msra.mxu0 %v4709
  %5064 = vmatprep.subr.mxu0 0.0
  %5065 = vmatpush1.msra.mxu0 %v4708
  %5066 = vmatprep.subr.mxu0 0.0
  %5067 = vmatpush1.msra.mxu0 %v4707
  %5068 = vmatprep.subr.mxu0 0.0
  %5069 = vmatpush1.msra.mxu0 %v4706
  %5070 = vmatprep.subr.mxu0 0.0
  %5071 = vmatpush1.msra.mxu0 %v4705
  %5072 = vmatprep.subr.mxu0 0.0
  %5073 = vmatpush1.msra.mxu0 %v4704
  %5074 = vmatprep.subr.mxu0 0.0
  %5075 = vmatpush1.msra.mxu0 %v4703
  %5076 = vmatprep.subr.mxu0 0.0
  %5077 = vmatpush2.msra.mxu0 %v4734
  %5078 = vmatprep.subr.mxu0 0.0
  %5079 = vmatpush2.msra.mxu0 %v4733
  %5080 = vmatprep.subr.mxu0 0.0
  %5081 = vmatpush2.msra.mxu0 %v4732
  %5082 = vmatprep.subr.mxu0 0.0
  %5083 = vmatpush2.msra.mxu0 %v4731
  %5084 = vmatprep.subr.mxu0 0.0
  %5085 = vmatpush2.msra.mxu0 %v4730
  %5086 = vmatprep.subr.mxu0 0.0
  %5087 = vmatpush2.msra.mxu0 %v4729
  %5088 = vmatprep.subr.mxu0 0.0
  %5089 = vmatpush2.msra.mxu0 %v4728
  %5090 = vmatprep.subr.mxu0 0.0
  %5091 = vmatpush2.msra.mxu0 %v4727
  %5092 = vmatprep.subr.mxu0 0.0
  %5093 = vmatpush2.msra.mxu0 %v4726
  %5094 = vmatprep.subr.mxu0 0.0
  %5095 = vmatpush2.msra.mxu0 %v4725
  %5096 = vmatprep.subr.mxu0 0.0
  %5097 = vmatpush2.msra.mxu0 %v4724
  %5098 = vmatprep.subr.mxu0 0.0
  %5099 = vmatpush2.msra.mxu0 %v4723
  %5100 = vmatprep.subr.mxu0 0.0
  %5101 = vmatpush2.msra.mxu0 %v4722
  %5102 = vmatprep.subr.mxu0 0.0
  %5103 = vmatpush2.msra.mxu0 %v4721
  %5104 = vmatprep.subr.mxu0 0.0
  %5105 = vmatpush2.msra.mxu0 %v4720
  %5106 = vmatprep.subr.mxu0 0.0
  %5107 = vmatpush2.msra.mxu0 %v4719
  %5108 = vmatprep.mubr.f32.mxu0 %v4482
  %5109 = vmatmul.mubr.f32.gmra.mxu0 %v4481
  %v5110 = vpop.f32.mrf.mxu0
  %v5111 = vadd.f32 %v4966, %v5110
  %v5112 = vpop.f32.mrf.mxu0
  %5113 = vmatprep.mubr.f32.mxu0 %v4494
  %5114 = vmatmul.mubr.f32.gmra.mxu0 %v4493
  %v5115 = vpop.f32.mrf.mxu0
  %v5116 = vadd.f32 %v4971, %v5115
  %v5117 = vpop.f32.mrf.mxu0
  %5118 = vmatprep.mubr.f32.mxu0 %v4506
  %5119 = vmatmul.mubr.f32.gmra.mxu0 %v4505
  %v5120 = vpop.f32.mrf.mxu0
  %v5121 = vadd.f32 %v4976, %v5120
  %v5122 = vpop.f32.mrf.mxu0
  %5123 = vmatprep.mubr.f32.mxu0 %v4518
  %5124 = vmatmul.mubr.f32.gmra.mxu0 %v4517
  %v5125 = vpop.f32.mrf.mxu0
  %v5126 = vadd.f32 %v4981, %v5125
  %v5127 = vpop.f32.mrf.mxu0
  %5128 = vmatprep.mubr.f32.mxu0 %v4530
  %5129 = vmatmul.mubr.f32.gmra.mxu0 %v4529
  %v5130 = vpop.f32.mrf.mxu0
  %v5131 = vadd.f32 %v4986, %v5130
  %v5132 = vpop.f32.mrf.mxu0
  %5133 = vmatprep.mubr.f32.mxu0 %v4542
  %5134 = vmatmul.mubr.f32.gmra.mxu0 %v4541
  %v5135 = vpop.f32.mrf.mxu0
  %v5136 = vadd.f32 %v4991, %v5135
  %v5137 = vpop.f32.mrf.mxu0
  %5138 = vmatprep.mubr.f32.mxu0 %v4554
  %5139 = vmatmul.mubr.f32.gmra.mxu0 %v4553
  %v5140 = vpop.f32.mrf.mxu0
  %v5141 = vadd.f32 %v4996, %v5140
  %v5142 = vpop.f32.mrf.mxu0
  %5143 = vmatprep.mubr.f32.mxu0 %v4566
  %5144 = vmatmul.mubr.f32.gmra.mxu0 %v4565
  %v5145 = vpop.f32.mrf.mxu0
  %v5146 = vadd.f32 %v5001, %v5145
  %v5147 = vpop.f32.mrf.mxu0
  %5148 = vmatprep.mubr.f32.mxu0 %v4578
  %5149 = vmatmul.mubr.f32.gmra.mxu0 %v4577
  %v5150 = vpop.f32.mrf.mxu0
  %v5151 = vadd.f32 %v5006, %v5150
  %v5152 = vpop.f32.mrf.mxu0
  %5153 = vmatprep.mubr.f32.mxu0 %v4590
  %5154 = vmatmul.mubr.f32.gmra.mxu0 %v4589
  %v5155 = vpop.f32.mrf.mxu0
  %v5156 = vadd.f32 %v5011, %v5155
  %v5157 = vpop.f32.mrf.mxu0
  %5158 = vmatprep.mubr.f32.mxu0 %v4602
  %5159 = vmatmul.mubr.f32.gmra.mxu0 %v4601
  %v5160 = vpop.f32.mrf.mxu0
  %v5161 = vadd.f32 %v5016, %v5160
  %v5162 = vpop.f32.mrf.mxu0
  %5163 = vmatprep.mubr.f32.mxu0 %v4614
  %5164 = vmatmul.mubr.f32.gmra.mxu0 %v4613
  %v5165 = vpop.f32.mrf.mxu0
  %v5166 = vadd.f32 %v5021, %v5165
  %v5167 = vpop.f32.mrf.mxu0
  %5168 = vmatprep.mubr.f32.mxu0 %v4626
  %5169 = vmatmul.mubr.f32.gmra.mxu0 %v4625
  %v5170 = vpop.f32.mrf.mxu0
  %v5171 = vadd.f32 %v5026, %v5170
  %v5172 = vpop.f32.mrf.mxu0
  %5173 = vmatprep.mubr.f32.mxu0 %v4638
  %5174 = vmatmul.mubr.f32.gmra.mxu0 %v4637
  %v5175 = vpop.f32.mrf.mxu0
  %v5176 = vadd.f32 %v5031, %v5175
  %v5177 = vpop.f32.mrf.mxu0
  %5178 = vmatprep.mubr.f32.mxu0 %v4650
  %5179 = vmatmul.mubr.f32.gmra.mxu0 %v4649
  %v5180 = vpop.f32.mrf.mxu0
  %v5181 = vadd.f32 %v5036, %v5180
  %v5182 = vpop.f32.mrf.mxu0
  %5183 = vmatprep.mubr.f32.mxu0 %v4662
  %5184 = vmatmul.mubr.f32.gmra.mxu0 %v4661
  %v5185 = vpop.f32.mrf.mxu0
  %v5186 = vadd.f32 %v5041, %v5185
  %v5187 = vpop.f32.mrf.mxu0
  %5188 = vdwg.mxu0
  %5189 = vmatprep.subr.mxu0 0.0
  %5190 = vmatpush1.msra.mxu0 %v4750
  %5191 = vmatprep.subr.mxu0 0.0
  %5192 = vmatpush1.msra.mxu0 %v4749
  %5193 = vmatprep.subr.mxu0 0.0
  %5194 = vmatpush1.msra.mxu0 %v4748
  %5195 = vmatprep.subr.mxu0 0.0
  %5196 = vmatpush1.msra.mxu0 %v4747
  %5197 = vmatprep.subr.mxu0 0.0
  %5198 = vmatpush1.msra.mxu0 %v4746
  %5199 = vmatprep.subr.mxu0 0.0
  %5200 = vmatpush1.msra.mxu0 %v4745
  %5201 = vmatprep.subr.mxu0 0.0
  %5202 = vmatpush1.msra.mxu0 %v4744
  %5203 = vmatprep.subr.mxu0 0.0
  %5204 = vmatpush1.msra.mxu0 %v4743
  %5205 = vmatprep.subr.mxu0 0.0
  %5206 = vmatpush1.msra.mxu0 %v4742
  %5207 = vmatprep.subr.mxu0 0.0
  %5208 = vmatpush1.msra.mxu0 %v4741
  %5209 = vmatprep.subr.mxu0 0.0
  %5210 = vmatpush1.msra.mxu0 %v4740
  %5211 = vmatprep.subr.mxu0 0.0
  %5212 = vmatpush1.msra.mxu0 %v4739
  %5213 = vmatprep.subr.mxu0 0.0
  %5214 = vmatpush1.msra.mxu0 %v4738
  %5215 = vmatprep.subr.mxu0 0.0
  %5216 = vmatpush1.msra.mxu0 %v4737
  %5217 = vmatprep.subr.mxu0 0.0
  %5218 = vmatpush1.msra.mxu0 %v4736
  %5219 = vmatprep.subr.mxu0 0.0
  %5220 = vmatpush1.msra.mxu0 %v4735
  %5221 = vmatprep.subr.mxu0 0.0
  %5222 = vmatpush2.msra.mxu0 %v4766
  %5223 = vmatprep.subr.mxu0 0.0
  %5224 = vmatpush2.msra.mxu0 %v4765
  %5225 = vmatprep.subr.mxu0 0.0
  %5226 = vmatpush2.msra.mxu0 %v4764
  %5227 = vmatprep.subr.mxu0 0.0
  %5228 = vmatpush2.msra.mxu0 %v4763
  %5229 = vmatprep.subr.mxu0 0.0
  %5230 = vmatpush2.msra.mxu0 %v4762
  %5231 = vmatprep.subr.mxu0 0.0
  %5232 = vmatpush2.msra.mxu0 %v4761
  %5233 = vmatprep.subr.mxu0 0.0
  %5234 = vmatpush2.msra.mxu0 %v4760
  %5235 = vmatprep.subr.mxu0 0.0
  %5236 = vmatpush2.msra.mxu0 %v4759
  %5237 = vmatprep.subr.mxu0 0.0
  %5238 = vmatpush2.msra.mxu0 %v4758
  %5239 = vmatprep.subr.mxu0 0.0
  %5240 = vmatpush2.msra.mxu0 %v4757
  %5241 = vmatprep.subr.mxu0 0.0
  %5242 = vmatpush2.msra.mxu0 %v4756
  %5243 = vmatprep.subr.mxu0 0.0
  %5244 = vmatpush2.msra.mxu0 %v4755
  %5245 = vmatprep.subr.mxu0 0.0
  %5246 = vmatpush2.msra.mxu0 %v4754
  %5247 = vmatprep.subr.mxu0 0.0
  %5248 = vmatpush2.msra.mxu0 %v4753
  %5249 = vmatprep.subr.mxu0 0.0
  %5250 = vmatpush2.msra.mxu0 %v4752
  %5251 = vmatprep.subr.mxu0 0.0
  %5252 = vmatpush2.msra.mxu0 %v4751
  %5253 = vmatprep.mubr.f32.mxu0 %v4484
  %5254 = vmatmul.mubr.f32.gmra.mxu0 %v4483
  %v5255 = vpop.f32.mrf.mxu0
  %v5256 = vadd.f32 %v5111, %v5255
  %v5257 = vpop.f32.mrf.mxu0
  %5258 = vmatprep.mubr.f32.mxu0 %v4496
  %5259 = vmatmul.mubr.f32.gmra.mxu0 %v4495
  %v5260 = vpop.f32.mrf.mxu0
  %v5261 = vadd.f32 %v5116, %v5260
  %v5262 = vpop.f32.mrf.mxu0
  %5263 = vmatprep.mubr.f32.mxu0 %v4508
  %5264 = vmatmul.mubr.f32.gmra.mxu0 %v4507
  %v5265 = vpop.f32.mrf.mxu0
  %v5266 = vadd.f32 %v5121, %v5265
  %v5267 = vpop.f32.mrf.mxu0
  %5268 = vmatprep.mubr.f32.mxu0 %v4520
  %5269 = vmatmul.mubr.f32.gmra.mxu0 %v4519
  %v5270 = vpop.f32.mrf.mxu0
  %v5271 = vadd.f32 %v5126, %v5270
  %v5272 = vpop.f32.mrf.mxu0
  %5273 = vmatprep.mubr.f32.mxu0 %v4532
  %5274 = vmatmul.mubr.f32.gmra.mxu0 %v4531
  %v5275 = vpop.f32.mrf.mxu0
  %v5276 = vadd.f32 %v5131, %v5275
  %v5277 = vpop.f32.mrf.mxu0
  %5278 = vmatprep.mubr.f32.mxu0 %v4544
  %5279 = vmatmul.mubr.f32.gmra.mxu0 %v4543
  %v5280 = vpop.f32.mrf.mxu0
  %v5281 = vadd.f32 %v5136, %v5280
  %v5282 = vpop.f32.mrf.mxu0
  %5283 = vmatprep.mubr.f32.mxu0 %v4556
  %5284 = vmatmul.mubr.f32.gmra.mxu0 %v4555
  %v5285 = vpop.f32.mrf.mxu0
  %v5286 = vadd.f32 %v5141, %v5285
  %v5287 = vpop.f32.mrf.mxu0
  %5288 = vmatprep.mubr.f32.mxu0 %v4568
  %5289 = vmatmul.mubr.f32.gmra.mxu0 %v4567
  %v5290 = vpop.f32.mrf.mxu0
  %v5291 = vadd.f32 %v5146, %v5290
  %v5292 = vpop.f32.mrf.mxu0
  %5293 = vmatprep.mubr.f32.mxu0 %v4580
  %5294 = vmatmul.mubr.f32.gmra.mxu0 %v4579
  %v5295 = vpop.f32.mrf.mxu0
  %v5296 = vadd.f32 %v5151, %v5295
  %v5297 = vpop.f32.mrf.mxu0
  %5298 = vmatprep.mubr.f32.mxu0 %v4592
  %5299 = vmatmul.mubr.f32.gmra.mxu0 %v4591
  %v5300 = vpop.f32.mrf.mxu0
  %v5301 = vadd.f32 %v5156, %v5300
  %v5302 = vpop.f32.mrf.mxu0
  %5303 = vmatprep.mubr.f32.mxu0 %v4604
  %5304 = vmatmul.mubr.f32.gmra.mxu0 %v4603
  %v5305 = vpop.f32.mrf.mxu0
  %v5306 = vadd.f32 %v5161, %v5305
  %v5307 = vpop.f32.mrf.mxu0
  %5308 = vmatprep.mubr.f32.mxu0 %v4616
  %5309 = vmatmul.mubr.f32.gmra.mxu0 %v4615
  %v5310 = vpop.f32.mrf.mxu0
  %v5311 = vadd.f32 %v5166, %v5310
  %v5312 = vpop.f32.mrf.mxu0
  %5313 = vmatprep.mubr.f32.mxu0 %v4628
  %5314 = vmatmul.mubr.f32.gmra.mxu0 %v4627
  %v5315 = vpop.f32.mrf.mxu0
  %v5316 = vadd.f32 %v5171, %v5315
  %v5317 = vpop.f32.mrf.mxu0
  %5318 = vmatprep.mubr.f32.mxu0 %v4640
  %5319 = vmatmul.mubr.f32.gmra.mxu0 %v4639
  %v5320 = vpop.f32.mrf.mxu0
  %v5321 = vadd.f32 %v5176, %v5320
  %v5322 = vpop.f32.mrf.mxu0
  %5323 = vmatprep.mubr.f32.mxu0 %v4652
  %5324 = vmatmul.mubr.f32.gmra.mxu0 %v4651
  %v5325 = vpop.f32.mrf.mxu0
  %v5326 = vadd.f32 %v5181, %v5325
  %v5327 = vpop.f32.mrf.mxu0
  %5328 = vmatprep.mubr.f32.mxu0 %v4664
  %5329 = vmatmul.mubr.f32.gmra.mxu0 %v4663
  %v5330 = vpop.f32.mrf.mxu0
  %v5331 = vadd.f32 %v5186, %v5330
  %v5332 = vpop.f32.mrf.mxu0
  %5333 = vdwg.mxu0
  %5334 = vmatprep.subr.mxu0 0.0
  %5335 = vmatpush1.msra.mxu0 %v4782
  %5336 = vmatprep.subr.mxu0 0.0
  %5337 = vmatpush1.msra.mxu0 %v4781
  %5338 = vmatprep.subr.mxu0 0.0
  %5339 = vmatpush1.msra.mxu0 %v4780
  %5340 = vmatprep.subr.mxu0 0.0
  %5341 = vmatpush1.msra.mxu0 %v4779
  %5342 = vmatprep.subr.mxu0 0.0
  %5343 = vmatpush1.msra.mxu0 %v4778
  %5344 = vmatprep.subr.mxu0 0.0
  %5345 = vmatpush1.msra.mxu0 %v4777
  %5346 = vmatprep.subr.mxu0 0.0
  %5347 = vmatpush1.msra.mxu0 %v4776
  %5348 = vmatprep.subr.mxu0 0.0
  %5349 = vmatpush1.msra.mxu0 %v4775
  %5350 = vmatprep.subr.mxu0 0.0
  %5351 = vmatpush1.msra.mxu0 %v4774
  %5352 = vmatprep.subr.mxu0 0.0
  %5353 = vmatpush1.msra.mxu0 %v4773
  %5354 = vmatprep.subr.mxu0 0.0
  %5355 = vmatpush1.msra.mxu0 %v4772
  %5356 = vmatprep.subr.mxu0 0.0
  %5357 = vmatpush1.msra.mxu0 %v4771
  %5358 = vmatprep.subr.mxu0 0.0
  %5359 = vmatpush1.msra.mxu0 %v4770
  %5360 = vmatprep.subr.mxu0 0.0
  %5361 = vmatpush1.msra.mxu0 %v4769
  %5362 = vmatprep.subr.mxu0 0.0
  %5363 = vmatpush1.msra.mxu0 %v4768
  %5364 = vmatprep.subr.mxu0 0.0
  %5365 = vmatpush1.msra.mxu0 %v4767
  %5366 = vmatprep.subr.mxu0 0.0
  %5367 = vmatpush2.msra.mxu0 %v4798
  %5368 = vmatprep.subr.mxu0 0.0
  %5369 = vmatpush2.msra.mxu0 %v4797
  %5370 = vmatprep.subr.mxu0 0.0
  %5371 = vmatpush2.msra.mxu0 %v4796
  %5372 = vmatprep.subr.mxu0 0.0
  %5373 = vmatpush2.msra.mxu0 %v4795
  %5374 = vmatprep.subr.mxu0 0.0
  %5375 = vmatpush2.msra.mxu0 %v4794
  %5376 = vmatprep.subr.mxu0 0.0
  %5377 = vmatpush2.msra.mxu0 %v4793
  %5378 = vmatprep.subr.mxu0 0.0
  %5379 = vmatpush2.msra.mxu0 %v4792
  %5380 = vmatprep.subr.mxu0 0.0
  %5381 = vmatpush2.msra.mxu0 %v4791
  %5382 = vmatprep.subr.mxu0 0.0
  %5383 = vmatpush2.msra.mxu0 %v4790
  %5384 = vmatprep.subr.mxu0 0.0
  %5385 = vmatpush2.msra.mxu0 %v4789
  %5386 = vmatprep.subr.mxu0 0.0
  %5387 = vmatpush2.msra.mxu0 %v4788
  %5388 = vmatprep.subr.mxu0 0.0
  %5389 = vmatpush2.msra.mxu0 %v4787
  %5390 = vmatprep.subr.mxu0 0.0
  %5391 = vmatpush2.msra.mxu0 %v4786
  %5392 = vmatprep.subr.mxu0 0.0
  %5393 = vmatpush2.msra.mxu0 %v4785
  %5394 = vmatprep.subr.mxu0 0.0
  %5395 = vmatpush2.msra.mxu0 %v4784
  %5396 = vmatprep.subr.mxu0 0.0
  %5397 = vmatpush2.msra.mxu0 %v4783
  %5398 = vmatprep.mubr.f32.mxu0 %v4486
  %5399 = vmatmul.mubr.f32.gmra.mxu0 %v4485
  %v5400 = vpop.f32.mrf.mxu0
  %v5401 = vadd.f32 %v5256, %v5400
  %v5402 = vpop.f32.mrf.mxu0
  %5403 = vmatprep.mubr.f32.mxu0 %v4498
  %5404 = vmatmul.mubr.f32.gmra.mxu0 %v4497
  %v5405 = vpop.f32.mrf.mxu0
  %v5406 = vadd.f32 %v5261, %v5405
  %v5407 = vpop.f32.mrf.mxu0
  %5408 = vmatprep.mubr.f32.mxu0 %v4510
  %5409 = vmatmul.mubr.f32.gmra.mxu0 %v4509
  %v5410 = vpop.f32.mrf.mxu0
  %v5411 = vadd.f32 %v5266, %v5410
  %v5412 = vpop.f32.mrf.mxu0
  %5413 = vmatprep.mubr.f32.mxu0 %v4522
  %5414 = vmatmul.mubr.f32.gmra.mxu0 %v4521
  %v5415 = vpop.f32.mrf.mxu0
  %v5416 = vadd.f32 %v5271, %v5415
  %v5417 = vpop.f32.mrf.mxu0
  %5418 = vmatprep.mubr.f32.mxu0 %v4534
  %5419 = vmatmul.mubr.f32.gmra.mxu0 %v4533
  %v5420 = vpop.f32.mrf.mxu0
  %v5421 = vadd.f32 %v5276, %v5420
  %v5422 = vpop.f32.mrf.mxu0
  %5423 = vmatprep.mubr.f32.mxu0 %v4546
  %5424 = vmatmul.mubr.f32.gmra.mxu0 %v4545
  %v5425 = vpop.f32.mrf.mxu0
  %v5426 = vadd.f32 %v5281, %v5425
  %v5427 = vpop.f32.mrf.mxu0
  %5428 = vmatprep.mubr.f32.mxu0 %v4558
  %5429 = vmatmul.mubr.f32.gmra.mxu0 %v4557
  %v5430 = vpop.f32.mrf.mxu0
  %v5431 = vadd.f32 %v5286, %v5430
  %v5432 = vpop.f32.mrf.mxu0
  %5433 = vmatprep.mubr.f32.mxu0 %v4570
  %5434 = vmatmul.mubr.f32.gmra.mxu0 %v4569
  %v5435 = vpop.f32.mrf.mxu0
  %v5436 = vadd.f32 %v5291, %v5435
  %v5437 = vpop.f32.mrf.mxu0
  %5438 = vmatprep.mubr.f32.mxu0 %v4582
  %5439 = vmatmul.mubr.f32.gmra.mxu0 %v4581
  %v5440 = vpop.f32.mrf.mxu0
  %v5441 = vadd.f32 %v5296, %v5440
  %v5442 = vpop.f32.mrf.mxu0
  %5443 = vmatprep.mubr.f32.mxu0 %v4594
  %5444 = vmatmul.mubr.f32.gmra.mxu0 %v4593
  %v5445 = vpop.f32.mrf.mxu0
  %v5446 = vadd.f32 %v5301, %v5445
  %v5447 = vpop.f32.mrf.mxu0
  %5448 = vmatprep.mubr.f32.mxu0 %v4606
  %5449 = vmatmul.mubr.f32.gmra.mxu0 %v4605
  %v5450 = vpop.f32.mrf.mxu0
  %v5451 = vadd.f32 %v5306, %v5450
  %v5452 = vpop.f32.mrf.mxu0
  %5453 = vmatprep.mubr.f32.mxu0 %v4618
  %5454 = vmatmul.mubr.f32.gmra.mxu0 %v4617
  %v5455 = vpop.f32.mrf.mxu0
  %v5456 = vadd.f32 %v5311, %v5455
  %v5457 = vpop.f32.mrf.mxu0
  %5458 = vmatprep.mubr.f32.mxu0 %v4630
  %5459 = vmatmul.mubr.f32.gmra.mxu0 %v4629
  %v5460 = vpop.f32.mrf.mxu0
  %v5461 = vadd.f32 %v5316, %v5460
  %v5462 = vpop.f32.mrf.mxu0
  %5463 = vmatprep.mubr.f32.mxu0 %v4642
  %5464 = vmatmul.mubr.f32.gmra.mxu0 %v4641
  %v5465 = vpop.f32.mrf.mxu0
  %v5466 = vadd.f32 %v5321, %v5465
  %v5467 = vpop.f32.mrf.mxu0
  %5468 = vmatprep.mubr.f32.mxu0 %v4654
  %5469 = vmatmul.mubr.f32.gmra.mxu0 %v4653
  %v5470 = vpop.f32.mrf.mxu0
  %v5471 = vadd.f32 %v5326, %v5470
  %v5472 = vpop.f32.mrf.mxu0
  %5473 = vmatprep.mubr.f32.mxu0 %v4666
  %5474 = vmatmul.mubr.f32.gmra.mxu0 %v4665
  %v5475 = vpop.f32.mrf.mxu0
  %v5476 = vadd.f32 %v5331, %v5475
  %v5477 = vpop.f32.mrf.mxu0
  %5478 = vdwg.mxu0
  %5479 = vmatprep.subr.mxu0 0.0
  %5480 = vmatpush1.msra.mxu0 %v4814
  %5481 = vmatprep.subr.mxu0 0.0
  %5482 = vmatpush1.msra.mxu0 %v4813
  %5483 = vmatprep.subr.mxu0 0.0
  %5484 = vmatpush1.msra.mxu0 %v4812
  %5485 = vmatprep.subr.mxu0 0.0
  %5486 = vmatpush1.msra.mxu0 %v4811
  %5487 = vmatprep.subr.mxu0 0.0
  %5488 = vmatpush1.msra.mxu0 %v4810
  %5489 = vmatprep.subr.mxu0 0.0
  %5490 = vmatpush1.msra.mxu0 %v4809
  %5491 = vmatprep.subr.mxu0 0.0
  %5492 = vmatpush1.msra.mxu0 %v4808
  %5493 = vmatprep.subr.mxu0 0.0
  %5494 = vmatpush1.msra.mxu0 %v4807
  %5495 = vmatprep.subr.mxu0 0.0
  %5496 = vmatpush1.msra.mxu0 %v4806
  %5497 = vmatprep.subr.mxu0 0.0
  %5498 = vmatpush1.msra.mxu0 %v4805
  %5499 = vmatprep.subr.mxu0 0.0
  %5500 = vmatpush1.msra.mxu0 %v4804
  %5501 = vmatprep.subr.mxu0 0.0
  %5502 = vmatpush1.msra.mxu0 %v4803
  %5503 = vmatprep.subr.mxu0 0.0
  %5504 = vmatpush1.msra.mxu0 %v4802
  %5505 = vmatprep.subr.mxu0 0.0
  %5506 = vmatpush1.msra.mxu0 %v4801
  %5507 = vmatprep.subr.mxu0 0.0
  %5508 = vmatpush1.msra.mxu0 %v4800
  %5509 = vmatprep.subr.mxu0 0.0
  %5510 = vmatpush1.msra.mxu0 %v4799
  %5511 = vmatprep.subr.mxu0 0.0
  %5512 = vmatpush2.msra.mxu0 %v4830
  %5513 = vmatprep.subr.mxu0 0.0
  %5514 = vmatpush2.msra.mxu0 %v4829
  %5515 = vmatprep.subr.mxu0 0.0
  %5516 = vmatpush2.msra.mxu0 %v4828
  %5517 = vmatprep.subr.mxu0 0.0
  %5518 = vmatpush2.msra.mxu0 %v4827
  %5519 = vmatprep.subr.mxu0 0.0
  %5520 = vmatpush2.msra.mxu0 %v4826
  %5521 = vmatprep.subr.mxu0 0.0
  %5522 = vmatpush2.msra.mxu0 %v4825
  %5523 = vmatprep.subr.mxu0 0.0
  %5524 = vmatpush2.msra.mxu0 %v4824
  %5525 = vmatprep.subr.mxu0 0.0
  %5526 = vmatpush2.msra.mxu0 %v4823
  %5527 = vmatprep.subr.mxu0 0.0
  %5528 = vmatpush2.msra.mxu0 %v4822
  %5529 = vmatprep.subr.mxu0 0.0
  %5530 = vmatpush2.msra.mxu0 %v4821
  %5531 = vmatprep.subr.mxu0 0.0
  %5532 = vmatpush2.msra.mxu0 %v4820
  %5533 = vmatprep.subr.mxu0 0.0
  %5534 = vmatpush2.msra.mxu0 %v4819
  %5535 = vmatprep.subr.mxu0 0.0
  %5536 = vmatpush2.msra.mxu0 %v4818
  %5537 = vmatprep.subr.mxu0 0.0
  %5538 = vmatpush2.msra.mxu0 %v4817
  %5539 = vmatprep.subr.mxu0 0.0
  %5540 = vmatpush2.msra.mxu0 %v4816
  %5541 = vmatprep.subr.mxu0 0.0
  %5542 = vmatpush2.msra.mxu0 %v4815
  %5543 = vmatprep.mubr.f32.mxu0 %v4488
  %5544 = vmatmul.mubr.f32.gmra.mxu0 %v4487
  %v5545 = vpop.f32.mrf.mxu0
  %v5546 = vadd.f32 %v5401, %v5545
  %v5547 = vpop.f32.mrf.mxu0
  %5548 = vmatprep.mubr.f32.mxu0 %v4500
  %5549 = vmatmul.mubr.f32.gmra.mxu0 %v4499
  %v5550 = vpop.f32.mrf.mxu0
  %v5551 = vadd.f32 %v5406, %v5550
  %v5552 = vpop.f32.mrf.mxu0
  %5553 = vmatprep.mubr.f32.mxu0 %v4512
  %5554 = vmatmul.mubr.f32.gmra.mxu0 %v4511
  %v5555 = vpop.f32.mrf.mxu0
  %v5556 = vadd.f32 %v5411, %v5555
  %v5557 = vpop.f32.mrf.mxu0
  %5558 = vmatprep.mubr.f32.mxu0 %v4524
  %5559 = vmatmul.mubr.f32.gmra.mxu0 %v4523
  %v5560 = vpop.f32.mrf.mxu0
  %v5561 = vadd.f32 %v5416, %v5560
  %v5562 = vpop.f32.mrf.mxu0
  %5563 = vmatprep.mubr.f32.mxu0 %v4536
  %5564 = vmatmul.mubr.f32.gmra.mxu0 %v4535
  %v5565 = vpop.f32.mrf.mxu0
  %v5566 = vadd.f32 %v5421, %v5565
  %v5567 = vpop.f32.mrf.mxu0
  %5568 = vmatprep.mubr.f32.mxu0 %v4548
  %5569 = vmatmul.mubr.f32.gmra.mxu0 %v4547
  %v5570 = vpop.f32.mrf.mxu0
  %v5571 = vadd.f32 %v5426, %v5570
  %v5572 = vpop.f32.mrf.mxu0
  %5573 = vmatprep.mubr.f32.mxu0 %v4560
  %5574 = vmatmul.mubr.f32.gmra.mxu0 %v4559
  %v5575 = vpop.f32.mrf.mxu0
  %v5576 = vadd.f32 %v5431, %v5575
  %v5577 = vpop.f32.mrf.mxu0
  %5578 = vmatprep.mubr.f32.mxu0 %v4572
  %5579 = vmatmul.mubr.f32.gmra.mxu0 %v4571
  %v5580 = vpop.f32.mrf.mxu0
  %v5581 = vadd.f32 %v5436, %v5580
  %v5582 = vpop.f32.mrf.mxu0
  %5583 = vmatprep.mubr.f32.mxu0 %v4584
  %5584 = vmatmul.mubr.f32.gmra.mxu0 %v4583
  %v5585 = vpop.f32.mrf.mxu0
  %v5586 = vadd.f32 %v5441, %v5585
  %v5587 = vpop.f32.mrf.mxu0
  %5588 = vmatprep.mubr.f32.mxu0 %v4596
  %5589 = vmatmul.mubr.f32.gmra.mxu0 %v4595
  %v5590 = vpop.f32.mrf.mxu0
  %v5591 = vadd.f32 %v5446, %v5590
  %v5592 = vpop.f32.mrf.mxu0
  %5593 = vmatprep.mubr.f32.mxu0 %v4608
  %5594 = vmatmul.mubr.f32.gmra.mxu0 %v4607
  %v5595 = vpop.f32.mrf.mxu0
  %v5596 = vadd.f32 %v5451, %v5595
  %v5597 = vpop.f32.mrf.mxu0
  %5598 = vmatprep.mubr.f32.mxu0 %v4620
  %5599 = vmatmul.mubr.f32.gmra.mxu0 %v4619
  %v5600 = vpop.f32.mrf.mxu0
  %v5601 = vadd.f32 %v5456, %v5600
  %v5602 = vpop.f32.mrf.mxu0
  %5603 = vmatprep.mubr.f32.mxu0 %v4632
  %5604 = vmatmul.mubr.f32.gmra.mxu0 %v4631
  %v5605 = vpop.f32.mrf.mxu0
  %v5606 = vadd.f32 %v5461, %v5605
  %v5607 = vpop.f32.mrf.mxu0
  %5608 = vmatprep.mubr.f32.mxu0 %v4644
  %5609 = vmatmul.mubr.f32.gmra.mxu0 %v4643
  %v5610 = vpop.f32.mrf.mxu0
  %v5611 = vadd.f32 %v5466, %v5610
  %v5612 = vpop.f32.mrf.mxu0
  %5613 = vmatprep.mubr.f32.mxu0 %v4656
  %5614 = vmatmul.mubr.f32.gmra.mxu0 %v4655
  %v5615 = vpop.f32.mrf.mxu0
  %v5616 = vadd.f32 %v5471, %v5615
  %v5617 = vpop.f32.mrf.mxu0
  %5618 = vmatprep.mubr.f32.mxu0 %v4668
  %5619 = vmatmul.mubr.f32.gmra.mxu0 %v4667
  %v5620 = vpop.f32.mrf.mxu0
  %v5621 = vadd.f32 %v5476, %v5620
  %v5622 = vpop.f32.mrf.mxu0
  %5623 = vdwg.mxu0
  %5624 = vmatprep.subr.mxu0 0.0
  %5625 = vmatpush1.msra.mxu0 %v4846
  %5626 = vmatprep.subr.mxu0 0.0
  %5627 = vmatpush1.msra.mxu0 %v4845
  %5628 = vmatprep.subr.mxu0 0.0
  %5629 = vmatpush1.msra.mxu0 %v4844
  %5630 = vmatprep.subr.mxu0 0.0
  %5631 = vmatpush1.msra.mxu0 %v4843
  %5632 = vmatprep.subr.mxu0 0.0
  %5633 = vmatpush1.msra.mxu0 %v4842
  %5634 = vmatprep.subr.mxu0 0.0
  %5635 = vmatpush1.msra.mxu0 %v4841
  %5636 = vmatprep.subr.mxu0 0.0
  %5637 = vmatpush1.msra.mxu0 %v4840
  %5638 = vmatprep.subr.mxu0 0.0
  %5639 = vmatpush1.msra.mxu0 %v4839
  %5640 = vmatprep.subr.mxu0 0.0
  %5641 = vmatpush1.msra.mxu0 %v4838
  %5642 = vmatprep.subr.mxu0 0.0
  %5643 = vmatpush1.msra.mxu0 %v4837
  %5644 = vmatprep.subr.mxu0 0.0
  %5645 = vmatpush1.msra.mxu0 %v4836
  %5646 = vmatprep.subr.mxu0 0.0
  %5647 = vmatpush1.msra.mxu0 %v4835
  %5648 = vmatprep.subr.mxu0 0.0
  %5649 = vmatpush1.msra.mxu0 %v4834
  %5650 = vmatprep.subr.mxu0 0.0
  %5651 = vmatpush1.msra.mxu0 %v4833
  %5652 = vmatprep.subr.mxu0 0.0
  %5653 = vmatpush1.msra.mxu0 %v4832
  %5654 = vmatprep.subr.mxu0 0.0
  %5655 = vmatpush1.msra.mxu0 %v4831
  %5656 = vmatprep.subr.mxu0 0.0
  %5657 = vmatpush2.msra.mxu0 0.0
  %5658 = vmatprep.subr.mxu0 0.0
  %5659 = vmatpush2.msra.mxu0 0.0
  %5660 = vmatprep.subr.mxu0 0.0
  %5661 = vmatpush2.msra.mxu0 0.0
  %5662 = vmatprep.subr.mxu0 0.0
  %5663 = vmatpush2.msra.mxu0 0.0
  %5664 = vmatprep.subr.mxu0 0.0
  %5665 = vmatpush2.msra.mxu0 0.0
  %5666 = vmatprep.subr.mxu0 0.0
  %5667 = vmatpush2.msra.mxu0 0.0
  %5668 = vmatprep.subr.mxu0 0.0
  %5669 = vmatpush2.msra.mxu0 0.0
  %5670 = vmatprep.subr.mxu0 0.0
  %5671 = vmatpush2.msra.mxu0 0.0
  %5672 = vmatprep.subr.mxu0 0.0
  %5673 = vmatpush2.msra.mxu0 0.0
  %5674 = vmatprep.subr.mxu0 0.0
  %5675 = vmatpush2.msra.mxu0 0.0
  %5676 = vmatprep.subr.mxu0 0.0
  %5677 = vmatpush2.msra.mxu0 0.0
  %5678 = vmatprep.subr.mxu0 0.0
  %5679 = vmatpush2.msra.mxu0 0.0
  %5680 = vmatprep.subr.mxu0 0.0
  %5681 = vmatpush2.msra.mxu0 %v4850
  %5682 = vmatprep.subr.mxu0 0.0
  %5683 = vmatpush2.msra.mxu0 %v4849
  %5684 = vmatprep.subr.mxu0 0.0
  %5685 = vmatpush2.msra.mxu0 %v4848
  %5686 = vmatprep.subr.mxu0 0.0
  %5687 = vmatpush2.msra.mxu0 %v4847
  %5688 = vmatprep.mubr.f32.mxu0 %v4852
  %5689 = vmatmul.mubr.f32.gmra.mxu0 %v4489
  %v5690 = vpop.f32.mrf.mxu0
  %v5691 = vadd.f32 %v5546, %v5690
  %v5692 = vpop.f32.mrf.mxu0
  %5693 = vmatprep.mubr.f32.mxu0 %v4855
  %5694 = vmatmul.mubr.f32.gmra.mxu0 %v4501
  %v5695 = vpop.f32.mrf.mxu0
  %v5696 = vadd.f32 %v5551, %v5695
  %v5697 = vpop.f32.mrf.mxu0
  %5698 = vmatprep.mubr.f32.mxu0 %v4858
  %5699 = vmatmul.mubr.f32.gmra.mxu0 %v4513
  %v5700 = vpop.f32.mrf.mxu0
  %v5701 = vadd.f32 %v5556, %v5700
  %v5702 = vpop.f32.mrf.mxu0
  %5703 = vmatprep.mubr.f32.mxu0 %v4861
  %5704 = vmatmul.mubr.f32.gmra.mxu0 %v4525
  %v5705 = vpop.f32.mrf.mxu0
  %v5706 = vadd.f32 %v5561, %v5705
  %v5707 = vpop.f32.mrf.mxu0
  %5708 = vmatprep.mubr.f32.mxu0 %v4864
  %5709 = vmatmul.mubr.f32.gmra.mxu0 %v4537
  %v5710 = vpop.f32.mrf.mxu0
  %v5711 = vadd.f32 %v5566, %v5710
  %v5712 = vpop.f32.mrf.mxu0
  %5713 = vmatprep.mubr.f32.mxu0 %v4867
  %5714 = vmatmul.mubr.f32.gmra.mxu0 %v4549
  %v5715 = vpop.f32.mrf.mxu0
  %v5716 = vadd.f32 %v5571, %v5715
  %v5717 = vpop.f32.mrf.mxu0
  %5718 = vmatprep.mubr.f32.mxu0 %v4870
  %5719 = vmatmul.mubr.f32.gmra.mxu0 %v4561
  %v5720 = vpop.f32.mrf.mxu0
  %v5721 = vadd.f32 %v5576, %v5720
  %v5722 = vpop.f32.mrf.mxu0
  %5723 = vmatprep.mubr.f32.mxu0 %v4873
  %5724 = vmatmul.mubr.f32.gmra.mxu0 %v4573
  %v5725 = vpop.f32.mrf.mxu0
  %v5726 = vadd.f32 %v5581, %v5725
  %v5727 = vpop.f32.mrf.mxu0
  %5728 = vmatprep.mubr.f32.mxu0 %v4876
  %5729 = vmatmul.mubr.f32.gmra.mxu0 %v4585
  %v5730 = vpop.f32.mrf.mxu0
  %v5731 = vadd.f32 %v5586, %v5730
  %v5732 = vpop.f32.mrf.mxu0
  %5733 = vmatprep.mubr.f32.mxu0 %v4879
  %5734 = vmatmul.mubr.f32.gmra.mxu0 %v4597
  %v5735 = vpop.f32.mrf.mxu0
  %v5736 = vadd.f32 %v5591, %v5735
  %v5737 = vpop.f32.mrf.mxu0
  %5738 = vmatprep.mubr.f32.mxu0 %v4882
  %5739 = vmatmul.mubr.f32.gmra.mxu0 %v4609
  %v5740 = vpop.f32.mrf.mxu0
  %v5741 = vadd.f32 %v5596, %v5740
  %v5742 = vpop.f32.mrf.mxu0
  %5743 = vmatprep.mubr.f32.mxu0 %v4885
  %5744 = vmatmul.mubr.f32.gmra.mxu0 %v4621
  %v5745 = vpop.f32.mrf.mxu0
  %v5746 = vadd.f32 %v5601, %v5745
  %v5747 = vpop.f32.mrf.mxu0
  %5748 = vmatprep.mubr.f32.mxu0 %v4888
  %5749 = vmatmul.mubr.f32.gmra.mxu0 %v4633
  %v5750 = vpop.f32.mrf.mxu0
  %v5751 = vadd.f32 %v5606, %v5750
  %v5752 = vpop.f32.mrf.mxu0
  %5753 = vmatprep.mubr.f32.mxu0 %v4891
  %5754 = vmatmul.mubr.f32.gmra.mxu0 %v4645
  %v5755 = vpop.f32.mrf.mxu0
  %v5756 = vadd.f32 %v5611, %v5755
  %v5757 = vpop.f32.mrf.mxu0
  %5758 = vmatprep.mubr.f32.mxu0 %v4894
  %5759 = vmatmul.mubr.f32.gmra.mxu0 %v4657
  %v5760 = vpop.f32.mrf.mxu0
  %v5761 = vadd.f32 %v5616, %v5760
  %v5762 = vpop.f32.mrf.mxu0
  %5763 = vmatprep.mubr.f32.mxu0 %v4897
  %5764 = vmatmul.mubr.f32.gmra.mxu0 %v4669
  %v5765 = vpop.f32.mrf.mxu0
  %v5766 = vadd.f32 %v5621, %v5765
  %v5767 = vpop.f32.mrf.mxu0
  %5768 = vdwg.mxu0
  %v5769 = vadd.f32 %v1455, %v5691
  %v5770 = vadd.f32 %v1461, %v5696
  %v5771 = vadd.f32 %v1467, %v5701
  %v5772 = vadd.f32 %v1473, %v5706
  %v5773 = vadd.f32 %v1479, %v5711
  %v5774 = vadd.f32 %v1485, %v5716
  %v5775 = vadd.f32 %v1491, %v5721
  %v5776 = vadd.f32 %v1497, %v5726
  %v5777 = vadd.f32 %v1503, %v5731
  %v5778 = vadd.f32 %v1509, %v5736
  %v5779 = vadd.f32 %v1515, %v5741
  %v5780 = vadd.f32 %v1521, %v5746
  %v5781 = vadd.f32 %v1527, %v5751
  %v5782 = vadd.f32 %v1533, %v5756
  %v5783 = vadd.f32 %v1539, %v5761
  %v5784 = vadd.f32 %v1545, %v5766
  %v5785 = vld [vmem:[%s4] sm:$0x1]
  %v5787 = vlaneseq
  %v5788 = vshrl.u32 %v5787, 7
  %v5789 = vsub.s32 0, %v5788
  %v5790 = vrot.slane %v5785, %v5789
  %v5792 = vadd.f32 %v5769, %v5790
  %v5793 = vadd.f32 %v5770, %v5790
  %v5794 = vadd.f32 %v5771, %v5790
  %v5795 = vadd.f32 %v5772, %v5790
  %v5796 = vadd.f32 %v5773, %v5790
  %v5797 = vadd.f32 %v5774, %v5790
  %v5798 = vadd.f32 %v5775, %v5790
  %v5799 = vadd.f32 %v5776, %v5790
  %v5800 = vadd.f32 %v5777, %v5790
  %v5801 = vadd.f32 %v5778, %v5790
  %v5802 = vadd.f32 %v5779, %v5790
  %v5803 = vadd.f32 %v5780, %v5790
  %v5804 = vadd.f32 %v5781, %v5790
  %v5805 = vadd.f32 %v5782, %v5790
  %v5806 = vadd.f32 %v5783, %v5790
  %v5807 = vadd.f32 %v5784, %v5790
  %v5808 = vmax.f32 %v5792, 0.0
  %v5809 = vmax.f32 %v5793, 0.0
  %v5810 = vmax.f32 %v5794, 0.0
  %v5811 = vmax.f32 %v5795, 0.0
  %v5812 = vmax.f32 %v5796, 0.0
  %v5813 = vmax.f32 %v5797, 0.0
  %v5814 = vmax.f32 %v5798, 0.0
  %v5815 = vmax.f32 %v5799, 0.0
  %v5816 = vmax.f32 %v5800, 0.0
  %v5817 = vmax.f32 %v5801, 0.0
  %v5818 = vmax.f32 %v5802, 0.0
  %v5819 = vmax.f32 %v5803, 0.0
  %v5820 = vmax.f32 %v5804, 0.0
  %v5821 = vmax.f32 %v5805, 0.0
  %v5822 = vmax.f32 %v5806, 0.0
  %v5823 = vmax.f32 %v5807, 0.0
  %5824 = vst [vmem:[%s6] sm:$0xff] %v5808
  %5825 = vst [vmem:[%s6 + $0x8] sm:$0xff] %v5809
  %5826 = vst [vmem:[%s6 + $0x10] sm:$0xff] %v5810
  %5827 = vst [vmem:[%s6 + $0x18] sm:$0xff] %v5811
  %5828 = vst [vmem:[%s6 + $0x20] sm:$0xff] %v5812
  %5829 = vst [vmem:[%s6 + $0x28] sm:$0xff] %v5813
  %5830 = vst [vmem:[%s6 + $0x30] sm:$0xff] %v5814
  %5831 = vst [vmem:[%s6 + $0x38] sm:$0xff] %v5815
  %5832 = vst [vmem:[%s6 + $0x40] sm:$0xff] %v5816
  %5833 = vst [vmem:[%s6 + $0x48] sm:$0xff] %v5817
  %5834 = vst [vmem:[%s6 + $0x50] sm:$0xff] %v5818
  %5835 = vst [vmem:[%s6 + $0x58] sm:$0xff] %v5819
  %5836 = vst [vmem:[%s6 + $0x60] sm:$0xff] %v5820
  %5837 = vst [vmem:[%s6 + $0x68] sm:$0xff] %v5821
  %5838 = vst [vmem:[%s6 + $0x70] sm:$0xff] %v5822
  %5839 = vst [vmem:[%s6 + $0x78] sm:$0xff] %v5823
  // Predicated region
  $region22: #{dense_convolve_paired_pallas.1} parent=0 // pred_check
    _
  $region23: #{dense_convolve_paired_pallas.1} parent=0 // pred_check_branch
    %5841 = sbr.rel (0) target = $region25
  $region24: #{dense_convolve_paired_pallas.1} parent=0 // pred_region
    _
  $region25: #{dense_convolve_paired_pallas.1} parent=0 // pred_fallthru
    _
  // Predicated region
  $region26: #{dense_convolve_paired_pallas.1} parent=0 // pred_check
    _
  $region27: #{dense_convolve_paired_pallas.1} parent=0 // pred_check_branch
    %5843 = sbr.rel (0) target = $region29
  $region28: #{dense_convolve_paired_pallas.1} parent=0 // pred_region
    _
  $region29: #{dense_convolve_paired_pallas.1} parent=0 // pred_fallthru
    _
  // Predicated region
  $region30: #{dense_convolve_paired_pallas.1} parent=0 // pred_check
    _
  $region31: #{dense_convolve_paired_pallas.1} parent=0 // pred_check_branch
    %5845 = sbr.rel (0) target = $region33
  $region32: #{dense_convolve_paired_pallas.1} parent=0 // pred_region
    _
  $region33: #{dense_convolve_paired_pallas.1} parent=0 // pred_fallthru
    _
  // Predicated region
  $region34: #{dense_convolve_paired_pallas.1} parent=0 // pred_check
    _
  $region35: #{dense_convolve_paired_pallas.1} parent=0 // pred_check_branch
    %5847 = sbr.rel (0) target = $region37
  $region36: #{dense_convolve_paired_pallas.1} parent=0 // pred_region
    _
  $region37: #{dense_convolve_paired_pallas.1} parent=0 // pred_fallthru
    _

</llo_original>
